<compile_context>
chip_gen: v7x
topology: tpu7x:2x2x1
jax: 0.10.0
libtpu: 0.0.40
codegen_flags: <defaults>
</compile_context>

<pallas_src>
import jax
import jax.numpy as jnp
import numpy as np
from jax import lax
from jax.experimental import pallas as pl
from jax.experimental.pallas import tpu as pltpu

NEG_SLOPE = 0.01                 # nn.LeakyReLU() default
VMEM_LIMIT = 32 * 1024 * 1024    # explicit scoped-VMEM limit; safe on v5e/v6e/v7x


def _leaky_relu(y):
    return jnp.where(y >= 0, y, NEG_SLOPE * y)


def _pick_tile(n, target):
    """Largest multiple of 128 that divides n and is <= target; else n (full)."""
    best = None
    t = 128
    while t <= min(target, n):
        if n % t == 0:
            best = t
        t += 128
    # TODO(synk): N with no multiple-of-128 divisor falls back to a full-N block
    # (no ragged-tile masking implemented).
    return best if best is not None else n


# ------------------------- kernels -------------------------

def conv1x1_lrelu_kernel(x_ref, w_ref, b_ref, o_ref):
    # x_ref: (1, C, tn) f32, w_ref: (C, C) bf16, b_ref: (C, 1) f32, o_ref: (1, C, tn) f32
    xb = x_ref[0].astype(jnp.bfloat16)
    y = jnp.dot(w_ref[...], xb, preferred_element_type=jnp.float32) + b_ref[...]
    o_ref[0] = _leaky_relu(y)


def residual_conv1x1_lrelu_kernel(x_ref, a_ref, w_ref, b_ref, o_ref):
    # (feature + spectral_reshape) tile, then 1x1 conv + LeakyReLU
    s = x_ref[0] + a_ref[0]                                   # f32 (C, tn)
    y = jnp.dot(w_ref[...], s.astype(jnp.bfloat16),
                preferred_element_type=jnp.float32) + b_ref[...]
    o_ref[0] = _leaky_relu(y)


def attn_stats_kernel(rows_ref, cols_ref, norm_ref, m_sc, l_sc):
    # Pass 1: per-column softmax normalizer (torch Softmax(dim=1): over rows).
    # rows_ref: (1, tA, Cp) bf16   -- row block ir of Xs
    # cols_ref: (1, tA, Cp) bf16   -- column block jc of Xs (constant over ir)
    # norm_ref: (1, 1, tA) f32     -- colmax + log(colsum), written at last ir
    # m_sc/l_sc: (1, tA) f32 VMEM scratch (running column max / sum)
    ir = pl.program_id(2)

    @pl.when(ir == 0)
    def _():
        m_sc[...] = jnp.full_like(m_sc, -jnp.inf)
        l_sc[...] = jnp.zeros_like(l_sc)

    # S tile = rows @ cols^T (contract the channel axis), f32 accumulation.
    s = lax.dot_general(rows_ref[0], cols_ref[0], (((1,), (1,)), ((), ())),
                        preferred_element_type=jnp.float32)   # (tA, tA)
    m_old = m_sc[...]                                         # (1, tA)
    m_new = jnp.maximum(m_old, jnp.max(s, axis=0, keepdims=True))
    l_sc[...] = l_sc[...] * jnp.exp(m_old - m_new) + \
        jnp.sum(jnp.exp(s - m_new), axis=0, keepdims=True)
    m_sc[...] = m_new

    @pl.when(ir == pl.num_programs(2) - 1)
    def _():
        norm_ref[0] = m_sc[...] + jnp.log(l_sc[...])          # log-sum-exp per column


def attn_out_kernel(q_ref, kv_ref, norm_ref, o_ref, acc_ref):
    # Pass 2: out[i,:] = sum_j exp(S[i,j] - norm[j]) * Xs[j,:]
    # q_ref:   (1, tA, Cp) bf16  -- output-row block i of Xs (constant over jk)
    # kv_ref:  (1, tA, Cp) bf16  -- column/value block jk of Xs
    # norm_ref:(1, 1, tA) f32    -- column log-sum-exp for block jk
    # o_ref:   (1, tA, Cp) f32;  acc_ref: (tA, Cp) f32 VMEM scratch
    jk = pl.program_id(2)

    @pl.when(jk == 0)
    def _():
        acc_ref[...] = jnp.zeros_like(acc_ref)

    s = lax.dot_general(q_ref[0], kv_ref[0], (((1,), (1,)), ((), ())),
                        preferred_element_type=jnp.float32)   # (tA, tA)
    p = jnp.exp(s - norm_ref[0])                              # divide folded into exp
    acc_ref[...] += jnp.dot(p.astype(jnp.bfloat16), kv_ref[0],
                            preferred_element_type=jnp.float32)

    @pl.when(jk == pl.num_programs(2) - 1)
    def _():
        o_ref[0] = acc_ref[...]


# ------------------------- wrapper -------------------------

def self_attention_spa(feature, w1, b1, w2, b2):
    """feature: (B, C, H, W) float32; w*: (C, C); b*: (C,)."""
    B, C, H, W = feature.shape
    N = H * W
    x = feature.reshape(B, C, N)

    # pre-cast weights to bf16 once (MXU fast path); biases stay f32.
    w1b = w1.astype(jnp.bfloat16)
    w2b = w2.astype(jnp.bfloat16)
    b1c = b1.reshape(C, 1).astype(jnp.float32)
    b2c = b2.reshape(C, 1).astype(jnp.float32)

    tn = _pick_tile(N, 1024)                  # conv N-tile
    tA = _pick_tile(N, 512)                   # attention row/column tile
    Cp = ((C + 127) // 128) * 128             # lane-dense channel padding

    xmap = lambda b, j: (b, 0, j)
    wmap = lambda b, j: (0, 0)
    conv_params = pltpu.CompilerParams(
        dimension_semantics=("parallel", "parallel"),
        vmem_limit_bytes=VMEM_LIMIT)
    attn_params = pltpu.CompilerParams(
        dimension_semantics=("parallel", "parallel", "arbitrary"),
        vmem_limit_bytes=VMEM_LIMIT)

    # --- conv1 (1x1) + LeakyReLU, tiled over N ---
    feature_spac = pl.pallas_call(
        conv1x1_lrelu_kernel,
        out_shape=jax.ShapeDtypeStruct((B, C, N), jnp.float32),
        grid=(B, N // tn),
        in_specs=[pl.BlockSpec((1, C, tn), xmap),
                  pl.BlockSpec((C, C), wmap),
                  pl.BlockSpec((C, 1), wmap)],
        out_specs=pl.BlockSpec((1, C, tn), xmap),
        compiler_params=conv_params,
    )(x, w1b, b1c)                                               # (B, C, N)

    # torch.reshape((-1, h*w, c)): raw row-major reinterpretation of NCHW data.
    xs = feature_spac.reshape(B, N, C)
    if Cp != C:
        xs = jnp.pad(xs, ((0, 0), (0, 0), (0, Cp - C)))          # zero-pad channels
    xs_bf = xs.astype(jnp.bfloat16)                              # (B, N, Cp) bf16

    nT = N // tA
    qmap = lambda b, i, j: (b, i, 0)
    kmap = lambda b, i, j: (b, j, 0)
    smap = lambda b, i, j: (b, 0, j)

    # --- attention pass 1: per-column log-sum-exp (softmax over dim=1 / rows) ---
    norm = pl.pallas_call(
        attn_stats_kernel,
        out_shape=jax.ShapeDtypeStruct((B, 1, N), jnp.float32),
        grid=(B, nT, nT),                      # (batch, column tile, row tile)
        in_specs=[pl.BlockSpec((1, tA, Cp), lambda b, jc, ir: (b, ir, 0)),
                  pl.BlockSpec((1, tA, Cp), lambda b, jc, ir: (b, jc, 0))],
        out_specs=pl.BlockSpec((1, 1, tA), lambda b, jc, ir: (b, 0, jc)),
        scratch_shapes=[pltpu.VMEM((1, tA), jnp.float32),
                        pltpu.VMEM((1, tA), jnp.float32)],
        compiler_params=attn_params,
    )(xs_bf, xs_bf)

    # --- attention pass 2: normalized P @ Xs, tiled over the contraction axis ---
    attn = pl.pallas_call(
        attn_out_kernel,
        out_shape=jax.ShapeDtypeStruct((B, N, Cp), jnp.float32),
        grid=(B, nT, nT),                      # (batch, output-row tile, column tile)
        in_specs=[pl.BlockSpec((1, tA, Cp), qmap),
                  pl.BlockSpec((1, tA, Cp), kmap),
                  pl.BlockSpec((1, 1, tA), smap)],
        out_specs=pl.BlockSpec((1, tA, Cp), qmap),
        scratch_shapes=[pltpu.VMEM((tA, Cp), jnp.float32)],
        compiler_params=attn_params,
    )(xs_bf, xs_bf, norm)                                        # (B, N, Cp)

    # drop the channel padding; torch.reshape((-1, c, h, w)): raw reshape back.
    spectral = attn[:, :, :C].reshape(B, C, N)

    # --- residual add + conv2 (1x1) + LeakyReLU, tiled over N ---
    out = pl.pallas_call(
        residual_conv1x1_lrelu_kernel,
        out_shape=jax.ShapeDtypeStruct((B, C, N), jnp.float32),
        grid=(B, N // tn),
        in_specs=[pl.BlockSpec((1, C, tn), xmap),
                  pl.BlockSpec((1, C, tn), xmap),
                  pl.BlockSpec((C, C), wmap),
                  pl.BlockSpec((C, 1), wmap)],
        out_specs=pl.BlockSpec((1, C, tn), xmap),
        compiler_params=conv_params,
    )(x, spectral, w2b, b2c)

    return out.reshape(B, C, H, W)


# ------------------------- pure-JAX reference -------------------------

def reference(feature, w1, b1, w2, b2):
    B, C, H, W = feature.shape
    N = H * W
    prec = lax.Precision.HIGHEST

    def conv_lrelu(f, w, b):
        y = jnp.einsum('oc,bcn->bon', w, f, precision=prec) + b[None, :, None]
        return jnp.where(y >= 0, y, NEG_SLOPE * y)

    x = feature.reshape(B, C, N)
    spac = conv_lrelu(x, w1, b1)                        # (B, C, N)
    spas = spac.reshape(B, N, C)                        # raw reshape (as torch)
    s = jnp.einsum('bnc,bmc->bnm', spas, spas, precision=prec)
    p = jax.nn.softmax(s, axis=1)                       # torch Softmax(dim=1)
    m2 = jnp.einsum('bnm,bmc->bnc', p, spas, precision=prec)
    spectral = m2.reshape(B, C, N)                      # raw reshape back
    return conv_lrelu(x + spectral, w2, b2).reshape(B, C, H, W)


if __name__ == "__main__":
    B, C, H, W = 2, 4, 16, 16   # small shapes; module defaults use C=120
    key = jax.random.PRNGKey(0)
    k1, k2, k3, k4, k5 = jax.random.split(key, 5)

    feature = jax.random.normal(k1, (B, C, H, W), dtype=jnp.float32)
    bound = 1.0 / np.sqrt(C)    # PyTorch Conv2d default init range (fan_in = C*1*1)
    w1 = jax.random.uniform(k2, (C, C), jnp.float32, -bound, bound)
    b1 = jax.random.uniform(k3, (C,), jnp.float32, -bound, bound)
    w2 = jax.random.uniform(k4, (C, C), jnp.float32, -bound, bound)
    b2 = jax.random.uniform(k5, (C,), jnp.float32, -bound, bound)

    out = jax.block_until_ready(jax.jit(self_attention_spa)(feature, w1, b1, w2, b2))
    ref = jax.block_until_ready(reference(feature, w1, b1, w2, b2))

    assert out.shape == (B, C, H, W)
    # bf16-in / f32-accumulate matmuls vs. a HIGHEST-precision f32 reference.
    np.testing.assert_allclose(np.asarray(out), np.asarray(ref), rtol=2e-2, atol=2e-2)

    print("KERNEL_OK")
</pallas_src>

<mosaic_0001>
module attributes {stable_mosaic.version = 11 : i64} {
  func.func @conv1x1_lrelu_kernel(%arg0: i32, %arg1: i32, %arg2: memref<1x4x256xf32, #tpu.memory_space<vmem>>, %arg3: memref<4x4xbf16, #tpu.memory_space<vmem>>, %arg4: memref<4x1xf32, #tpu.memory_space<vmem>>, %arg5: memref<1x4x256xf32, #tpu.memory_space<vmem>>) attributes {dimension_semantics = [#tpu.dimension_semantics<parallel>, #tpu.dimension_semantics<parallel>], iteration_bounds = array<i64: 2, 1>, scalar_prefetch = 0 : i64, scratch_operands = 0 : i64, tpu.core_type = #tpu.core_type<tc>, window_params = [{transform_indices = @transform_0, window_bounds = array<i64: 1, 4, 256>}, {pipeline_mode = #tpu.pipeline_mode<synchronous>, transform_indices = @transform_1, window_bounds = array<i64: 4, 4>}, {pipeline_mode = #tpu.pipeline_mode<synchronous>, transform_indices = @transform_2, window_bounds = array<i64: 4, 1>}, {transform_indices = @transform_3, window_bounds = array<i64: 1, 4, 256>}]} {
    %c0 = arith.constant 0 : index
    %c0_0 = arith.constant 0 : index
    %c0_1 = arith.constant 0 : index
    %0 = vector.load %arg2[%c0, %c0_0, %c0_1] : memref<1x4x256xf32, #tpu.memory_space<vmem>>, vector<1x4x256xf32>
    %1 = vector.shape_cast %0 : vector<1x4x256xf32> to vector<4x256xf32>
    %2 = arith.truncf %1 : vector<4x256xf32> to vector<4x256xbf16>
    %c0_2 = arith.constant 0 : index
    %c0_3 = arith.constant 0 : index
    %3 = vector.load %arg3[%c0_2, %c0_3] : memref<4x4xbf16, #tpu.memory_space<vmem>>, vector<4x4xbf16>
    %cst = arith.constant dense<0.000000e+00> : vector<4x256xf32>
    %4 = tpu.matmul %3, %2, %cst {dimension_numbers = #tpu.dot_dimension_numbers<[1], [0], [0], [1], [0, 0, 1, 1], [], []>} : vector<4x4xbf16>, vector<4x256xbf16>, vector<4x256xf32> -> vector<4x256xf32>
    %c0_4 = arith.constant 0 : index
    %c0_5 = arith.constant 0 : index
    %5 = vector.load %arg4[%c0_4, %c0_5] : memref<4x1xf32, #tpu.memory_space<vmem>>, vector<4x1xf32>
    %6 = vector.broadcast %5 : vector<4x1xf32> to vector<4x256xf32>
    %7 = arith.addf %4, %6 : vector<4x256xf32>
    %cst_6 = arith.constant 0.000000e+00 : f32
    %8 = vector.broadcast %cst_6 : f32 to vector<4x256xf32>
    %9 = arith.cmpf oge, %7, %8 : vector<4x256xf32>
    %cst_7 = arith.constant 0.00999999977 : f32
    %10 = vector.broadcast %cst_7 : f32 to vector<4x256xf32>
    %11 = arith.mulf %10, %7 : vector<4x256xf32>
    %12 = arith.select %9, %7, %11 : vector<4x256xi1>, vector<4x256xf32>
    %c0_8 = arith.constant 0 : index
    %c0_9 = arith.constant 0 : index
    %c0_10 = arith.constant 0 : index
    %13 = vector.load %arg5[%c0_8, %c0_9, %c0_10] : memref<1x4x256xf32, #tpu.memory_space<vmem>>, vector<1x4x256xf32>
    %14 = vector.shape_cast %13 : vector<1x4x256xf32> to vector<4x256xf32>
    %15 = vector.shape_cast %12 : vector<4x256xf32> to vector<1x4x256xf32>
    tpu.vector_store %arg5[%c0_8, %c0_9, %c0_10], %15 {strides = array<i32>} : memref<1x4x256xf32, #tpu.memory_space<vmem>>, vector<1x4x256xf32>,
    return
  }
  func.func @transform_0(%arg0: i32, %arg1: i32) -> (i32, i32, i32) {
    %c0_i32 = arith.constant 0 : i32
    %c0_i32_0 = arith.constant 0 : i32
    return %arg0, %c0_i32, %arg1 : i32, i32, i32
  }
  func.func @transform_1(%arg0: i32, %arg1: i32) -> (i32, i32) {
    %c0_i32 = arith.constant 0 : i32
    %c0_i32_0 = arith.constant 0 : i32
    %c0_i32_1 = arith.constant 0 : i32
    return %c0_i32, %c0_i32_0 : i32, i32
  }
  func.func @transform_2(%arg0: i32, %arg1: i32) -> (i32, i32) {
    %c0_i32 = arith.constant 0 : i32
    %c0_i32_0 = arith.constant 0 : i32
    %c0_i32_1 = arith.constant 0 : i32
    return %c0_i32, %c0_i32_0 : i32, i32
  }
  func.func @transform_3(%arg0: i32, %arg1: i32) -> (i32, i32, i32) {
    %c0_i32 = arith.constant 0 : i32
    %c0_i32_0 = arith.constant 0 : i32
    return %arg0, %c0_i32, %arg1 : i32, i32, i32
  }
}

module attributes {stable_mosaic.version = 11 : i64} {
  func.func @attn_out_kernel(%arg0: i32, %arg1: i32, %arg2: i32, %arg3: memref<1x256x128xbf16, #tpu.memory_space<vmem>>, %arg4: memref<1x256x128xbf16, #tpu.memory_space<vmem>>, %arg5: memref<1x1x256xf32, #tpu.memory_space<vmem>>, %arg6: memref<1x256x128xf32, #tpu.memory_space<vmem>>, %arg7: memref<256x128xf32, #tpu.memory_space<vmem>>) attributes {dimension_semantics = [#tpu.dimension_semantics<parallel>, #tpu.dimension_semantics<parallel>, #tpu.dimension_semantics<arbitrary>], iteration_bounds = array<i64: 2, 1, 1>, scalar_prefetch = 0 : i64, scratch_operands = 1 : i64, tpu.core_type = #tpu.core_type<tc>, window_params = [{transform_indices = @transform_0, window_bounds = array<i64: 1, 256, 128>}, {transform_indices = @transform_1, window_bounds = array<i64: 1, 256, 128>}, {transform_indices = @transform_2, window_bounds = array<i64: 1, 1, 256>}, {transform_indices = @transform_3, window_bounds = array<i64: 1, 256, 128>}]} {
    %c0_i32 = arith.constant 0 : i32
    %0 = arith.cmpi eq, %arg2, %c0_i32 : i32
    %1 = arith.extui %0 : i1 to i32
    %c0_i32_0 = arith.constant 0 : i32
    %2 = arith.cmpi ne, %1, %c0_i32_0 : i32
    scf.if %2 {
      %cst_19 = arith.constant 0.000000e+00 : f32
      %23 = vector.broadcast %cst_19 : f32 to vector<256x128xf32>
      %c0_20 = arith.constant 0 : index
      %c0_21 = arith.constant 0 : index
      %24 = vector.load %arg7[%c0_20, %c0_21] : memref<256x128xf32, #tpu.memory_space<vmem>>, vector<256x128xf32>
      tpu.vector_store %arg7[%c0_20, %c0_21], %23 {strides = array<i32>} : memref<256x128xf32, #tpu.memory_space<vmem>>, vector<256x128xf32>,
    } else {
    }
    %c0 = arith.constant 0 : index
    %c0_1 = arith.constant 0 : index
    %c0_2 = arith.constant 0 : index
    %3 = vector.load %arg3[%c0, %c0_1, %c0_2] : memref<1x256x128xbf16, #tpu.memory_space<vmem>>, vector<1x256x128xbf16>
    %4 = vector.shape_cast %3 : vector<1x256x128xbf16> to vector<256x128xbf16>
    %c0_3 = arith.constant 0 : index
    %c0_4 = arith.constant 0 : index
    %c0_5 = arith.constant 0 : index
    %5 = vector.load %arg4[%c0_3, %c0_4, %c0_5] : memref<1x256x128xbf16, #tpu.memory_space<vmem>>, vector<1x256x128xbf16>
    %6 = vector.shape_cast %5 : vector<1x256x128xbf16> to vector<256x128xbf16>
    %cst = arith.constant dense<0.000000e+00> : vector<256x256xf32>
    %7 = tpu.matmul %4, %6, %cst {dimension_numbers = #tpu.dot_dimension_numbers<[1], [1], [0], [0], [0, 0, 1, 0], [], []>} : vector<256x128xbf16>, vector<256x128xbf16>, vector<256x256xf32> -> vector<256x256xf32>
    %c0_6 = arith.constant 0 : index
    %c0_7 = arith.constant 0 : index
    %c0_8 = arith.constant 0 : index
    %8 = vector.load %arg5[%c0_6, %c0_7, %c0_8] : memref<1x1x256xf32, #tpu.memory_space<vmem>>, vector<1x1x256xf32>
    %9 = vector.shape_cast %8 : vector<1x1x256xf32> to vector<1x256xf32>
    %10 = vector.broadcast %9 : vector<1x256xf32> to vector<256x256xf32>
    %11 = arith.subf %7, %10 : vector<256x256xf32>
    %12 = math.exp %11 : vector<256x256xf32>
    %c0_9 = arith.constant 0 : index
    %c0_10 = arith.constant 0 : index
    %13 = vector.load %arg7[%c0_9, %c0_10] : memref<256x128xf32, #tpu.memory_space<vmem>>, vector<256x128xf32>
    %14 = arith.truncf %12 : vector<256x256xf32> to vector<256x256xbf16>
    %c0_11 = arith.constant 0 : index
    %c0_12 = arith.constant 0 : index
    %c0_13 = arith.constant 0 : index
    %15 = vector.load %arg4[%c0_11, %c0_12, %c0_13] : memref<1x256x128xbf16, #tpu.memory_space<vmem>>, vector<1x256x128xbf16>
    %16 = vector.shape_cast %15 : vector<1x256x128xbf16> to vector<256x128xbf16>
    %cst_14 = arith.constant dense<0.000000e+00> : vector<256x128xf32>
    %17 = tpu.matmul %14, %16, %cst_14 {dimension_numbers = #tpu.dot_dimension_numbers<[1], [0], [0], [1], [0, 0, 1, 1], [], []>} : vector<256x256xbf16>, vector<256x128xbf16>, vector<256x128xf32> -> vector<256x128xf32>
    %18 = arith.addf %13, %17 : vector<256x128xf32>
    %c0_15 = arith.constant 0 : index
    %c0_16 = arith.constant 0 : index
    %19 = vector.load %arg7[%c0_15, %c0_16] : memref<256x128xf32, #tpu.memory_space<vmem>>, vector<256x128xf32>
    tpu.vector_store %arg7[%c0_15, %c0_16], %18 {strides = array<i32>} : memref<256x128xf32, #tpu.memory_space<vmem>>, vector<256x128xf32>,
    %c0_i32_17 = arith.constant 0 : i32
    %20 = arith.cmpi eq, %arg2, %c0_i32_17 : i32
    %21 = arith.extui %20 : i1 to i32
    %c0_i32_18 = arith.constant 0 : i32
    %22 = arith.cmpi ne, %21, %c0_i32_18 : i32
    scf.if %22 {
      %c0_19 = arith.constant 0 : index
      %c0_20 = arith.constant 0 : index
      %23 = vector.load %arg7[%c0_19, %c0_20] : memref<256x128xf32, #tpu.memory_space<vmem>>, vector<256x128xf32>
      %c0_21 = arith.constant 0 : index
      %c0_22 = arith.constant 0 : index
      %c0_23 = arith.constant 0 : index
      %24 = vector.load %arg6[%c0_21, %c0_22, %c0_23] : memref<1x256x128xf32, #tpu.memory_space<vmem>>, vector<1x256x128xf32>
      %25 = vector.shape_cast %24 : vector<1x256x128xf32> to vector<256x128xf32>
      %26 = vector.shape_cast %23 : vector<256x128xf32> to vector<1x256x128xf32>
      tpu.vector_store %arg6[%c0_21, %c0_22, %c0_23], %26 {strides = array<i32>} : memref<1x256x128xf32, #tpu.memory_space<vmem>>, vector<1x256x128xf32>,
    } else {
    }
    return
  }
  func.func @transform_0(%arg0: i32, %arg1: i32, %arg2: i32) -> (i32, i32, i32) {
    %c0_i32 = arith.constant 0 : i32
    %c0_i32_0 = arith.constant 0 : i32
    return %arg0, %arg1, %c0_i32 : i32, i32, i32
  }
  func.func @transform_1(%arg0: i32, %arg1: i32, %arg2: i32) -> (i32, i32, i32) {
    %c0_i32 = arith.constant 0 : i32
    %c0_i32_0 = arith.constant 0 : i32
    return %arg0, %arg2, %c0_i32 : i32, i32, i32
  }
  func.func @transform_2(%arg0: i32, %arg1: i32, %arg2: i32) -> (i32, i32, i32) {
    %c0_i32 = arith.constant 0 : i32
    %c0_i32_0 = arith.constant 0 : i32
    return %arg0, %c0_i32, %arg2 : i32, i32, i32
  }
  func.func @transform_3(%arg0: i32, %arg1: i32, %arg2: i32) -> (i32, i32, i32) {
    %c0_i32 = arith.constant 0 : i32
    %c0_i32_0 = arith.constant 0 : i32
    return %arg0, %arg1, %c0_i32 : i32, i32, i32
  }
}

module attributes {stable_mosaic.version = 11 : i64} {
  func.func @attn_stats_kernel(%arg0: i32, %arg1: i32, %arg2: i32, %arg3: memref<1x256x128xbf16, #tpu.memory_space<vmem>>, %arg4: memref<1x256x128xbf16, #tpu.memory_space<vmem>>, %arg5: memref<1x1x256xf32, #tpu.memory_space<vmem>>, %arg6: memref<1x256xf32, #tpu.memory_space<vmem>>, %arg7: memref<1x256xf32, #tpu.memory_space<vmem>>) attributes {dimension_semantics = [#tpu.dimension_semantics<parallel>, #tpu.dimension_semantics<parallel>, #tpu.dimension_semantics<arbitrary>], iteration_bounds = array<i64: 2, 1, 1>, scalar_prefetch = 0 : i64, scratch_operands = 2 : i64, tpu.core_type = #tpu.core_type<tc>, window_params = [{transform_indices = @transform_0, window_bounds = array<i64: 1, 256, 128>}, {transform_indices = @transform_1, window_bounds = array<i64: 1, 256, 128>}, {transform_indices = @transform_2, window_bounds = array<i64: 1, 1, 256>}]} {
    %c0_i32 = arith.constant 0 : i32
    %0 = arith.cmpi eq, %arg2, %c0_i32 : i32
    %1 = arith.extui %0 : i1 to i32
    %c0_i32_0 = arith.constant 0 : i32
    %2 = arith.cmpi ne, %1, %c0_i32_0 : i32
    scf.if %2 {
      %cst_18 = arith.constant 0xFF800000 : f32
      %27 = vector.broadcast %cst_18 : f32 to vector<1x256xf32>
      %c0_19 = arith.constant 0 : index
      %c0_20 = arith.constant 0 : index
      %28 = vector.load %arg6[%c0_19, %c0_20] : memref<1x256xf32, #tpu.memory_space<vmem>>, vector<1x256xf32>
      tpu.vector_store %arg6[%c0_19, %c0_20], %27 {strides = array<i32>} : memref<1x256xf32, #tpu.memory_space<vmem>>, vector<1x256xf32>,
      %cst_21 = arith.constant 0.000000e+00 : f32
      %29 = vector.broadcast %cst_21 : f32 to vector<1x256xf32>
      %c0_22 = arith.constant 0 : index
      %c0_23 = arith.constant 0 : index
      %30 = vector.load %arg7[%c0_22, %c0_23] : memref<1x256xf32, #tpu.memory_space<vmem>>, vector<1x256xf32>
      tpu.vector_store %arg7[%c0_22, %c0_23], %29 {strides = array<i32>} : memref<1x256xf32, #tpu.memory_space<vmem>>, vector<1x256xf32>,
    } else {
    }
    %c0 = arith.constant 0 : index
    %c0_1 = arith.constant 0 : index
    %c0_2 = arith.constant 0 : index
    %3 = vector.load %arg3[%c0, %c0_1, %c0_2] : memref<1x256x128xbf16, #tpu.memory_space<vmem>>, vector<1x256x128xbf16>
    %4 = vector.shape_cast %3 : vector<1x256x128xbf16> to vector<256x128xbf16>
    %c0_3 = arith.constant 0 : index
    %c0_4 = arith.constant 0 : index
    %c0_5 = arith.constant 0 : index
    %5 = vector.load %arg4[%c0_3, %c0_4, %c0_5] : memref<1x256x128xbf16, #tpu.memory_space<vmem>>, vector<1x256x128xbf16>
    %6 = vector.shape_cast %5 : vector<1x256x128xbf16> to vector<256x128xbf16>
    %cst = arith.constant dense<0.000000e+00> : vector<256x256xf32>
    %7 = tpu.matmul %4, %6, %cst {dimension_numbers = #tpu.dot_dimension_numbers<[1], [1], [0], [0], [0, 0, 1, 0], [], []>} : vector<256x128xbf16>, vector<256x128xbf16>, vector<256x256xf32> -> vector<256x256xf32>
    %c0_6 = arith.constant 0 : index
    %c0_7 = arith.constant 0 : index
    %8 = vector.load %arg6[%c0_6, %c0_7] : memref<1x256xf32, #tpu.memory_space<vmem>>, vector<1x256xf32>
    %cst_8 = arith.constant dense<0xFF800000> : vector<256xf32>
    %9 = vector.multi_reduction <maximumf>, %7, %cst_8 [0] : vector<256x256xf32> to vector<256xf32>
    %10 = vector.shape_cast %9 : vector<256xf32> to vector<1x256xf32>
    %11 = arith.maximumf %8, %10 : vector<1x256xf32>
    %c0_9 = arith.constant 0 : index
    %c0_10 = arith.constant 0 : index
    %12 = vector.load %arg7[%c0_9, %c0_10] : memref<1x256xf32, #tpu.memory_space<vmem>>, vector<1x256xf32>
    %13 = arith.subf %8, %11 : vector<1x256xf32>
    %14 = math.exp %13 : vector<1x256xf32>
    %15 = arith.mulf %12, %14 : vector<1x256xf32>
    %16 = vector.broadcast %11 : vector<1x256xf32> to vector<256x256xf32>
    %17 = arith.subf %7, %16 : vector<256x256xf32>
    %18 = math.exp %17 : vector<256x256xf32>
    %cst_11 = arith.constant dense<0.000000e+00> : vector<256xf32>
    %19 = vector.multi_reduction <add>, %18, %cst_11 [0] : vector<256x256xf32> to vector<256xf32>
    %20 = vector.shape_cast %19 : vector<256xf32> to vector<1x256xf32>
    %21 = arith.addf %15, %20 : vector<1x256xf32>
    %c0_12 = arith.constant 0 : index
    %c0_13 = arith.constant 0 : index
    %22 = vector.load %arg7[%c0_12, %c0_13] : memref<1x256xf32, #tpu.memory_space<vmem>>, vector<1x256xf32>
    tpu.vector_store %arg7[%c0_12, %c0_13], %21 {strides = array<i32>} : memref<1x256xf32, #tpu.memory_space<vmem>>, vector<1x256xf32>,
    %c0_14 = arith.constant 0 : index
    %c0_15 = arith.constant 0 : index
    %23 = vector.load %arg6[%c0_14, %c0_15] : memref<1x256xf32, #tpu.memory_space<vmem>>, vector<1x256xf32>
    tpu.vector_store %arg6[%c0_14, %c0_15], %11 {strides = array<i32>} : memref<1x256xf32, #tpu.memory_space<vmem>>, vector<1x256xf32>,
    %c0_i32_16 = arith.constant 0 : i32
    %24 = arith.cmpi eq, %arg2, %c0_i32_16 : i32
    %25 = arith.extui %24 : i1 to i32
    %c0_i32_17 = arith.constant 0 : i32
    %26 = arith.cmpi ne, %25, %c0_i32_17 : i32
    scf.if %26 {
      %c0_18 = arith.constant 0 : index
      %c0_19 = arith.constant 0 : index
      %27 = vector.load %arg6[%c0_18, %c0_19] : memref<1x256xf32, #tpu.memory_space<vmem>>, vector<1x256xf32>
      %c0_20 = arith.constant 0 : index
      %c0_21 = arith.constant 0 : index
      %28 = vector.load %arg7[%c0_20, %c0_21] : memref<1x256xf32, #tpu.memory_space<vmem>>, vector<1x256xf32>
      %29 = math.log %28 : vector<1x256xf32>
      %30 = arith.addf %27, %29 : vector<1x256xf32>
      %c0_22 = arith.constant 0 : index
      %c0_23 = arith.constant 0 : index
      %c0_24 = arith.constant 0 : index
      %31 = vector.load %arg5[%c0_22, %c0_23, %c0_24] : memref<1x1x256xf32, #tpu.memory_space<vmem>>, vector<1x1x256xf32>
      %32 = vector.shape_cast %31 : vector<1x1x256xf32> to vector<1x256xf32>
      %33 = vector.shape_cast %30 : vector<1x256xf32> to vector<1x1x256xf32>
      tpu.vector_store %arg5[%c0_22, %c0_23, %c0_24], %33 {strides = array<i32>} : memref<1x1x256xf32, #tpu.memory_space<vmem>>, vector<1x1x256xf32>,
    } else {
    }
    return
  }
  func.func @transform_0(%arg0: i32, %arg1: i32, %arg2: i32) -> (i32, i32, i32) {
    %c0_i32 = arith.constant 0 : i32
    %c0_i32_0 = arith.constant 0 : i32
    return %arg0, %arg2, %c0_i32 : i32, i32, i32
  }
  func.func @transform_1(%arg0: i32, %arg1: i32, %arg2: i32) -> (i32, i32, i32) {
    %c0_i32 = arith.constant 0 : i32
    %c0_i32_0 = arith.constant 0 : i32
    return %arg0, %arg1, %c0_i32 : i32, i32, i32
  }
  func.func @transform_2(%arg0: i32, %arg1: i32, %arg2: i32) -> (i32, i32, i32) {
    %c0_i32 = arith.constant 0 : i32
    %c0_i32_0 = arith.constant 0 : i32
    return %arg0, %c0_i32, %arg1 : i32, i32, i32
  }
}

module attributes {stable_mosaic.version = 11 : i64} {
  func.func @residual_conv1x1_lrelu_kernel(%arg0: i32, %arg1: i32, %arg2: memref<1x4x256xf32, #tpu.memory_space<vmem>>, %arg3: memref<1x4x256xf32, #tpu.memory_space<vmem>>, %arg4: memref<4x4xbf16, #tpu.memory_space<vmem>>, %arg5: memref<4x1xf32, #tpu.memory_space<vmem>>, %arg6: memref<1x4x256xf32, #tpu.memory_space<vmem>>) attributes {dimension_semantics = [#tpu.dimension_semantics<parallel>, #tpu.dimension_semantics<parallel>], iteration_bounds = array<i64: 2, 1>, scalar_prefetch = 0 : i64, scratch_operands = 0 : i64, tpu.core_type = #tpu.core_type<tc>, window_params = [{transform_indices = @transform_0, window_bounds = array<i64: 1, 4, 256>}, {transform_indices = @transform_1, window_bounds = array<i64: 1, 4, 256>}, {pipeline_mode = #tpu.pipeline_mode<synchronous>, transform_indices = @transform_2, window_bounds = array<i64: 4, 4>}, {pipeline_mode = #tpu.pipeline_mode<synchronous>, transform_indices = @transform_3, window_bounds = array<i64: 4, 1>}, {transform_indices = @transform_4, window_bounds = array<i64: 1, 4, 256>}]} {
    %c0 = arith.constant 0 : index
    %c0_0 = arith.constant 0 : index
    %c0_1 = arith.constant 0 : index
    %0 = vector.load %arg2[%c0, %c0_0, %c0_1] : memref<1x4x256xf32, #tpu.memory_space<vmem>>, vector<1x4x256xf32>
    %1 = vector.shape_cast %0 : vector<1x4x256xf32> to vector<4x256xf32>
    %c0_2 = arith.constant 0 : index
    %c0_3 = arith.constant 0 : index
    %c0_4 = arith.constant 0 : index
    %2 = vector.load %arg3[%c0_2, %c0_3, %c0_4] : memref<1x4x256xf32, #tpu.memory_space<vmem>>, vector<1x4x256xf32>
    %3 = vector.shape_cast %2 : vector<1x4x256xf32> to vector<4x256xf32>
    %4 = arith.addf %1, %3 : vector<4x256xf32>
    %c0_5 = arith.constant 0 : index
    %c0_6 = arith.constant 0 : index
    %5 = vector.load %arg4[%c0_5, %c0_6] : memref<4x4xbf16, #tpu.memory_space<vmem>>, vector<4x4xbf16>
    %6 = arith.truncf %4 : vector<4x256xf32> to vector<4x256xbf16>
    %cst = arith.constant dense<0.000000e+00> : vector<4x256xf32>
    %7 = tpu.matmul %5, %6, %cst {dimension_numbers = #tpu.dot_dimension_numbers<[1], [0], [0], [1], [0, 0, 1, 1], [], []>} : vector<4x4xbf16>, vector<4x256xbf16>, vector<4x256xf32> -> vector<4x256xf32>
    %c0_7 = arith.constant 0 : index
    %c0_8 = arith.constant 0 : index
    %8 = vector.load %arg5[%c0_7, %c0_8] : memref<4x1xf32, #tpu.memory_space<vmem>>, vector<4x1xf32>
    %9 = vector.broadcast %8 : vector<4x1xf32> to vector<4x256xf32>
    %10 = arith.addf %7, %9 : vector<4x256xf32>
    %cst_9 = arith.constant 0.000000e+00 : f32
    %11 = vector.broadcast %cst_9 : f32 to vector<4x256xf32>
    %12 = arith.cmpf oge, %10, %11 : vector<4x256xf32>
    %cst_10 = arith.constant 0.00999999977 : f32
    %13 = vector.broadcast %cst_10 : f32 to vector<4x256xf32>
    %14 = arith.mulf %13, %10 : vector<4x256xf32>
    %15 = arith.select %12, %10, %14 : vector<4x256xi1>, vector<4x256xf32>
    %c0_11 = arith.constant 0 : index
    %c0_12 = arith.constant 0 : index
    %c0_13 = arith.constant 0 : index
    %16 = vector.load %arg6[%c0_11, %c0_12, %c0_13] : memref<1x4x256xf32, #tpu.memory_space<vmem>>, vector<1x4x256xf32>
    %17 = vector.shape_cast %16 : vector<1x4x256xf32> to vector<4x256xf32>
    %18 = vector.shape_cast %15 : vector<4x256xf32> to vector<1x4x256xf32>
    tpu.vector_store %arg6[%c0_11, %c0_12, %c0_13], %18 {strides = array<i32>} : memref<1x4x256xf32, #tpu.memory_space<vmem>>, vector<1x4x256xf32>,
    return
  }
  func.func @transform_0(%arg0: i32, %arg1: i32) -> (i32, i32, i32) {
    %c0_i32 = arith.constant 0 : i32
    %c0_i32_0 = arith.constant 0 : i32
    return %arg0, %c0_i32, %arg1 : i32, i32, i32
  }
  func.func @transform_1(%arg0: i32, %arg1: i32) -> (i32, i32, i32) {
    %c0_i32 = arith.constant 0 : i32
    %c0_i32_0 = arith.constant 0 : i32
    return %arg0, %c0_i32, %arg1 : i32, i32, i32
  }
  func.func @transform_2(%arg0: i32, %arg1: i32) -> (i32, i32) {
    %c0_i32 = arith.constant 0 : i32
    %c0_i32_0 = arith.constant 0 : i32
    %c0_i32_1 = arith.constant 0 : i32
    return %c0_i32, %c0_i32_0 : i32, i32
  }
  func.func @transform_3(%arg0: i32, %arg1: i32) -> (i32, i32) {
    %c0_i32 = arith.constant 0 : i32
    %c0_i32_0 = arith.constant 0 : i32
    %c0_i32_1 = arith.constant 0 : i32
    return %c0_i32, %c0_i32_0 : i32, i32
  }
  func.func @transform_4(%arg0: i32, %arg1: i32) -> (i32, i32, i32) {
    %c0_i32 = arith.constant 0 : i32
    %c0_i32_0 = arith.constant 0 : i32
    return %arg0, %c0_i32, %arg1 : i32, i32, i32
  }
}

</mosaic_0001>

<llo_original>
// kernel: self_attention_spa.4
$region0: #{self_attention_spa.4}
  #allocation0 [shape = 'u32[]', space=smem, size = 0x4, offset = 0x4, fixed_abs, tag = 'smem constant byte address 0x4 - core index']
  #allocation1 [shape = 'u32[144,128]{1,0:T(1,128)}', space=vmem, size = 0x12000, scoped, tag = 'internal scratch']
  %s0 = inlined_call_operand.vmem [shape: f32[2,4,256], index: 0, kind: input, shape index: {}]
  %s1 = inlined_call_operand.vmem [shape: bf16[4,4], index: 1, kind: input, shape index: {}]
  %s2 = inlined_call_operand.vmem [shape: f32[4,1], index: 2, kind: input, shape index: {}]
  %s3 = inlined_call_operand.vmem [shape: f32[2,4,256], index: 3, kind: output, shape index: {}]
  %s4 = sld [smem:[#allocation0]]
  $region45: #{self_attention_spa.4} parent=0
    _
  %s6 = ssub.s32 1, %s4
  %s7 = scalar_select 0, %s6, %s4
  loop: start=0, step=1, limit=4
  $region2: #{self_attention_spa.4} parent=0 // loop_pre_header
    _
  $region3: #{self_attention_spa.4} parent=0 // loop_header
    %s9 = sphi 0, %s13
    %p10 = scmp.ge.s32.totalorder %s9, 4
    %s16 = sphi 0, %s28
    %s17 = sphi 0, %s24
    %s18 = sphi 0, %s16
    %s19 = sphi 0, %s17
    %s20 = sphi 0, %s18
    %s21 = sphi 0, %s19
    %s33 = sphi 0, %s35
    %s36 = sphi 0, %s33
    %s37 = sphi 0, %s36
    %s53 = sphi 0, %s37
    %s57 = sphi 0, %s57
    %s59 = sphi 0, %s57
    %s60 = sphi 0, %s59
    %s74 = sphi 0, %s60
    %s78 = sphi 0, %s78
    %s80 = sphi 0, %s78
    %s81 = sphi 0, %s80
    %s95 = sphi 0, %s81
    %s103 = sphi 0, %s105
    %s106 = sphi 0, %s103
    %s107 = sphi 0, %s106
    %s123 = sphi 0, %s107
  $region4: #{self_attention_spa.4} parent=0 // loop_header_branch
    %12 = sbr.rel (%p10) target = $region8
  $region5: #{self_attention_spa.4} parent=0 // loop_body
    %s14 = ssub.s32 %s9, 1
    %s15 = ssub.s32 %s9, 2
    %s22 = sadd.s32 1, %s17
    %p23 = scmp.ge.s32.totalorder %s22, 1
    %s24 = scalar_select %p23, 0, %s22
    %s25 = sadd.s32 1, %s16
    %s26 = scalar_select %p23, %s25, %s16
    %p27 = scmp.ge.s32.totalorder %s26, 2
    %s28 = scalar_select %p27, 0, %s26
    %s29 = ssub.s32 %s16, %s28
    %s30 = ssub.s32 %s17, %s24
    %s31 = sor.u32 %s29, %s30
    %p32 = scmp.eq.s32.totalorder %s31, 0
    %s34 = sadd.s32 %s33, 1
    %s35 = scalar_select %p32, %s33, %s34
    %p38 = pneg %p32
    %p39 = scmp.eq.s32.totalorder %s9, 1
    %p40 = por %p38, %p39
    %p41 = scmp.ne.s32.totalorder %s33, %s36
    %p42 = scmp.eq.s32.totalorder %s9, 0
    %p43 = por %p41, %p42
    %p44 = scmp.ne.s32.totalorder %s33, %s36
    %p45 = scmp.eq.s32.totalorder %s14, 1
    %p46 = por %p44, %p45
    %p47 = scmp.ne.s32.totalorder %s36, %s37
    %p48 = scmp.eq.s32.totalorder %s14, 0
    %p49 = por %p47, %p48
    %p50 = scmp.ne.s32.totalorder %s36, %s37
    %p51 = scmp.eq.s32.totalorder %s15, 1
    %p52 = por %p50, %p51
    %p54 = scmp.ne.s32.totalorder %s37, %s53
    %p55 = scmp.eq.s32.totalorder %s15, 0
    %p56 = por %p54, %p55
    %s58 = sadd.s32 %s57, 1
    %p61 = scmp.eq.s32.totalorder %s9, 1
    %p62 = scmp.ne.s32.totalorder %s57, %s59
    %p63 = scmp.eq.s32.totalorder %s9, 0
    %p64 = por %p62, %p63
    %p65 = scmp.ne.s32.totalorder %s57, %s59
    %p66 = scmp.eq.s32.totalorder %s14, 1
    %p67 = por %p65, %p66
    %p68 = scmp.ne.s32.totalorder %s59, %s60
    %p69 = scmp.eq.s32.totalorder %s14, 0
    %p70 = por %p68, %p69
    %p71 = scmp.ne.s32.totalorder %s59, %s60
    %p72 = scmp.eq.s32.totalorder %s15, 1
    %p73 = por %p71, %p72
    %p75 = scmp.ne.s32.totalorder %s60, %s74
    %p76 = scmp.eq.s32.totalorder %s15, 0
    %p77 = por %p75, %p76
    %s79 = sadd.s32 %s78, 1
    %p82 = scmp.eq.s32.totalorder %s9, 1
    %p83 = scmp.ne.s32.totalorder %s78, %s80
    %p84 = scmp.eq.s32.totalorder %s9, 0
    %p85 = por %p83, %p84
    %p86 = scmp.ne.s32.totalorder %s78, %s80
    %p87 = scmp.eq.s32.totalorder %s14, 1
    %p88 = por %p86, %p87
    %p89 = scmp.ne.s32.totalorder %s80, %s81
    %p90 = scmp.eq.s32.totalorder %s14, 0
    %p91 = por %p89, %p90
    %p92 = scmp.ne.s32.totalorder %s80, %s81
    %p93 = scmp.eq.s32.totalorder %s15, 1
    %p94 = por %p92, %p93
    %p96 = scmp.ne.s32.totalorder %s81, %s95
    %p97 = scmp.eq.s32.totalorder %s15, 0
    %p98 = por %p96, %p97
    %s99 = ssub.s32 %s16, %s28
    %s100 = ssub.s32 %s17, %s24
    %s101 = sor.u32 %s99, %s100
    %p102 = scmp.eq.s32.totalorder %s101, 0
    %s104 = sadd.s32 %s103, 1
    %s105 = scalar_select %p102, %s103, %s104
    %p108 = pneg %p102
    %p109 = scmp.eq.s32.totalorder %s9, 1
    %p110 = por %p108, %p109
    %p111 = scmp.ne.s32.totalorder %s103, %s106
    %p112 = scmp.eq.s32.totalorder %s9, 0
    %p113 = por %p111, %p112
    %p114 = scmp.ne.s32.totalorder %s103, %s106
    %p115 = scmp.eq.s32.totalorder %s14, 1
    %p116 = por %p114, %p115
    %p117 = scmp.ne.s32.totalorder %s106, %s107
    %p118 = scmp.eq.s32.totalorder %s14, 0
    %p119 = por %p117, %p118
    %p120 = scmp.ne.s32.totalorder %s106, %s107
    %p121 = scmp.eq.s32.totalorder %s15, 1
    %p122 = por %p120, %p121
    %p124 = scmp.ne.s32.totalorder %s107, %s123
    %p125 = scmp.eq.s32.totalorder %s15, 0
    %p126 = por %p124, %p125
    %p127 = scmp.le.s32.totalorder 1, %s9
    %p128 = scmp.lt.s32.totalorder %s9, 3
    %p129 = pnand %p127, %p128
    %p130 = pneg %p129
    // Predicated region
    $region9: #{self_attention_spa.4} parent=5 // pred_check
      _
    $region10: #{self_attention_spa.4} parent=5 // pred_check_branch
      %132 = sbr.rel (%p129) target = $region12
    $region11: #{self_attention_spa.4} parent=5 // pred_region
      %s133 = ssub.s32 %s9, 1
      // Predicated region
      $region13: #{self_attention_spa.4} parent=11 // pred_check
        %p134 = pneg %p70
      $region14: #{self_attention_spa.4} parent=11 // pred_check_branch
        %136 = sbr.rel (%p134) target = $region16
      $region15: #{self_attention_spa.4} parent=11 // pred_region
        _
      $region16: #{self_attention_spa.4} parent=11 // pred_fallthru
        _
      // Predicated region
      $region17: #{self_attention_spa.4} parent=11 // pred_check
        %p137 = pneg %p91
      $region18: #{self_attention_spa.4} parent=11 // pred_check_branch
        %139 = sbr.rel (%p137) target = $region20
      $region19: #{self_attention_spa.4} parent=11 // pred_region
        _
      $region20: #{self_attention_spa.4} parent=11 // pred_fallthru
        _
    $region12: #{self_attention_spa.4} parent=5 // pred_fallthru
      _
    %p140 = scmp.lt.s32.totalorder %s9, 2
    // Predicated region
    $region21: #{self_attention_spa.4} parent=5 // pred_check
      %p141 = pneg %p140
    $region22: #{self_attention_spa.4} parent=5 // pred_check_branch
      %143 = sbr.rel (%p141) target = $region24
    $region23: #{self_attention_spa.4} parent=5 // pred_region
      // Predicated region
      $region25: #{self_attention_spa.4} parent=23 // pred_check
        %p144 = pneg %p43
      $region26: #{self_attention_spa.4} parent=23 // pred_check_branch
        %146 = sbr.rel (%p144) target = $region28
      $region27: #{self_attention_spa.4} parent=23 // pred_region
        %s147 = smul.u32 2, %s17
        %p148 = scmp.lt.s32.totalorder %s16, 1
        %s149 = scalar_select %p148, %s16, 1
        %p150 = scmp.lt.s32.totalorder %s147, 1
        %s151 = scalar_select %p150, %s147, 1
        %s152 = smul.addr %s149, 2
        %s153 = sadd.s32 %s151, %s152
        %s154 = smul.addr %s153, 4
        %s155 = scalar_lea.vmem %s0, %s154
        %s156 = smul.u32 2, %s17
      $region28: #{self_attention_spa.4} parent=23 // pred_fallthru
        _
    $region24: #{self_attention_spa.4} parent=5 // pred_fallthru
      _
    %p157 = scmp.le.s32.totalorder 1, %s9
    %p158 = scmp.lt.s32.totalorder %s9, 3
    %p159 = pnand %p157, %p158
    %p160 = pneg %p159
    // Predicated region
    $region29: #{self_attention_spa.4} parent=5 // pred_check
      _
    $region30: #{self_attention_spa.4} parent=5 // pred_check_branch
      %162 = sbr.rel (%p159) target = $region32
    $region31: #{self_attention_spa.4} parent=5 // pred_region
      %s163 = ssub.s32 %s9, 1
      %s164 = smul.u32 2, %s19
      %p165 = scmp.lt.s32.totalorder %s18, 1
      %s166 = scalar_select %p165, %s18, 1
      %p167 = scmp.lt.s32.totalorder %s164, 1
      %s168 = scalar_select %p167, %s164, 1
      %s169 = smul.addr %s166, 2
      %s170 = sadd.s32 %s168, %s169
      %s171 = smul.addr %s170, 4
      %s172 = scalar_lea.vmem %s0, %s171
      %p173 = pneg %p49
      %p174 = pneg %p46
      %p175 = pneg %p70
      %p176 = pneg %p67
      %p177 = pneg %p91
      %p178 = pneg %p88
      %p179 = pneg %p119
      %p180 = pneg %p116
      %s181 = smul.u32 2, %s19
      %p182 = scmp.lt.s32.totalorder %s18, 1
      %s183 = scalar_select %p182, %s18, 1
      %p184 = scmp.lt.s32.totalorder %s181, 1
      %s185 = scalar_select %p184, %s181, 1
      %s186 = smul.addr %s183, 2
      %s187 = sadd.s32 %s185, %s186
      %s188 = smul.addr %s187, 4
      %s189 = scalar_lea.vmem %s3, %s188
      %s190 = smul.u32 2, %s19
      %p191 = scmp.lt.s32.totalorder %s18, 1
      %s192 = scalar_select %p191, %s18, 1
      %p193 = scmp.lt.s32.totalorder %s190, 1
      %s194 = scalar_select %p193, %s190, 1
      %s195 = smul.addr %s192, 2
      %s196 = sadd.s32 %s194, %s195
      %s197 = smul.addr %s196, 4
      %s198 = scalar_lea.vmem %s0, %s197
      %s199 = smul.u32 2, %s19
      %s200 = smul.u32 2, %s19
      %p201 = scmp.lt.s32.totalorder %s18, 1
      %s202 = scalar_select %p201, %s18, 1
      %p203 = scmp.lt.s32.totalorder %s200, 1
      %s204 = scalar_select %p203, %s200, 1
      %s205 = smul.addr %s202, 2
      %s206 = sadd.s32 %s204, %s205
      %s207 = smul.addr %s206, 4
      %s208 = scalar_lea.vmem %s3, %s207
      %s209 = smul.u32 2, %s19
      %v211 = vld [vmem:[%s198] sm:$0xff]
      %v213 = vcombine.high %v211, %v211
      %v215 = vpack.c.bf16 %v211, %v211
      %v216 = vpack.c.bf16 %v213, %v213
      %v217 = vld [vmem:[%s1] sm:$0x3]
      %v218 = vld [vmem:[%s2] sm:$0xf]
      %220 = vset.pattern.permute.xlu0 0
      %221 = vperm.xlu0 %220, %v218
      %v222 = vpop.permute.xlu0 %221
      %vm224 = vcmask 31744
      %v226 = vsel %vm224, %v217, 0
      %vm228 = vcmask 1041408
      %v230 = vsel %vm228, %v215, 0
      %v233 = vsel %vm228, %v216, 0
      %235 = vmatprep.subr.bf16.mxu0 %v233
      %236 = vmatpush1.bf16.msra.mxu0 %v230
      %237 = vmatprep.subr.bf16.mxu0 0
      %238 = vmatpush1.bf16.msra.mxu0 0
      %239 = vmatprep.subr.bf16.mxu0 0
      %240 = vmatpush1.bf16.msra.mxu0 0
      %241 = vmatprep.subr.bf16.mxu0 0
      %242 = vmatpush1.bf16.msra.mxu0 0
      %243 = vmatprep.subr.bf16.mxu0 0
      %244 = vmatpush1.bf16.msra.mxu0 0
      %245 = vmatprep.subr.bf16.mxu0 0
      %246 = vmatpush1.bf16.msra.mxu0 0
      %247 = vmatprep.subr.bf16.mxu0 0
      %248 = vmatpush1.bf16.msra.mxu0 0
      %249 = vmatprep.subr.bf16.mxu0 0
      %250 = vmatpush1.bf16.msra.mxu0 0
      %251 = vmatprep.subr.bf16.mxu0 0
      %252 = vmatpush1.bf16.msra.mxu0 0
      %253 = vmatprep.subr.bf16.mxu0 0
      %254 = vmatpush1.bf16.msra.mxu0 0
      %255 = vmatprep.subr.bf16.mxu0 0
      %256 = vmatpush1.bf16.msra.mxu0 0
      %257 = vmatprep.subr.bf16.mxu0 0
      %258 = vmatpush1.bf16.msra.mxu0 0
      %259 = vmatprep.subr.bf16.mxu0 0
      %260 = vmatpush1.bf16.msra.mxu0 0
      %261 = vmatprep.subr.bf16.mxu0 0
      %262 = vmatpush1.bf16.msra.mxu0 0
      %263 = vmatprep.subr.bf16.mxu0 0
      %264 = vmatpush1.bf16.msra.mxu0 0
      %265 = vmatprep.subr.bf16.mxu0 0
      %266 = vmatpush1.bf16.msra.mxu0 0
      %267 = vmatprep.mubr.bf16.mxu0 0
      %268 = vmatmul.mubr.bf16.gmra.mrb[0].mxu0 %v226
      %v269 = vpop.f32.mrb[0].mxu0
      %v270 = vadd.f32 %v222, %v269
      %v271 = vpop.f32.mrb[0].mxu0
      %v272 = vadd.f32 %v222, %v271
      %v273 = vpop.f32.mrb[0].mxu0
      %v274 = vpop.f32.mrb[0].mxu0
      %275 = vdwg.mxu0
      %vm276 = vcmp.ge.f32.partialorder %v270, 0.0
      %vm277 = vcmp.ge.f32.partialorder %v272, 0.0
      %v278 = vmul.f32 %v270, 0.01
      %v279 = vmul.f32 %v272, 0.01
      %v280 = vsel %vm276, %v270, %v278
      %v281 = vsel %vm277, %v272, %v279
      %v284 = vcombine.low %v280, %v281
      %286 = vst [vmem:[%s208] sm:$0xff] %v284
      %s287 = smul.u32 2, %s19
      %p288 = scmp.lt.s32.totalorder %s18, 1
      %s289 = scalar_select %p288, %s18, 1
      %p290 = scmp.lt.s32.totalorder %s287, 1
      %s291 = scalar_select %p290, %s287, 1
      %s292 = smul.addr %s289, 2
      %s293 = sadd.s32 %s291, %s292
      %s294 = smul.addr %s293, 4
      %s295 = scalar_lea.vmem %s3, %s294
      // Predicated region
      $region33: #{self_attention_spa.4} parent=31 // pred_check
        %p296 = pneg %p116
      $region34: #{self_attention_spa.4} parent=31 // pred_check_branch
        %298 = sbr.rel (%p296) target = $region36
      $region35: #{self_attention_spa.4} parent=31 // pred_region
        %s299 = smul.u32 2, %s19
      $region36: #{self_attention_spa.4} parent=31 // pred_fallthru
        _
    $region32: #{self_attention_spa.4} parent=5 // pred_fallthru
      _
    %p300 = scmp.le.s32.totalorder 2, %s9
    // Predicated region
    $region37: #{self_attention_spa.4} parent=5 // pred_check
      %p301 = pneg %p300
    $region38: #{self_attention_spa.4} parent=5 // pred_check_branch
      %303 = sbr.rel (%p301) target = $region40
    $region39: #{self_attention_spa.4} parent=5 // pred_region
      %s304 = ssub.s32 %s9, 2
      // Predicated region
      $region41: #{self_attention_spa.4} parent=39 // pred_check
        %p305 = pneg %p122
      $region42: #{self_attention_spa.4} parent=39 // pred_check_branch
        %307 = sbr.rel (%p305) target = $region44
      $region43: #{self_attention_spa.4} parent=39 // pred_region
        %s308 = smul.u32 2, %s21
        %p309 = scmp.lt.s32.totalorder %s20, 1
        %s310 = scalar_select %p309, %s20, 1
        %p311 = scmp.lt.s32.totalorder %s308, 1
        %s312 = scalar_select %p311, %s308, 1
        %s313 = smul.addr %s310, 2
        %s314 = sadd.s32 %s312, %s313
        %s315 = smul.addr %s314, 4
        %s316 = scalar_lea.vmem %s3, %s315
      $region44: #{self_attention_spa.4} parent=39 // pred_fallthru
        _
    $region40: #{self_attention_spa.4} parent=5 // pred_fallthru
      _
  $region6: #{self_attention_spa.4} parent=0 // loop_footer
    %s13 = sadd.s32 1, %s9
  $region7: #{self_attention_spa.4} parent=0 // loop_footer_branch
    %8 = sbr.rel target = $region3
  $region8: #{self_attention_spa.4} parent=0 // loop_exit
    _

// kernel: self_attention_spa.5
$region0: #{self_attention_spa.5}
  #allocation0 [shape = 'u32[]', space=smem, size = 0x4, offset = 0x4, fixed_abs, tag = 'smem constant byte address 0x4 - core index']
  #allocation1 [shape = 'u32[144,128]{1,0:T(1,128)}', space=vmem, size = 0x12000, scoped, tag = 'internal scratch']
  #allocation2 [shape = 'f32[1,256]{1,0:T(1,128)}', space=vmem, size = 0x400, scoped, tag = 'scratch operand']
  #allocation3 [shape = 'f32[1,256]{1,0:T(1,128)}', space=vmem, size = 0x400, scoped, tag = 'scratch operand']
  %s0 = inlined_call_operand.vmem [shape: bf16[2,256,128], index: 0, kind: input, shape index: {}, may-alias: {0,1}]
  %s1 = inlined_call_operand.vmem [shape: bf16[2,256,128], index: 1, kind: input, shape index: {}, may-alias: {0,1}]
  %s2 = inlined_call_operand.vmem [shape: f32[2,1,256], index: 2, kind: output, shape index: {}]
  %s3 = sld [smem:[#allocation0]]
  $region49: #{self_attention_spa.5} parent=0
    _
  %s5 = ssub.s32 1, %s3
  %s6 = scalar_select 0, %s5, %s3
  loop: start=0, step=1, limit=4
  $region2: #{self_attention_spa.5} parent=0 // loop_pre_header
    _
  $region3: #{self_attention_spa.5} parent=0 // loop_header
    %s8 = sphi 0, %s12
    %p9 = scmp.ge.s32.totalorder %s8, 4
    %s15 = sphi 0, %s34
    %s16 = sphi 0, %s30
    %s17 = sphi 0, %s26
    %s18 = sphi 0, %s15
    %s19 = sphi 0, %s16
    %s20 = sphi 0, %s17
    %s21 = sphi 0, %s18
    %s22 = sphi 0, %s19
    %s23 = sphi 0, %s20
    %s39 = sphi 0, %s41
    %s42 = sphi 0, %s39
    %s43 = sphi 0, %s42
    %s59 = sphi 0, %s43
    %s67 = sphi 0, %s69
    %s70 = sphi 0, %s67
    %s71 = sphi 0, %s70
    %s87 = sphi 0, %s71
    %s95 = sphi 0, %s97
    %s98 = sphi 0, %s95
    %s99 = sphi 0, %s98
    %s115 = sphi 0, %s99
  $region4: #{self_attention_spa.5} parent=0 // loop_header_branch
    %11 = sbr.rel (%p9) target = $region8
  $region5: #{self_attention_spa.5} parent=0 // loop_body
    %s13 = ssub.s32 %s8, 1
    %s14 = ssub.s32 %s8, 2
    %s24 = sadd.s32 1, %s17
    %p25 = scmp.ge.s32.totalorder %s24, 1
    %s26 = scalar_select %p25, 0, %s24
    %s27 = sadd.s32 1, %s16
    %s28 = scalar_select %p25, %s27, %s16
    %p29 = scmp.ge.s32.totalorder %s28, 1
    %s30 = scalar_select %p29, 0, %s28
    %s31 = sadd.s32 1, %s15
    %s32 = scalar_select %p29, %s31, %s15
    %p33 = scmp.ge.s32.totalorder %s32, 2
    %s34 = scalar_select %p33, 0, %s32
    %s35 = ssub.s32 %s15, %s34
    %s36 = ssub.s32 %s17, %s26
    %s37 = sor.u32 %s35, %s36
    %p38 = scmp.eq.s32.totalorder %s37, 0
    %s40 = sadd.s32 %s39, 1
    %s41 = scalar_select %p38, %s39, %s40
    %p44 = pneg %p38
    %p45 = scmp.eq.s32.totalorder %s8, 1
    %p46 = por %p44, %p45
    %p47 = scmp.ne.s32.totalorder %s39, %s42
    %p48 = scmp.eq.s32.totalorder %s8, 0
    %p49 = por %p47, %p48
    %p50 = scmp.ne.s32.totalorder %s39, %s42
    %p51 = scmp.eq.s32.totalorder %s13, 1
    %p52 = por %p50, %p51
    %p53 = scmp.ne.s32.totalorder %s42, %s43
    %p54 = scmp.eq.s32.totalorder %s13, 0
    %p55 = por %p53, %p54
    %p56 = scmp.ne.s32.totalorder %s42, %s43
    %p57 = scmp.eq.s32.totalorder %s14, 1
    %p58 = por %p56, %p57
    %p60 = scmp.ne.s32.totalorder %s43, %s59
    %p61 = scmp.eq.s32.totalorder %s14, 0
    %p62 = por %p60, %p61
    %s63 = ssub.s32 %s15, %s34
    %s64 = ssub.s32 %s16, %s30
    %s65 = sor.u32 %s63, %s64
    %p66 = scmp.eq.s32.totalorder %s65, 0
    %s68 = sadd.s32 %s67, 1
    %s69 = scalar_select %p66, %s67, %s68
    %p72 = pneg %p66
    %p73 = scmp.eq.s32.totalorder %s8, 1
    %p74 = por %p72, %p73
    %p75 = scmp.ne.s32.totalorder %s67, %s70
    %p76 = scmp.eq.s32.totalorder %s8, 0
    %p77 = por %p75, %p76
    %p78 = scmp.ne.s32.totalorder %s67, %s70
    %p79 = scmp.eq.s32.totalorder %s13, 1
    %p80 = por %p78, %p79
    %p81 = scmp.ne.s32.totalorder %s70, %s71
    %p82 = scmp.eq.s32.totalorder %s13, 0
    %p83 = por %p81, %p82
    %p84 = scmp.ne.s32.totalorder %s70, %s71
    %p85 = scmp.eq.s32.totalorder %s14, 1
    %p86 = por %p84, %p85
    %p88 = scmp.ne.s32.totalorder %s71, %s87
    %p89 = scmp.eq.s32.totalorder %s14, 0
    %p90 = por %p88, %p89
    %s91 = ssub.s32 %s15, %s34
    %s92 = ssub.s32 %s16, %s30
    %s93 = sor.u32 %s91, %s92
    %p94 = scmp.eq.s32.totalorder %s93, 0
    %s96 = sadd.s32 %s95, 1
    %s97 = scalar_select %p94, %s95, %s96
    %p100 = pneg %p94
    %p101 = scmp.eq.s32.totalorder %s8, 1
    %p102 = por %p100, %p101
    %p103 = scmp.ne.s32.totalorder %s95, %s98
    %p104 = scmp.eq.s32.totalorder %s8, 0
    %p105 = por %p103, %p104
    %p106 = scmp.ne.s32.totalorder %s95, %s98
    %p107 = scmp.eq.s32.totalorder %s13, 1
    %p108 = por %p106, %p107
    %p109 = scmp.ne.s32.totalorder %s98, %s99
    %p110 = scmp.eq.s32.totalorder %s13, 0
    %p111 = por %p109, %p110
    %p112 = scmp.ne.s32.totalorder %s98, %s99
    %p113 = scmp.eq.s32.totalorder %s14, 1
    %p114 = por %p112, %p113
    %p116 = scmp.ne.s32.totalorder %s99, %s115
    %p117 = scmp.eq.s32.totalorder %s14, 0
    %p118 = por %p116, %p117
    %p119 = scmp.le.s32.totalorder 1, %s8
    %p120 = scmp.lt.s32.totalorder %s8, 3
    %p121 = pnand %p119, %p120
    %p122 = pneg %p121
    // Predicated region
    $region9: #{self_attention_spa.5} parent=5 // pred_check
      _
    $region10: #{self_attention_spa.5} parent=5 // pred_check_branch
      %124 = sbr.rel (%p121) target = $region12
    $region11: #{self_attention_spa.5} parent=5 // pred_region
      %s125 = ssub.s32 %s8, 1
    $region12: #{self_attention_spa.5} parent=5 // pred_fallthru
      _
    %p126 = scmp.lt.s32.totalorder %s8, 2
    // Predicated region
    $region13: #{self_attention_spa.5} parent=5 // pred_check
      %p127 = pneg %p126
    $region14: #{self_attention_spa.5} parent=5 // pred_check_branch
      %129 = sbr.rel (%p127) target = $region16
    $region15: #{self_attention_spa.5} parent=5 // pred_region
      // Predicated region
      $region17: #{self_attention_spa.5} parent=15 // pred_check
        %p130 = pneg %p49
      $region18: #{self_attention_spa.5} parent=15 // pred_check_branch
        %132 = sbr.rel (%p130) target = $region20
      $region19: #{self_attention_spa.5} parent=15 // pred_region
        %s133 = smul.u32 32, %s17
        %p134 = scmp.lt.s32.totalorder %s15, 1
        %s135 = scalar_select %p134, %s15, 1
        %p136 = scmp.lt.s32.totalorder %s133, 31
        %s137 = scalar_select %p136, %s133, 31
        %s138 = smul.addr %s135, 32
        %s139 = sadd.s32 %s137, %s138
        %s140 = smul.addr %s139, 4
        %s141 = scalar_lea.vmem %s0, %s140
        %s142 = smul.u32 32, %s17
      $region20: #{self_attention_spa.5} parent=15 // pred_fallthru
        _
      // Predicated region
      $region21: #{self_attention_spa.5} parent=15 // pred_check
        %p143 = pneg %p77
      $region22: #{self_attention_spa.5} parent=15 // pred_check_branch
        %145 = sbr.rel (%p143) target = $region24
      $region23: #{self_attention_spa.5} parent=15 // pred_region
        %s146 = smul.u32 32, %s16
        %p147 = scmp.lt.s32.totalorder %s15, 1
        %s148 = scalar_select %p147, %s15, 1
        %p149 = scmp.lt.s32.totalorder %s146, 31
        %s150 = scalar_select %p149, %s146, 31
        %s151 = smul.addr %s148, 32
        %s152 = sadd.s32 %s150, %s151
        %s153 = smul.addr %s152, 4
        %s154 = scalar_lea.vmem %s1, %s153
        %s155 = smul.u32 32, %s16
      $region24: #{self_attention_spa.5} parent=15 // pred_fallthru
        _
    $region16: #{self_attention_spa.5} parent=5 // pred_fallthru
      _
    %p156 = scmp.le.s32.totalorder 1, %s8
    %p157 = scmp.lt.s32.totalorder %s8, 3
    %p158 = pnand %p156, %p157
    %p159 = pneg %p158
    // Predicated region
    $region25: #{self_attention_spa.5} parent=5 // pred_check
      _
    $region26: #{self_attention_spa.5} parent=5 // pred_check_branch
      %161 = sbr.rel (%p158) target = $region28
    $region27: #{self_attention_spa.5} parent=5 // pred_region
      %s162 = ssub.s32 %s8, 1
      %s163 = smul.u32 32, %s20
      %p164 = scmp.lt.s32.totalorder %s18, 1
      %s165 = scalar_select %p164, %s18, 1
      %p166 = scmp.lt.s32.totalorder %s163, 31
      %s167 = scalar_select %p166, %s163, 31
      %s168 = smul.addr %s165, 32
      %s169 = sadd.s32 %s167, %s168
      %s170 = smul.addr %s169, 4
      %s171 = scalar_lea.vmem %s0, %s170
      %p172 = pneg %p55
      %p173 = pneg %p52
      %s174 = smul.u32 32, %s19
      %p175 = scmp.lt.s32.totalorder %s18, 1
      %s176 = scalar_select %p175, %s18, 1
      %p177 = scmp.lt.s32.totalorder %s174, 31
      %s178 = scalar_select %p177, %s174, 31
      %s179 = smul.addr %s176, 32
      %s180 = sadd.s32 %s178, %s179
      %s181 = smul.addr %s180, 4
      %s182 = scalar_lea.vmem %s1, %s181
      %p183 = pneg %p83
      %p184 = pneg %p80
      %p185 = pneg %p111
      %p186 = pneg %p108
      %s187 = smul.u32 2, %s19
      %p188 = scmp.lt.s32.totalorder %s18, 1
      %s189 = scalar_select %p188, %s18, 1
      %p190 = scmp.lt.s32.totalorder %s187, 1
      %s191 = scalar_select %p190, %s187, 1
      %s192 = smul.addr %s189, 2
      %s193 = sadd.s32 %s191, %s192
      %s194 = scalar_lea.vmem %s2, %s193
      %s195 = smul.u32 32, %s20
      %p196 = scmp.lt.s32.totalorder %s18, 1
      %s197 = scalar_select %p196, %s18, 1
      %p198 = scmp.lt.s32.totalorder %s195, 31
      %s199 = scalar_select %p198, %s195, 31
      %s200 = smul.addr %s197, 32
      %s201 = sadd.s32 %s199, %s200
      %s202 = smul.addr %s201, 4
      %s203 = scalar_lea.vmem %s0, %s202
      %s204 = smul.u32 32, %s20
      %s205 = smul.u32 32, %s19
      %p206 = scmp.lt.s32.totalorder %s18, 1
      %s207 = scalar_select %p206, %s18, 1
      %p208 = scmp.lt.s32.totalorder %s205, 31
      %s209 = scalar_select %p208, %s205, 31
      %s210 = smul.addr %s207, 32
      %s211 = sadd.s32 %s209, %s210
      %s212 = smul.addr %s211, 4
      %s213 = scalar_lea.vmem %s1, %s212
      %s214 = smul.u32 32, %s19
      %s215 = smul.u32 2, %s19
      %p216 = scmp.lt.s32.totalorder %s18, 1
      %s217 = scalar_select %p216, %s18, 1
      %p218 = scmp.lt.s32.totalorder %s215, 1
      %s219 = scalar_select %p218, %s215, 1
      %s220 = smul.addr %s217, 2
      %s221 = sadd.s32 %s219, %s220
      %s222 = scalar_lea.vmem %s2, %s221
      %s223 = smul.u32 2, %s19
      %p225 = scmp.eq.s32.totalorder %s20, 0
      // Predicated region
      $region29: #{self_attention_spa.5} parent=27 // pred_check
        %p226 = pneg %p225
      $region30: #{self_attention_spa.5} parent=27 // pred_check_branch
        %228 = sbr.rel (%p226) target = $region32
      $region31: #{self_attention_spa.5} parent=27 // pred_region
        %v229 = vlaneseq
        %vm230 = vcmp.ge.s32.totalorder %v229, 0
        %vm231 = vcmp.lt.s32.totalorder %v229, 256
        %vm232 = vmand %vm230, %vm231
        %233 = vst.msk [vmem:[#allocation2] sm:$0x3] %vm232, -inf
        %234 = vst.msk [vmem:[#allocation3] sm:$0x3] %vm232, 0.0
      $region32: #{self_attention_spa.5} parent=27 // pred_fallthru
        _
      %v235 = vld [vmem:[%s203] sm:$0xf]
      %v236 = vld [vmem:[%s203 + $0x4] sm:$0xf]
      %v237 = vld [vmem:[%s203 + $0x8] sm:$0xf]
      %v238 = vld [vmem:[%s203 + $0xc] sm:$0xf]
      %v239 = vld [vmem:[%s203 + $0x10] sm:$0xf]
      %v240 = vld [vmem:[%s203 + $0x14] sm:$0xf]
      %v241 = vld [vmem:[%s203 + $0x18] sm:$0xf]
      %v242 = vld [vmem:[%s203 + $0x1c] sm:$0xf]
      %v243 = vld [vmem:[%s203 + $0x20] sm:$0xf]
      %v244 = vld [vmem:[%s203 + $0x24] sm:$0xf]
      %v245 = vld [vmem:[%s203 + $0x28] sm:$0xf]
      %v246 = vld [vmem:[%s203 + $0x2c] sm:$0xf]
      %v247 = vld [vmem:[%s203 + $0x30] sm:$0xf]
      %v248 = vld [vmem:[%s203 + $0x34] sm:$0xf]
      %v249 = vld [vmem:[%s203 + $0x38] sm:$0xf]
      %v250 = vld [vmem:[%s203 + $0x3c] sm:$0xf]
      %v251 = vld [vmem:[%s203 + $0x40] sm:$0xf]
      %v252 = vld [vmem:[%s203 + $0x44] sm:$0xf]
      %v253 = vld [vmem:[%s203 + $0x48] sm:$0xf]
      %v254 = vld [vmem:[%s203 + $0x4c] sm:$0xf]
      %v255 = vld [vmem:[%s203 + $0x50] sm:$0xf]
      %v256 = vld [vmem:[%s203 + $0x54] sm:$0xf]
      %v257 = vld [vmem:[%s203 + $0x58] sm:$0xf]
      %v258 = vld [vmem:[%s203 + $0x5c] sm:$0xf]
      %v259 = vld [vmem:[%s203 + $0x60] sm:$0xf]
      %v260 = vld [vmem:[%s203 + $0x64] sm:$0xf]
      %v261 = vld [vmem:[%s203 + $0x68] sm:$0xf]
      %v262 = vld [vmem:[%s203 + $0x6c] sm:$0xf]
      %v263 = vld [vmem:[%s203 + $0x70] sm:$0xf]
      %v264 = vld [vmem:[%s203 + $0x74] sm:$0xf]
      %v265 = vld [vmem:[%s203 + $0x78] sm:$0xf]
      %v266 = vld [vmem:[%s203 + $0x7c] sm:$0xf]
      %v267 = vld [vmem:[%s213] sm:$0xf]
      %v268 = vld [vmem:[%s213 + $0x4] sm:$0xf]
      %v269 = vld [vmem:[%s213 + $0x8] sm:$0xf]
      %v270 = vld [vmem:[%s213 + $0xc] sm:$0xf]
      %v271 = vld [vmem:[%s213 + $0x10] sm:$0xf]
      %v272 = vld [vmem:[%s213 + $0x14] sm:$0xf]
      %v273 = vld [vmem:[%s213 + $0x18] sm:$0xf]
      %v274 = vld [vmem:[%s213 + $0x1c] sm:$0xf]
      %v275 = vld [vmem:[%s213 + $0x20] sm:$0xf]
      %v276 = vld [vmem:[%s213 + $0x24] sm:$0xf]
      %v277 = vld [vmem:[%s213 + $0x28] sm:$0xf]
      %v278 = vld [vmem:[%s213 + $0x2c] sm:$0xf]
      %v279 = vld [vmem:[%s213 + $0x30] sm:$0xf]
      %v280 = vld [vmem:[%s213 + $0x34] sm:$0xf]
      %v281 = vld [vmem:[%s213 + $0x38] sm:$0xf]
      %v282 = vld [vmem:[%s213 + $0x3c] sm:$0xf]
      %v283 = vld [vmem:[%s213 + $0x40] sm:$0xf]
      %v284 = vld [vmem:[%s213 + $0x44] sm:$0xf]
      %v285 = vld [vmem:[%s213 + $0x48] sm:$0xf]
      %v286 = vld [vmem:[%s213 + $0x4c] sm:$0xf]
      %v287 = vld [vmem:[%s213 + $0x50] sm:$0xf]
      %v288 = vld [vmem:[%s213 + $0x54] sm:$0xf]
      %v289 = vld [vmem:[%s213 + $0x58] sm:$0xf]
      %v290 = vld [vmem:[%s213 + $0x5c] sm:$0xf]
      %v291 = vld [vmem:[%s213 + $0x60] sm:$0xf]
      %v292 = vld [vmem:[%s213 + $0x64] sm:$0xf]
      %v293 = vld [vmem:[%s213 + $0x68] sm:$0xf]
      %v294 = vld [vmem:[%s213 + $0x6c] sm:$0xf]
      %v295 = vld [vmem:[%s213 + $0x70] sm:$0xf]
      %v296 = vld [vmem:[%s213 + $0x74] sm:$0xf]
      %v297 = vld [vmem:[%s213 + $0x78] sm:$0xf]
      %v298 = vld [vmem:[%s213 + $0x7c] sm:$0xf]
      %v331 = vunpack.c.l.b16 %v235
      %v332 = vunpack.c.l.b16 %v236
      %v333 = vunpack.c.l.b16 %v237
      %v334 = vunpack.c.l.b16 %v238
      %v335 = vunpack.c.l.b16 %v239
      %v336 = vunpack.c.l.b16 %v240
      %v337 = vunpack.c.l.b16 %v241
      %v338 = vunpack.c.l.b16 %v242
      %v339 = vunpack.c.l.b16 %v243
      %v340 = vunpack.c.l.b16 %v244
      %v341 = vunpack.c.l.b16 %v245
      %v342 = vunpack.c.l.b16 %v246
      %v343 = vunpack.c.l.b16 %v247
      %v344 = vunpack.c.l.b16 %v248
      %v345 = vunpack.c.l.b16 %v249
      %v346 = vunpack.c.l.b16 %v250
      %v347 = vunpack.c.l.b16 %v251
      %v348 = vunpack.c.l.b16 %v252
      %v349 = vunpack.c.l.b16 %v253
      %v350 = vunpack.c.l.b16 %v254
      %v351 = vunpack.c.l.b16 %v255
      %v352 = vunpack.c.l.b16 %v256
      %v353 = vunpack.c.l.b16 %v257
      %v354 = vunpack.c.l.b16 %v258
      %v355 = vunpack.c.l.b16 %v259
      %v356 = vunpack.c.l.b16 %v260
      %v357 = vunpack.c.l.b16 %v261
      %v358 = vunpack.c.l.b16 %v262
      %v359 = vunpack.c.l.b16 %v263
      %v360 = vunpack.c.l.b16 %v264
      %v361 = vunpack.c.l.b16 %v265
      %v362 = vunpack.c.l.b16 %v266
      %v363 = vpack.c.b16 %v332, %v331
      %v364 = vpack.c.b16 %v334, %v333
      %v365 = vpack.c.b16 %v336, %v335
      %v366 = vpack.c.b16 %v338, %v337
      %v367 = vpack.c.b16 %v340, %v339
      %v368 = vpack.c.b16 %v342, %v341
      %v369 = vpack.c.b16 %v344, %v343
      %v370 = vpack.c.b16 %v346, %v345
      %v371 = vpack.c.b16 %v348, %v347
      %v372 = vpack.c.b16 %v350, %v349
      %v373 = vpack.c.b16 %v352, %v351
      %v374 = vpack.c.b16 %v354, %v353
      %v375 = vpack.c.b16 %v356, %v355
      %v376 = vpack.c.b16 %v358, %v357
      %v377 = vpack.c.b16 %v360, %v359
      %v378 = vpack.c.b16 %v362, %v361
      %v427 = vunpack.c.l.b16 %v267
      %v428 = vunpack.c.l.b16 %v268
      %v429 = vunpack.c.l.b16 %v269
      %v430 = vunpack.c.l.b16 %v270
      %v431 = vunpack.c.l.b16 %v271
      %v432 = vunpack.c.l.b16 %v272
      %v433 = vunpack.c.l.b16 %v273
      %v434 = vunpack.c.l.b16 %v274
      %v435 = vunpack.c.l.b16 %v275
      %v436 = vunpack.c.l.b16 %v276
      %v437 = vunpack.c.l.b16 %v277
      %v438 = vunpack.c.l.b16 %v278
      %v439 = vunpack.c.l.b16 %v279
      %v440 = vunpack.c.l.b16 %v280
      %v441 = vunpack.c.l.b16 %v281
      %v442 = vunpack.c.l.b16 %v282
      %v443 = vunpack.c.l.b16 %v283
      %v444 = vunpack.c.l.b16 %v284
      %v445 = vunpack.c.l.b16 %v285
      %v446 = vunpack.c.l.b16 %v286
      %v447 = vunpack.c.l.b16 %v287
      %v448 = vunpack.c.l.b16 %v288
      %v449 = vunpack.c.l.b16 %v289
      %v450 = vunpack.c.l.b16 %v290
      %v451 = vunpack.c.l.b16 %v291
      %v452 = vunpack.c.l.b16 %v292
      %v453 = vunpack.c.l.b16 %v293
      %v454 = vunpack.c.l.b16 %v294
      %v455 = vunpack.c.l.b16 %v295
      %v456 = vunpack.c.l.b16 %v296
      %v457 = vunpack.c.l.b16 %v297
      %v458 = vunpack.c.l.b16 %v298
      %v459 = vpack.c.b16 %v428, %v427
      %v460 = vpack.c.b16 %v430, %v429
      %v461 = vpack.c.b16 %v432, %v431
      %v462 = vpack.c.b16 %v434, %v433
      %v463 = vpack.c.b16 %v436, %v435
      %v464 = vpack.c.b16 %v438, %v437
      %v465 = vpack.c.b16 %v440, %v439
      %v466 = vpack.c.b16 %v442, %v441
      %v467 = vpack.c.b16 %v444, %v443
      %v468 = vpack.c.b16 %v446, %v445
      %v469 = vpack.c.b16 %v448, %v447
      %v470 = vpack.c.b16 %v450, %v449
      %v471 = vpack.c.b16 %v452, %v451
      %v472 = vpack.c.b16 %v454, %v453
      %v473 = vpack.c.b16 %v456, %v455
      %v474 = vpack.c.b16 %v458, %v457
      %491 = vmatprep.subr.bf16.mxu0 0
      %492 = vmatpush1.bf16.xpose.msra.mxu0 %v459
      %493 = vmatprep.subr.bf16.mxu0 0
      %494 = vmatpush1.bf16.xpose.msra.mxu0 %v460
      %495 = vmatprep.subr.bf16.mxu0 0
      %496 = vmatpush1.bf16.xpose.msra.mxu0 %v461
      %497 = vmatprep.subr.bf16.mxu0 0
      %498 = vmatpush1.bf16.xpose.msra.mxu0 %v462
      %499 = vmatprep.subr.bf16.mxu0 0
      %500 = vmatpush1.bf16.xpose.msra.mxu0 %v463
      %501 = vmatprep.subr.bf16.mxu0 0
      %502 = vmatpush1.bf16.xpose.msra.mxu0 %v464
      %503 = vmatprep.subr.bf16.mxu0 0
      %504 = vmatpush1.bf16.xpose.msra.mxu0 %v465
      %505 = vmatprep.subr.bf16.mxu0 0
      %506 = vmatpush1.bf16.xpose.msra.mxu0 %v466
      %507 = vmatprep.subr.bf16.mxu0 0
      %508 = vmatpush1.bf16.xpose.msra.mxu0 %v467
      %509 = vmatprep.subr.bf16.mxu0 0
      %510 = vmatpush1.bf16.xpose.msra.mxu0 %v468
      %511 = vmatprep.subr.bf16.mxu0 0
      %512 = vmatpush1.bf16.xpose.msra.mxu0 %v469
      %513 = vmatprep.subr.bf16.mxu0 0
      %514 = vmatpush1.bf16.xpose.msra.mxu0 %v470
      %515 = vmatprep.subr.bf16.mxu0 0
      %516 = vmatpush1.bf16.xpose.msra.mxu0 %v471
      %517 = vmatprep.subr.bf16.mxu0 0
      %518 = vmatpush1.bf16.xpose.msra.mxu0 %v472
      %519 = vmatprep.subr.bf16.mxu0 0
      %520 = vmatpush1.bf16.xpose.msra.mxu0 %v473
      %521 = vmatprep.subr.bf16.mxu0 0
      %522 = vmatpush1.bf16.xpose.msra.mxu0 %v474
      %523 = vmatprep.mubr.bf16.mxu0 0
      %524 = vmatmul.mubr.bf16.gmra.mrb[0].mxu0 %v363
      %v525 = vpop.f32.mrb[0].mxu0
      %v526 = vadd.f32 0.0, %v525
      %v527 = vpop.f32.mrb[0].mxu0
      %v528 = vadd.f32 0.0, %v527
      %v529 = vpop.f32.mrb[0].mxu0
      %v530 = vadd.f32 0.0, %v529
      %v531 = vpop.f32.mrb[0].mxu0
      %v532 = vadd.f32 0.0, %v531
      %533 = vmatprep.mubr.bf16.mxu0 0
      %534 = vmatmul.mubr.bf16.gmra.mrb[0].mxu0 %v364
      %v535 = vpop.f32.mrb[0].mxu0
      %v536 = vadd.f32 0.0, %v535
      %v537 = vpop.f32.mrb[0].mxu0
      %v538 = vadd.f32 0.0, %v537
      %v539 = vpop.f32.mrb[0].mxu0
      %v540 = vadd.f32 0.0, %v539
      %v541 = vpop.f32.mrb[0].mxu0
      %v542 = vadd.f32 0.0, %v541
      %543 = vmatprep.mubr.bf16.mxu0 0
      %544 = vmatmul.mubr.bf16.gmra.mrb[0].mxu0 %v365
      %v545 = vpop.f32.mrb[0].mxu0
      %v546 = vadd.f32 0.0, %v545
      %v547 = vpop.f32.mrb[0].mxu0
      %v548 = vadd.f32 0.0, %v547
      %v549 = vpop.f32.mrb[0].mxu0
      %v550 = vadd.f32 0.0, %v549
      %v551 = vpop.f32.mrb[0].mxu0
      %v552 = vadd.f32 0.0, %v551
      %553 = vmatprep.mubr.bf16.mxu0 0
      %554 = vmatmul.mubr.bf16.gmra.mrb[0].mxu0 %v366
      %v555 = vpop.f32.mrb[0].mxu0
      %v556 = vadd.f32 0.0, %v555
      %v557 = vpop.f32.mrb[0].mxu0
      %v558 = vadd.f32 0.0, %v557
      %v559 = vpop.f32.mrb[0].mxu0
      %v560 = vadd.f32 0.0, %v559
      %v561 = vpop.f32.mrb[0].mxu0
      %v562 = vadd.f32 0.0, %v561
      %563 = vmatprep.mubr.bf16.mxu0 0
      %564 = vmatmul.mubr.bf16.gmra.mrb[0].mxu0 %v367
      %v565 = vpop.f32.mrb[0].mxu0
      %v566 = vadd.f32 0.0, %v565
      %v567 = vpop.f32.mrb[0].mxu0
      %v568 = vadd.f32 0.0, %v567
      %v569 = vpop.f32.mrb[0].mxu0
      %v570 = vadd.f32 0.0, %v569
      %v571 = vpop.f32.mrb[0].mxu0
      %v572 = vadd.f32 0.0, %v571
      %573 = vmatprep.mubr.bf16.mxu0 0
      %574 = vmatmul.mubr.bf16.gmra.mrb[0].mxu0 %v368
      %v575 = vpop.f32.mrb[0].mxu0
      %v576 = vadd.f32 0.0, %v575
      %v577 = vpop.f32.mrb[0].mxu0
      %v578 = vadd.f32 0.0, %v577
      %v579 = vpop.f32.mrb[0].mxu0
      %v580 = vadd.f32 0.0, %v579
      %v581 = vpop.f32.mrb[0].mxu0
      %v582 = vadd.f32 0.0, %v581
      %583 = vmatprep.mubr.bf16.mxu0 0
      %584 = vmatmul.mubr.bf16.gmra.mrb[0].mxu0 %v369
      %v585 = vpop.f32.mrb[0].mxu0
      %v586 = vadd.f32 0.0, %v585
      %v587 = vpop.f32.mrb[0].mxu0
      %v588 = vadd.f32 0.0, %v587
      %v589 = vpop.f32.mrb[0].mxu0
      %v590 = vadd.f32 0.0, %v589
      %v591 = vpop.f32.mrb[0].mxu0
      %v592 = vadd.f32 0.0, %v591
      %593 = vmatprep.mubr.bf16.mxu0 0
      %594 = vmatmul.mubr.bf16.gmra.mrb[0].mxu0 %v370
      %v595 = vpop.f32.mrb[0].mxu0
      %v596 = vadd.f32 0.0, %v595
      %v597 = vpop.f32.mrb[0].mxu0
      %v598 = vadd.f32 0.0, %v597
      %v599 = vpop.f32.mrb[0].mxu0
      %v600 = vadd.f32 0.0, %v599
      %v601 = vpop.f32.mrb[0].mxu0
      %v602 = vadd.f32 0.0, %v601
      %603 = vmatprep.mubr.bf16.mxu0 0
      %604 = vmatmul.mubr.bf16.gmra.mrb[0].mxu0 %v371
      %v605 = vpop.f32.mrb[0].mxu0
      %v606 = vadd.f32 0.0, %v605
      %v607 = vpop.f32.mrb[0].mxu0
      %v608 = vadd.f32 0.0, %v607
      %v609 = vpop.f32.mrb[0].mxu0
      %v610 = vadd.f32 0.0, %v609
      %v611 = vpop.f32.mrb[0].mxu0
      %v612 = vadd.f32 0.0, %v611
      %613 = vmatprep.mubr.bf16.mxu0 0
      %614 = vmatmul.mubr.bf16.gmra.mrb[0].mxu0 %v372
      %v615 = vpop.f32.mrb[0].mxu0
      %v616 = vadd.f32 0.0, %v615
      %v617 = vpop.f32.mrb[0].mxu0
      %v618 = vadd.f32 0.0, %v617
      %v619 = vpop.f32.mrb[0].mxu0
      %v620 = vadd.f32 0.0, %v619
      %v621 = vpop.f32.mrb[0].mxu0
      %v622 = vadd.f32 0.0, %v621
      %623 = vmatprep.mubr.bf16.mxu0 0
      %624 = vmatmul.mubr.bf16.gmra.mrb[0].mxu0 %v373
      %v625 = vpop.f32.mrb[0].mxu0
      %v626 = vadd.f32 0.0, %v625
      %v627 = vpop.f32.mrb[0].mxu0
      %v628 = vadd.f32 0.0, %v627
      %v629 = vpop.f32.mrb[0].mxu0
      %v630 = vadd.f32 0.0, %v629
      %v631 = vpop.f32.mrb[0].mxu0
      %v632 = vadd.f32 0.0, %v631
      %633 = vmatprep.mubr.bf16.mxu0 0
      %634 = vmatmul.mubr.bf16.gmra.mrb[0].mxu0 %v374
      %v635 = vpop.f32.mrb[0].mxu0
      %v636 = vadd.f32 0.0, %v635
      %v637 = vpop.f32.mrb[0].mxu0
      %v638 = vadd.f32 0.0, %v637
      %v639 = vpop.f32.mrb[0].mxu0
      %v640 = vadd.f32 0.0, %v639
      %v641 = vpop.f32.mrb[0].mxu0
      %v642 = vadd.f32 0.0, %v641
      %643 = vmatprep.mubr.bf16.mxu0 0
      %644 = vmatmul.mubr.bf16.gmra.mrb[0].mxu0 %v375
      %v645 = vpop.f32.mrb[0].mxu0
      %v646 = vadd.f32 0.0, %v645
      %v647 = vpop.f32.mrb[0].mxu0
      %v648 = vadd.f32 0.0, %v647
      %v649 = vpop.f32.mrb[0].mxu0
      %v650 = vadd.f32 0.0, %v649
      %v651 = vpop.f32.mrb[0].mxu0
      %v652 = vadd.f32 0.0, %v651
      %653 = vmatprep.mubr.bf16.mxu0 0
      %654 = vmatmul.mubr.bf16.gmra.mrb[0].mxu0 %v376
      %v655 = vpop.f32.mrb[0].mxu0
      %v656 = vadd.f32 0.0, %v655
      %v657 = vpop.f32.mrb[0].mxu0
      %v658 = vadd.f32 0.0, %v657
      %v659 = vpop.f32.mrb[0].mxu0
      %v660 = vadd.f32 0.0, %v659
      %v661 = vpop.f32.mrb[0].mxu0
      %v662 = vadd.f32 0.0, %v661
      %663 = vmatprep.mubr.bf16.mxu0 0
      %664 = vmatmul.mubr.bf16.gmra.mrb[0].mxu0 %v377
      %v665 = vpop.f32.mrb[0].mxu0
      %v666 = vadd.f32 0.0, %v665
      %v667 = vpop.f32.mrb[0].mxu0
      %v668 = vadd.f32 0.0, %v667
      %v669 = vpop.f32.mrb[0].mxu0
      %v670 = vadd.f32 0.0, %v669
      %v671 = vpop.f32.mrb[0].mxu0
      %v672 = vadd.f32 0.0, %v671
      %673 = vmatprep.mubr.bf16.mxu0 0
      %674 = vmatmul.mubr.bf16.gmra.mrb[0].mxu0 %v378
      %v675 = vpop.f32.mrb[0].mxu0
      %v676 = vadd.f32 0.0, %v675
      %v677 = vpop.f32.mrb[0].mxu0
      %v678 = vadd.f32 0.0, %v677
      %v679 = vpop.f32.mrb[0].mxu0
      %v680 = vadd.f32 0.0, %v679
      %v681 = vpop.f32.mrb[0].mxu0
      %v682 = vadd.f32 0.0, %v681
      %683 = vdwg.mxu0
      %v684 = vld [vmem:[#allocation2] sm:$0x3]
      %v685 = vmax.f32 %v526, %v536
      %v686 = vmax.f32 %v530, %v540
      %v687 = vmax.f32 %v685, %v546
      %v688 = vmax.f32 %v686, %v550
      %v689 = vmax.f32 %v687, %v556
      %v690 = vmax.f32 %v688, %v560
      %v691 = vmax.f32 %v689, %v566
      %v692 = vmax.f32 %v690, %v570
      %v693 = vmax.f32 %v691, %v576
      %v694 = vmax.f32 %v692, %v580
      %v695 = vmax.f32 %v693, %v586
      %v696 = vmax.f32 %v694, %v590
      %v697 = vmax.f32 %v695, %v596
      %v698 = vmax.f32 %v696, %v600
      %v699 = vmax.f32 %v697, %v606
      %v700 = vmax.f32 %v698, %v610
      %v701 = vmax.f32 %v699, %v616
      %v702 = vmax.f32 %v700, %v620
      %v703 = vmax.f32 %v701, %v626
      %v704 = vmax.f32 %v702, %v630
      %v705 = vmax.f32 %v703, %v636
      %v706 = vmax.f32 %v704, %v640
      %v707 = vmax.f32 %v705, %v646
      %v708 = vmax.f32 %v706, %v650
      %v709 = vmax.f32 %v707, %v656
      %v710 = vmax.f32 %v708, %v660
      %v711 = vmax.f32 %v709, %v666
      %v712 = vmax.f32 %v710, %v670
      %v713 = vmax.f32 %v711, %v676
      %v714 = vmax.f32 %v712, %v680
      %v715 = vmax.f32 %v713, %v714
      %v716 = vrot.slane %v715, 4
      %v717 = vmax.f32 %v715, %v716
      %v718 = vrot.slane %v717, 2
      %v719 = vmax.f32 %v717, %v718
      %v720 = vrot.slane %v719, 1
      %v721 = vmax.f32 %v719, %v720
      %v722 = vmax.f32 %v528, %v538
      %v723 = vmax.f32 %v532, %v542
      %v724 = vmax.f32 %v722, %v548
      %v725 = vmax.f32 %v723, %v552
      %v726 = vmax.f32 %v724, %v558
      %v727 = vmax.f32 %v725, %v562
      %v728 = vmax.f32 %v726, %v568
      %v729 = vmax.f32 %v727, %v572
      %v730 = vmax.f32 %v728, %v578
      %v731 = vmax.f32 %v729, %v582
      %v732 = vmax.f32 %v730, %v588
      %v733 = vmax.f32 %v731, %v592
      %v734 = vmax.f32 %v732, %v598
      %v735 = vmax.f32 %v733, %v602
      %v736 = vmax.f32 %v734, %v608
      %v737 = vmax.f32 %v735, %v612
      %v738 = vmax.f32 %v736, %v618
      %v739 = vmax.f32 %v737, %v622
      %v740 = vmax.f32 %v738, %v628
      %v741 = vmax.f32 %v739, %v632
      %v742 = vmax.f32 %v740, %v638
      %v743 = vmax.f32 %v741, %v642
      %v744 = vmax.f32 %v742, %v648
      %v745 = vmax.f32 %v743, %v652
      %v746 = vmax.f32 %v744, %v658
      %v747 = vmax.f32 %v745, %v662
      %v748 = vmax.f32 %v746, %v668
      %v749 = vmax.f32 %v747, %v672
      %v750 = vmax.f32 %v748, %v678
      %v751 = vmax.f32 %v749, %v682
      %v752 = vmax.f32 %v750, %v751
      %v753 = vrot.slane %v752, 4
      %v754 = vmax.f32 %v752, %v753
      %v755 = vrot.slane %v754, 2
      %v756 = vmax.f32 %v754, %v755
      %v757 = vrot.slane %v756, 1
      %v758 = vmax.f32 %v756, %v757
      %v761 = vcombine.low %v721, %v758
      %v763 = vunpack.c.l.s4 1966171168
      %v764 = vunpack.c.0.s8 %v763
      %v765 = vlaneseq
      %v766 = vshrl.u32 %v765, 7
      %v767 = vsub.s32 %v764, %v766
      %v768 = vrot.slane %v761, %v767
      %v770 = vunpack.c.l.s4 1966171168
      %v771 = vunpack.c.0.s8 %v770
      %v772 = vlaneseq
      %v773 = vshrl.u32 %v772, 7
      %v774 = vsub.s32 %v771, %v773
      %v775 = vrot.slane %v768, %v774
      %v777 = vmax.f32 %v684, %v775
      %v778 = vld [vmem:[#allocation3] sm:$0x3]
      %v779 = vsub.f32 %v684, %v777
      %v780 = vmul.f32 %v779, 1.442695
      %v781 = vpow.pop %v780
      %v782 = vmul.f32 %v778, %v781
      %v784 = vlaneseq
      %v785 = vshrl.u32 %v784, 7
      %v786 = vsub.s32 0, %v785
      %v787 = vrot.slane %v777, %v786
      %v788 = vlaneseq
      %v789 = vshrl.u32 %v788, 7
      %v790 = vsub.s32 1, %v789
      %v791 = vrot.slane %v777, %v790
      %v794 = vsub.f32 %v526, %v787
      %v795 = vsub.f32 %v528, %v791
      %v796 = vsub.f32 %v530, %v787
      %v797 = vsub.f32 %v532, %v791
      %v798 = vsub.f32 %v536, %v787
      %v799 = vsub.f32 %v538, %v791
      %v800 = vsub.f32 %v540, %v787
      %v801 = vsub.f32 %v542, %v791
      %v802 = vsub.f32 %v546, %v787
      %v803 = vsub.f32 %v548, %v791
      %v804 = vsub.f32 %v550, %v787
      %v805 = vsub.f32 %v552, %v791
      %v806 = vsub.f32 %v556, %v787
      %v807 = vsub.f32 %v558, %v791
      %v808 = vsub.f32 %v560, %v787
      %v809 = vsub.f32 %v562, %v791
      %v810 = vsub.f32 %v566, %v787
      %v811 = vsub.f32 %v568, %v791
      %v812 = vsub.f32 %v570, %v787
      %v813 = vsub.f32 %v572, %v791
      %v814 = vsub.f32 %v576, %v787
      %v815 = vsub.f32 %v578, %v791
      %v816 = vsub.f32 %v580, %v787
      %v817 = vsub.f32 %v582, %v791
      %v818 = vsub.f32 %v586, %v787
      %v819 = vsub.f32 %v588, %v791
      %v820 = vsub.f32 %v590, %v787
      %v821 = vsub.f32 %v592, %v791
      %v822 = vsub.f32 %v596, %v787
      %v823 = vsub.f32 %v598, %v791
      %v824 = vsub.f32 %v600, %v787
      %v825 = vsub.f32 %v602, %v791
      %v826 = vsub.f32 %v606, %v787
      %v827 = vsub.f32 %v608, %v791
      %v828 = vsub.f32 %v610, %v787
      %v829 = vsub.f32 %v612, %v791
      %v830 = vsub.f32 %v616, %v787
      %v831 = vsub.f32 %v618, %v791
      %v832 = vsub.f32 %v620, %v787
      %v833 = vsub.f32 %v622, %v791
      %v834 = vsub.f32 %v626, %v787
      %v835 = vsub.f32 %v628, %v791
      %v836 = vsub.f32 %v630, %v787
      %v837 = vsub.f32 %v632, %v791
      %v838 = vsub.f32 %v636, %v787
      %v839 = vsub.f32 %v638, %v791
      %v840 = vsub.f32 %v640, %v787
      %v841 = vsub.f32 %v642, %v791
      %v842 = vsub.f32 %v646, %v787
      %v843 = vsub.f32 %v648, %v791
      %v844 = vsub.f32 %v650, %v787
      %v845 = vsub.f32 %v652, %v791
      %v846 = vsub.f32 %v656, %v787
      %v847 = vsub.f32 %v658, %v791
      %v848 = vsub.f32 %v660, %v787
      %v849 = vsub.f32 %v662, %v791
      %v850 = vsub.f32 %v666, %v787
      %v851 = vsub.f32 %v668, %v791
      %v852 = vsub.f32 %v670, %v787
      %v853 = vsub.f32 %v672, %v791
      %v854 = vsub.f32 %v676, %v787
      %v855 = vsub.f32 %v678, %v791
      %v856 = vsub.f32 %v680, %v787
      %v857 = vsub.f32 %v682, %v791
      %v858 = vmul.f32 %v794, 1.442695
      %v859 = vpow.pop %v858
      %v860 = vmul.f32 %v795, 1.442695
      %v861 = vpow.pop %v860
      %v862 = vmul.f32 %v796, 1.442695
      %v863 = vpow.pop %v862
      %v864 = vmul.f32 %v797, 1.442695
      %v865 = vpow.pop %v864
      %v866 = vmul.f32 %v798, 1.442695
      %v867 = vpow.pop %v866
      %v868 = vmul.f32 %v799, 1.442695
      %v869 = vpow.pop %v868
      %v870 = vmul.f32 %v800, 1.442695
      %v871 = vpow.pop %v870
      %v872 = vmul.f32 %v801, 1.442695
      %v873 = vpow.pop %v872
      %v874 = vmul.f32 %v802, 1.442695
      %v875 = vpow.pop %v874
      %v876 = vmul.f32 %v803, 1.442695
      %v877 = vpow.pop %v876
      %v878 = vmul.f32 %v804, 1.442695
      %v879 = vpow.pop %v878
      %v880 = vmul.f32 %v805, 1.442695
      %v881 = vpow.pop %v880
      %v882 = vmul.f32 %v806, 1.442695
      %v883 = vpow.pop %v882
      %v884 = vmul.f32 %v807, 1.442695
      %v885 = vpow.pop %v884
      %v886 = vmul.f32 %v808, 1.442695
      %v887 = vpow.pop %v886
      %v888 = vmul.f32 %v809, 1.442695
      %v889 = vpow.pop %v888
      %v890 = vmul.f32 %v810, 1.442695
      %v891 = vpow.pop %v890
      %v892 = vmul.f32 %v811, 1.442695
      %v893 = vpow.pop %v892
      %v894 = vmul.f32 %v812, 1.442695
      %v895 = vpow.pop %v894
      %v896 = vmul.f32 %v813, 1.442695
      %v897 = vpow.pop %v896
      %v898 = vmul.f32 %v814, 1.442695
      %v899 = vpow.pop %v898
      %v900 = vmul.f32 %v815, 1.442695
      %v901 = vpow.pop %v900
      %v902 = vmul.f32 %v816, 1.442695
      %v903 = vpow.pop %v902
      %v904 = vmul.f32 %v817, 1.442695
      %v905 = vpow.pop %v904
      %v906 = vmul.f32 %v818, 1.442695
      %v907 = vpow.pop %v906
      %v908 = vmul.f32 %v819, 1.442695
      %v909 = vpow.pop %v908
      %v910 = vmul.f32 %v820, 1.442695
      %v911 = vpow.pop %v910
      %v912 = vmul.f32 %v821, 1.442695
      %v913 = vpow.pop %v912
      %v914 = vmul.f32 %v822, 1.442695
      %v915 = vpow.pop %v914
      %v916 = vmul.f32 %v823, 1.442695
      %v917 = vpow.pop %v916
      %v918 = vmul.f32 %v824, 1.442695
      %v919 = vpow.pop %v918
      %v920 = vmul.f32 %v825, 1.442695
      %v921 = vpow.pop %v920
      %v922 = vmul.f32 %v826, 1.442695
      %v923 = vpow.pop %v922
      %v924 = vmul.f32 %v827, 1.442695
      %v925 = vpow.pop %v924
      %v926 = vmul.f32 %v828, 1.442695
      %v927 = vpow.pop %v926
      %v928 = vmul.f32 %v829, 1.442695
      %v929 = vpow.pop %v928
      %v930 = vmul.f32 %v830, 1.442695
      %v931 = vpow.pop %v930
      %v932 = vmul.f32 %v831, 1.442695
      %v933 = vpow.pop %v932
      %v934 = vmul.f32 %v832, 1.442695
      %v935 = vpow.pop %v934
      %v936 = vmul.f32 %v833, 1.442695
      %v937 = vpow.pop %v936
      %v938 = vmul.f32 %v834, 1.442695
      %v939 = vpow.pop %v938
      %v940 = vmul.f32 %v835, 1.442695
      %v941 = vpow.pop %v940
      %v942 = vmul.f32 %v836, 1.442695
      %v943 = vpow.pop %v942
      %v944 = vmul.f32 %v837, 1.442695
      %v945 = vpow.pop %v944
      %v946 = vmul.f32 %v838, 1.442695
      %v947 = vpow.pop %v946
      %v948 = vmul.f32 %v839, 1.442695
      %v949 = vpow.pop %v948
      %v950 = vmul.f32 %v840, 1.442695
      %v951 = vpow.pop %v950
      %v952 = vmul.f32 %v841, 1.442695
      %v953 = vpow.pop %v952
      %v954 = vmul.f32 %v842, 1.442695
      %v955 = vpow.pop %v954
      %v956 = vmul.f32 %v843, 1.442695
      %v957 = vpow.pop %v956
      %v958 = vmul.f32 %v844, 1.442695
      %v959 = vpow.pop %v958
      %v960 = vmul.f32 %v845, 1.442695
      %v961 = vpow.pop %v960
      %v962 = vmul.f32 %v846, 1.442695
      %v963 = vpow.pop %v962
      %v964 = vmul.f32 %v847, 1.442695
      %v965 = vpow.pop %v964
      %v966 = vmul.f32 %v848, 1.442695
      %v967 = vpow.pop %v966
      %v968 = vmul.f32 %v849, 1.442695
      %v969 = vpow.pop %v968
      %v970 = vmul.f32 %v850, 1.442695
      %v971 = vpow.pop %v970
      %v972 = vmul.f32 %v851, 1.442695
      %v973 = vpow.pop %v972
      %v974 = vmul.f32 %v852, 1.442695
      %v975 = vpow.pop %v974
      %v976 = vmul.f32 %v853, 1.442695
      %v977 = vpow.pop %v976
      %v978 = vmul.f32 %v854, 1.442695
      %v979 = vpow.pop %v978
      %v980 = vmul.f32 %v855, 1.442695
      %v981 = vpow.pop %v980
      %v982 = vmul.f32 %v856, 1.442695
      %v983 = vpow.pop %v982
      %v984 = vmul.f32 %v857, 1.442695
      %v985 = vpow.pop %v984
      %v986 = vadd.f32 %v859, %v863
      %v987 = vadd.f32 %v986, %v867
      %v988 = vadd.f32 %v987, %v871
      %v989 = vadd.f32 %v988, %v875
      %v990 = vadd.f32 %v989, %v879
      %v991 = vadd.f32 %v990, %v883
      %v992 = vadd.f32 %v991, %v887
      %v993 = vadd.f32 %v992, %v891
      %v994 = vadd.f32 %v993, %v895
      %v995 = vadd.f32 %v994, %v899
      %v996 = vadd.f32 %v995, %v903
      %v997 = vadd.f32 %v996, %v907
      %v998 = vadd.f32 %v997, %v911
      %v999 = vadd.f32 %v998, %v915
      %v1000 = vadd.f32 %v999, %v919
      %v1001 = vadd.f32 %v1000, %v923
      %v1002 = vadd.f32 %v1001, %v927
      %v1003 = vadd.f32 %v1002, %v931
      %v1004 = vadd.f32 %v1003, %v935
      %v1005 = vadd.f32 %v1004, %v939
      %v1006 = vadd.f32 %v1005, %v943
      %v1007 = vadd.f32 %v1006, %v947
      %v1008 = vadd.f32 %v1007, %v951
      %v1009 = vadd.f32 %v1008, %v955
      %v1010 = vadd.f32 %v1009, %v959
      %v1011 = vadd.f32 %v1010, %v963
      %v1012 = vadd.f32 %v1011, %v967
      %v1013 = vadd.f32 %v1012, %v971
      %v1014 = vadd.f32 %v1013, %v975
      %v1015 = vadd.f32 %v1014, %v979
      %v1016 = vadd.f32 %v1015, %v983
      %v1017 = vrot.slane %v1016, 4
      %v1018 = vadd.f32 %v1016, %v1017
      %v1019 = vrot.slane %v1018, 2
      %v1020 = vadd.f32 %v1018, %v1019
      %v1021 = vrot.slane %v1020, 1
      %v1022 = vadd.f32 %v1020, %v1021
      %v1023 = vadd.f32 %v861, %v865
      %v1024 = vadd.f32 %v1023, %v869
      %v1025 = vadd.f32 %v1024, %v873
      %v1026 = vadd.f32 %v1025, %v877
      %v1027 = vadd.f32 %v1026, %v881
      %v1028 = vadd.f32 %v1027, %v885
      %v1029 = vadd.f32 %v1028, %v889
      %v1030 = vadd.f32 %v1029, %v893
      %v1031 = vadd.f32 %v1030, %v897
      %v1032 = vadd.f32 %v1031, %v901
      %v1033 = vadd.f32 %v1032, %v905
      %v1034 = vadd.f32 %v1033, %v909
      %v1035 = vadd.f32 %v1034, %v913
      %v1036 = vadd.f32 %v1035, %v917
      %v1037 = vadd.f32 %v1036, %v921
      %v1038 = vadd.f32 %v1037, %v925
      %v1039 = vadd.f32 %v1038, %v929
      %v1040 = vadd.f32 %v1039, %v933
      %v1041 = vadd.f32 %v1040, %v937
      %v1042 = vadd.f32 %v1041, %v941
      %v1043 = vadd.f32 %v1042, %v945
      %v1044 = vadd.f32 %v1043, %v949
      %v1045 = vadd.f32 %v1044, %v953
      %v1046 = vadd.f32 %v1045, %v957
      %v1047 = vadd.f32 %v1046, %v961
      %v1048 = vadd.f32 %v1047, %v965
      %v1049 = vadd.f32 %v1048, %v969
      %v1050 = vadd.f32 %v1049, %v973
      %v1051 = vadd.f32 %v1050, %v977
      %v1052 = vadd.f32 %v1051, %v981
      %v1053 = vadd.f32 %v1052, %v985
      %v1054 = vrot.slane %v1053, 4
      %v1055 = vadd.f32 %v1053, %v1054
      %v1056 = vrot.slane %v1055, 2
      %v1057 = vadd.f32 %v1055, %v1056
      %v1058 = vrot.slane %v1057, 1
      %v1059 = vadd.f32 %v1057, %v1058
      %v1062 = vcombine.low %v1022, %v1059
      %v1064 = vunpack.c.l.s4 1966171168
      %v1065 = vunpack.c.0.s8 %v1064
      %v1066 = vlaneseq
      %v1067 = vshrl.u32 %v1066, 7
      %v1068 = vsub.s32 %v1065, %v1067
      %v1069 = vrot.slane %v1062, %v1068
      %v1071 = vunpack.c.l.s4 1966171168
      %v1072 = vunpack.c.0.s8 %v1071
      %v1073 = vlaneseq
      %v1074 = vshrl.u32 %v1073, 7
      %v1075 = vsub.s32 %v1072, %v1074
      %v1076 = vrot.slane %v1069, %v1075
      %v1078 = vadd.f32 %v782, %v1076
      %v1079 = vlaneseq
      %vm1080 = vcmp.ge.s32.totalorder %v1079, 0
      %vm1081 = vcmp.lt.s32.totalorder %v1079, 256
      %vm1082 = vmand %vm1080, %vm1081
      %1083 = vst.msk [vmem:[#allocation3] sm:$0x3] %vm1082, %v1078
      %1084 = vst.msk [vmem:[#allocation2] sm:$0x3] %vm1082, %v777
      // Predicated region
      $region33: #{self_attention_spa.5} parent=27 // pred_check
        %p1085 = pneg %p225
      $region34: #{self_attention_spa.5} parent=27 // pred_check_branch
        %1087 = sbr.rel (%p1085) target = $region36
      $region35: #{self_attention_spa.5} parent=27 // pred_region
        %v1088 = vld [vmem:[#allocation2] sm:$0x3]
        %v1089 = vld [vmem:[#allocation3] sm:$0x3]
        %v1090 = vlog2.pop %v1089
        %v1091 = vmul.f32 %v1090, 0.6931472
        %v1092 = vadd.f32 %v1088, %v1091
        %1093 = vst.msk [vmem:[%s222] sm:$0x3] %vm1082, %v1092
      $region36: #{self_attention_spa.5} parent=27 // pred_fallthru
        _
      %s1094 = smul.u32 2, %s19
      %p1095 = scmp.lt.s32.totalorder %s18, 1
      %s1096 = scalar_select %p1095, %s18, 1
      %p1097 = scmp.lt.s32.totalorder %s1094, 1
      %s1098 = scalar_select %p1097, %s1094, 1
      %s1099 = smul.addr %s1096, 2
      %s1100 = sadd.s32 %s1098, %s1099
      %s1101 = scalar_lea.vmem %s2, %s1100
      // Predicated region
      $region37: #{self_attention_spa.5} parent=27 // pred_check
        %p1102 = pneg %p108
      $region38: #{self_attention_spa.5} parent=27 // pred_check_branch
        %1104 = sbr.rel (%p1102) target = $region40
      $region39: #{self_attention_spa.5} parent=27 // pred_region
        %s1105 = smul.u32 2, %s19
      $region40: #{self_attention_spa.5} parent=27 // pred_fallthru
        _
    $region28: #{self_attention_spa.5} parent=5 // pred_fallthru
      _
    %p1106 = scmp.le.s32.totalorder 2, %s8
    // Predicated region
    $region41: #{self_attention_spa.5} parent=5 // pred_check
      %p1107 = pneg %p1106
    $region42: #{self_attention_spa.5} parent=5 // pred_check_branch
      %1109 = sbr.rel (%p1107) target = $region44
    $region43: #{self_attention_spa.5} parent=5 // pred_region
      %s1110 = ssub.s32 %s8, 2
      // Predicated region
      $region45: #{self_attention_spa.5} parent=43 // pred_check
        %p1111 = pneg %p114
      $region46: #{self_attention_spa.5} parent=43 // pred_check_branch
        %1113 = sbr.rel (%p1111) target = $region48
      $region47: #{self_attention_spa.5} parent=43 // pred_region
        %s1114 = smul.u32 2, %s22
        %p1115 = scmp.lt.s32.totalorder %s21, 1
        %s1116 = scalar_select %p1115, %s21, 1
        %p1117 = scmp.lt.s32.totalorder %s1114, 1
        %s1118 = scalar_select %p1117, %s1114, 1
        %s1119 = smul.addr %s1116, 2
        %s1120 = sadd.s32 %s1118, %s1119
        %s1121 = scalar_lea.vmem %s2, %s1120
      $region48: #{self_attention_spa.5} parent=43 // pred_fallthru
        _
    $region44: #{self_attention_spa.5} parent=5 // pred_fallthru
      _
  $region6: #{self_attention_spa.5} parent=0 // loop_footer
    %s12 = sadd.s32 1, %s8
  $region7: #{self_attention_spa.5} parent=0 // loop_footer_branch
    %7 = sbr.rel target = $region3
  $region8: #{self_attention_spa.5} parent=0 // loop_exit
    _

// kernel: self_attention_spa.6
$region0: #{self_attention_spa.6}
  #allocation0 [shape = 'u32[]', space=smem, size = 0x4, offset = 0x4, fixed_abs, tag = 'smem constant byte address 0x4 - core index']
  #allocation1 [shape = 'u32[144,128]{1,0:T(1,128)}', space=vmem, size = 0x12000, scoped, tag = 'internal scratch']
  #allocation2 [shape = 'f32[256,128]{1,0:T(8,128)}', space=vmem, size = 0x20000, scoped, tag = 'scratch operand']
  %s0 = inlined_call_operand.vmem [shape: bf16[2,256,128], index: 0, kind: input, shape index: {}, may-alias: {0,1}]
  %s1 = inlined_call_operand.vmem [shape: bf16[2,256,128], index: 1, kind: input, shape index: {}, may-alias: {0,1}]
  %s2 = inlined_call_operand.vmem [shape: f32[2,1,256], index: 2, kind: input, shape index: {}]
  %s3 = inlined_call_operand.vmem [shape: f32[2,256,128], index: 3, kind: output, shape index: {}]
  %s4 = sld [smem:[#allocation0]]
  $region53: #{self_attention_spa.6} parent=0
    _
  %s6 = ssub.s32 1, %s4
  %s7 = scalar_select 0, %s6, %s4
  loop: start=0, step=1, limit=4
  $region2: #{self_attention_spa.6} parent=0 // loop_pre_header
    _
  $region3: #{self_attention_spa.6} parent=0 // loop_header
    %s9 = sphi 0, %s13
    %p10 = scmp.ge.s32.totalorder %s9, 4
    %s16 = sphi 0, %s35
    %s17 = sphi 0, %s31
    %s18 = sphi 0, %s27
    %s19 = sphi 0, %s16
    %s20 = sphi 0, %s17
    %s21 = sphi 0, %s18
    %s22 = sphi 0, %s19
    %s23 = sphi 0, %s20
    %s24 = sphi 0, %s21
    %s40 = sphi 0, %s42
    %s43 = sphi 0, %s40
    %s44 = sphi 0, %s43
    %s60 = sphi 0, %s44
    %s68 = sphi 0, %s70
    %s71 = sphi 0, %s68
    %s72 = sphi 0, %s71
    %s88 = sphi 0, %s72
    %s96 = sphi 0, %s98
    %s99 = sphi 0, %s96
    %s100 = sphi 0, %s99
    %s116 = sphi 0, %s100
    %s124 = sphi 0, %s126
    %s127 = sphi 0, %s124
    %s128 = sphi 0, %s127
    %s144 = sphi 0, %s128
  $region4: #{self_attention_spa.6} parent=0 // loop_header_branch
    %12 = sbr.rel (%p10) target = $region8
  $region5: #{self_attention_spa.6} parent=0 // loop_body
    %s14 = ssub.s32 %s9, 1
    %s15 = ssub.s32 %s9, 2
    %s25 = sadd.s32 1, %s18
    %p26 = scmp.ge.s32.totalorder %s25, 1
    %s27 = scalar_select %p26, 0, %s25
    %s28 = sadd.s32 1, %s17
    %s29 = scalar_select %p26, %s28, %s17
    %p30 = scmp.ge.s32.totalorder %s29, 1
    %s31 = scalar_select %p30, 0, %s29
    %s32 = sadd.s32 1, %s16
    %s33 = scalar_select %p30, %s32, %s16
    %p34 = scmp.ge.s32.totalorder %s33, 2
    %s35 = scalar_select %p34, 0, %s33
    %s36 = ssub.s32 %s16, %s35
    %s37 = ssub.s32 %s17, %s31
    %s38 = sor.u32 %s36, %s37
    %p39 = scmp.eq.s32.totalorder %s38, 0
    %s41 = sadd.s32 %s40, 1
    %s42 = scalar_select %p39, %s40, %s41
    %p45 = pneg %p39
    %p46 = scmp.eq.s32.totalorder %s9, 1
    %p47 = por %p45, %p46
    %p48 = scmp.ne.s32.totalorder %s40, %s43
    %p49 = scmp.eq.s32.totalorder %s9, 0
    %p50 = por %p48, %p49
    %p51 = scmp.ne.s32.totalorder %s40, %s43
    %p52 = scmp.eq.s32.totalorder %s14, 1
    %p53 = por %p51, %p52
    %p54 = scmp.ne.s32.totalorder %s43, %s44
    %p55 = scmp.eq.s32.totalorder %s14, 0
    %p56 = por %p54, %p55
    %p57 = scmp.ne.s32.totalorder %s43, %s44
    %p58 = scmp.eq.s32.totalorder %s15, 1
    %p59 = por %p57, %p58
    %p61 = scmp.ne.s32.totalorder %s44, %s60
    %p62 = scmp.eq.s32.totalorder %s15, 0
    %p63 = por %p61, %p62
    %s64 = ssub.s32 %s16, %s35
    %s65 = ssub.s32 %s18, %s27
    %s66 = sor.u32 %s64, %s65
    %p67 = scmp.eq.s32.totalorder %s66, 0
    %s69 = sadd.s32 %s68, 1
    %s70 = scalar_select %p67, %s68, %s69
    %p73 = pneg %p67
    %p74 = scmp.eq.s32.totalorder %s9, 1
    %p75 = por %p73, %p74
    %p76 = scmp.ne.s32.totalorder %s68, %s71
    %p77 = scmp.eq.s32.totalorder %s9, 0
    %p78 = por %p76, %p77
    %p79 = scmp.ne.s32.totalorder %s68, %s71
    %p80 = scmp.eq.s32.totalorder %s14, 1
    %p81 = por %p79, %p80
    %p82 = scmp.ne.s32.totalorder %s71, %s72
    %p83 = scmp.eq.s32.totalorder %s14, 0
    %p84 = por %p82, %p83
    %p85 = scmp.ne.s32.totalorder %s71, %s72
    %p86 = scmp.eq.s32.totalorder %s15, 1
    %p87 = por %p85, %p86
    %p89 = scmp.ne.s32.totalorder %s72, %s88
    %p90 = scmp.eq.s32.totalorder %s15, 0
    %p91 = por %p89, %p90
    %s92 = ssub.s32 %s16, %s35
    %s93 = ssub.s32 %s18, %s27
    %s94 = sor.u32 %s92, %s93
    %p95 = scmp.eq.s32.totalorder %s94, 0
    %s97 = sadd.s32 %s96, 1
    %s98 = scalar_select %p95, %s96, %s97
    %p101 = pneg %p95
    %p102 = scmp.eq.s32.totalorder %s9, 1
    %p103 = por %p101, %p102
    %p104 = scmp.ne.s32.totalorder %s96, %s99
    %p105 = scmp.eq.s32.totalorder %s9, 0
    %p106 = por %p104, %p105
    %p107 = scmp.ne.s32.totalorder %s96, %s99
    %p108 = scmp.eq.s32.totalorder %s14, 1
    %p109 = por %p107, %p108
    %p110 = scmp.ne.s32.totalorder %s99, %s100
    %p111 = scmp.eq.s32.totalorder %s14, 0
    %p112 = por %p110, %p111
    %p113 = scmp.ne.s32.totalorder %s99, %s100
    %p114 = scmp.eq.s32.totalorder %s15, 1
    %p115 = por %p113, %p114
    %p117 = scmp.ne.s32.totalorder %s100, %s116
    %p118 = scmp.eq.s32.totalorder %s15, 0
    %p119 = por %p117, %p118
    %s120 = ssub.s32 %s16, %s35
    %s121 = ssub.s32 %s17, %s31
    %s122 = sor.u32 %s120, %s121
    %p123 = scmp.eq.s32.totalorder %s122, 0
    %s125 = sadd.s32 %s124, 1
    %s126 = scalar_select %p123, %s124, %s125
    %p129 = pneg %p123
    %p130 = scmp.eq.s32.totalorder %s9, 1
    %p131 = por %p129, %p130
    %p132 = scmp.ne.s32.totalorder %s124, %s127
    %p133 = scmp.eq.s32.totalorder %s9, 0
    %p134 = por %p132, %p133
    %p135 = scmp.ne.s32.totalorder %s124, %s127
    %p136 = scmp.eq.s32.totalorder %s14, 1
    %p137 = por %p135, %p136
    %p138 = scmp.ne.s32.totalorder %s127, %s128
    %p139 = scmp.eq.s32.totalorder %s14, 0
    %p140 = por %p138, %p139
    %p141 = scmp.ne.s32.totalorder %s127, %s128
    %p142 = scmp.eq.s32.totalorder %s15, 1
    %p143 = por %p141, %p142
    %p145 = scmp.ne.s32.totalorder %s128, %s144
    %p146 = scmp.eq.s32.totalorder %s15, 0
    %p147 = por %p145, %p146
    %p148 = scmp.le.s32.totalorder 1, %s9
    %p149 = scmp.lt.s32.totalorder %s9, 3
    %p150 = pnand %p148, %p149
    %p151 = pneg %p150
    // Predicated region
    $region9: #{self_attention_spa.6} parent=5 // pred_check
      _
    $region10: #{self_attention_spa.6} parent=5 // pred_check_branch
      %153 = sbr.rel (%p150) target = $region12
    $region11: #{self_attention_spa.6} parent=5 // pred_region
      %s154 = ssub.s32 %s9, 1
    $region12: #{self_attention_spa.6} parent=5 // pred_fallthru
      _
    %p155 = scmp.lt.s32.totalorder %s9, 2
    // Predicated region
    $region13: #{self_attention_spa.6} parent=5 // pred_check
      %p156 = pneg %p155
    $region14: #{self_attention_spa.6} parent=5 // pred_check_branch
      %158 = sbr.rel (%p156) target = $region16
    $region15: #{self_attention_spa.6} parent=5 // pred_region
      // Predicated region
      $region17: #{self_attention_spa.6} parent=15 // pred_check
        %p159 = pneg %p50
      $region18: #{self_attention_spa.6} parent=15 // pred_check_branch
        %161 = sbr.rel (%p159) target = $region20
      $region19: #{self_attention_spa.6} parent=15 // pred_region
        %s162 = smul.u32 32, %s17
        %p163 = scmp.lt.s32.totalorder %s16, 1
        %s164 = scalar_select %p163, %s16, 1
        %p165 = scmp.lt.s32.totalorder %s162, 31
        %s166 = scalar_select %p165, %s162, 31
        %s167 = smul.addr %s164, 32
        %s168 = sadd.s32 %s166, %s167
        %s169 = smul.addr %s168, 4
        %s170 = scalar_lea.vmem %s0, %s169
        %s171 = smul.u32 32, %s17
      $region20: #{self_attention_spa.6} parent=15 // pred_fallthru
        _
      // Predicated region
      $region21: #{self_attention_spa.6} parent=15 // pred_check
        %p172 = pneg %p78
      $region22: #{self_attention_spa.6} parent=15 // pred_check_branch
        %174 = sbr.rel (%p172) target = $region24
      $region23: #{self_attention_spa.6} parent=15 // pred_region
        %s175 = smul.u32 32, %s18
        %p176 = scmp.lt.s32.totalorder %s16, 1
        %s177 = scalar_select %p176, %s16, 1
        %p178 = scmp.lt.s32.totalorder %s175, 31
        %s179 = scalar_select %p178, %s175, 31
        %s180 = smul.addr %s177, 32
        %s181 = sadd.s32 %s179, %s180
        %s182 = smul.addr %s181, 4
        %s183 = scalar_lea.vmem %s1, %s182
        %s184 = smul.u32 32, %s18
      $region24: #{self_attention_spa.6} parent=15 // pred_fallthru
        _
      // Predicated region
      $region25: #{self_attention_spa.6} parent=15 // pred_check
        %p185 = pneg %p106
      $region26: #{self_attention_spa.6} parent=15 // pred_check_branch
        %187 = sbr.rel (%p185) target = $region28
      $region27: #{self_attention_spa.6} parent=15 // pred_region
        %s188 = smul.u32 2, %s18
        %p189 = scmp.lt.s32.totalorder %s16, 1
        %s190 = scalar_select %p189, %s16, 1
        %p191 = scmp.lt.s32.totalorder %s188, 1
        %s192 = scalar_select %p191, %s188, 1
        %s193 = smul.addr %s190, 2
        %s194 = sadd.s32 %s192, %s193
        %s195 = scalar_lea.vmem %s2, %s194
        %s196 = smul.u32 2, %s18
      $region28: #{self_attention_spa.6} parent=15 // pred_fallthru
        _
    $region16: #{self_attention_spa.6} parent=5 // pred_fallthru
      _
    %p197 = scmp.le.s32.totalorder 1, %s9
    %p198 = scmp.lt.s32.totalorder %s9, 3
    %p199 = pnand %p197, %p198
    %p200 = pneg %p199
    // Predicated region
    $region29: #{self_attention_spa.6} parent=5 // pred_check
      _
    $region30: #{self_attention_spa.6} parent=5 // pred_check_branch
      %202 = sbr.rel (%p199) target = $region32
    $region31: #{self_attention_spa.6} parent=5 // pred_region
      %s203 = ssub.s32 %s9, 1
      %s204 = smul.u32 32, %s20
      %p205 = scmp.lt.s32.totalorder %s19, 1
      %s206 = scalar_select %p205, %s19, 1
      %p207 = scmp.lt.s32.totalorder %s204, 31
      %s208 = scalar_select %p207, %s204, 31
      %s209 = smul.addr %s206, 32
      %s210 = sadd.s32 %s208, %s209
      %s211 = smul.addr %s210, 4
      %s212 = scalar_lea.vmem %s0, %s211
      %p213 = pneg %p56
      %p214 = pneg %p53
      %s215 = smul.u32 32, %s21
      %p216 = scmp.lt.s32.totalorder %s19, 1
      %s217 = scalar_select %p216, %s19, 1
      %p218 = scmp.lt.s32.totalorder %s215, 31
      %s219 = scalar_select %p218, %s215, 31
      %s220 = smul.addr %s217, 32
      %s221 = sadd.s32 %s219, %s220
      %s222 = smul.addr %s221, 4
      %s223 = scalar_lea.vmem %s1, %s222
      %p224 = pneg %p84
      %p225 = pneg %p81
      %s226 = smul.u32 2, %s21
      %p227 = scmp.lt.s32.totalorder %s19, 1
      %s228 = scalar_select %p227, %s19, 1
      %p229 = scmp.lt.s32.totalorder %s226, 1
      %s230 = scalar_select %p229, %s226, 1
      %s231 = smul.addr %s228, 2
      %s232 = sadd.s32 %s230, %s231
      %s233 = scalar_lea.vmem %s2, %s232
      %p234 = pneg %p112
      %p235 = pneg %p109
      %p236 = pneg %p140
      %p237 = pneg %p137
      %s238 = smul.u32 32, %s20
      %p239 = scmp.lt.s32.totalorder %s19, 1
      %s240 = scalar_select %p239, %s19, 1
      %p241 = scmp.lt.s32.totalorder %s238, 31
      %s242 = scalar_select %p241, %s238, 31
      %s243 = smul.addr %s240, 32
      %s244 = sadd.s32 %s242, %s243
      %s245 = smul.addr %s244, 8
      %s246 = scalar_lea.vmem %s3, %s245
      %s247 = smul.u32 32, %s20
      %p248 = scmp.lt.s32.totalorder %s19, 1
      %s249 = scalar_select %p248, %s19, 1
      %p250 = scmp.lt.s32.totalorder %s247, 31
      %s251 = scalar_select %p250, %s247, 31
      %s252 = smul.addr %s249, 32
      %s253 = sadd.s32 %s251, %s252
      %s254 = smul.addr %s253, 4
      %s255 = scalar_lea.vmem %s0, %s254
      %s256 = smul.u32 32, %s20
      %s257 = smul.u32 32, %s21
      %p258 = scmp.lt.s32.totalorder %s19, 1
      %s259 = scalar_select %p258, %s19, 1
      %p260 = scmp.lt.s32.totalorder %s257, 31
      %s261 = scalar_select %p260, %s257, 31
      %s262 = smul.addr %s259, 32
      %s263 = sadd.s32 %s261, %s262
      %s264 = smul.addr %s263, 4
      %s265 = scalar_lea.vmem %s1, %s264
      %s266 = smul.u32 32, %s21
      %s267 = smul.u32 2, %s21
      %p268 = scmp.lt.s32.totalorder %s19, 1
      %s269 = scalar_select %p268, %s19, 1
      %p270 = scmp.lt.s32.totalorder %s267, 1
      %s271 = scalar_select %p270, %s267, 1
      %s272 = smul.addr %s269, 2
      %s273 = sadd.s32 %s271, %s272
      %s274 = scalar_lea.vmem %s2, %s273
      %s275 = smul.u32 2, %s21
      %s276 = smul.u32 32, %s20
      %p277 = scmp.lt.s32.totalorder %s19, 1
      %s278 = scalar_select %p277, %s19, 1
      %p279 = scmp.lt.s32.totalorder %s276, 31
      %s280 = scalar_select %p279, %s276, 31
      %s281 = smul.addr %s278, 32
      %s282 = sadd.s32 %s280, %s281
      %s283 = smul.addr %s282, 8
      %s284 = scalar_lea.vmem %s3, %s283
      %s285 = smul.u32 32, %s20
      %p287 = scmp.eq.s32.totalorder %s21, 0
      // Predicated region
      $region33: #{self_attention_spa.6} parent=31 // pred_check
        %p288 = pneg %p287
      $region34: #{self_attention_spa.6} parent=31 // pred_check_branch
        %290 = sbr.rel (%p288) target = $region36
      $region35: #{self_attention_spa.6} parent=31 // pred_region
        %291 = vst [vmem:[#allocation2] sm:$0xff] 0.0
        %292 = vst [vmem:[#allocation2 + $0x8] sm:$0xff] 0.0
        %293 = vst [vmem:[#allocation2 + $0x10] sm:$0xff] 0.0
        %294 = vst [vmem:[#allocation2 + $0x18] sm:$0xff] 0.0
        %295 = vst [vmem:[#allocation2 + $0x20] sm:$0xff] 0.0
        %296 = vst [vmem:[#allocation2 + $0x28] sm:$0xff] 0.0
        %297 = vst [vmem:[#allocation2 + $0x30] sm:$0xff] 0.0
        %298 = vst [vmem:[#allocation2 + $0x38] sm:$0xff] 0.0
        %299 = vst [vmem:[#allocation2 + $0x40] sm:$0xff] 0.0
        %300 = vst [vmem:[#allocation2 + $0x48] sm:$0xff] 0.0
        %301 = vst [vmem:[#allocation2 + $0x50] sm:$0xff] 0.0
        %302 = vst [vmem:[#allocation2 + $0x58] sm:$0xff] 0.0
        %303 = vst [vmem:[#allocation2 + $0x60] sm:$0xff] 0.0
        %304 = vst [vmem:[#allocation2 + $0x68] sm:$0xff] 0.0
        %305 = vst [vmem:[#allocation2 + $0x70] sm:$0xff] 0.0
        %306 = vst [vmem:[#allocation2 + $0x78] sm:$0xff] 0.0
        %307 = vst [vmem:[#allocation2 + $0x80] sm:$0xff] 0.0
        %308 = vst [vmem:[#allocation2 + $0x88] sm:$0xff] 0.0
        %309 = vst [vmem:[#allocation2 + $0x90] sm:$0xff] 0.0
        %310 = vst [vmem:[#allocation2 + $0x98] sm:$0xff] 0.0
        %311 = vst [vmem:[#allocation2 + $0xa0] sm:$0xff] 0.0
        %312 = vst [vmem:[#allocation2 + $0xa8] sm:$0xff] 0.0
        %313 = vst [vmem:[#allocation2 + $0xb0] sm:$0xff] 0.0
        %314 = vst [vmem:[#allocation2 + $0xb8] sm:$0xff] 0.0
        %315 = vst [vmem:[#allocation2 + $0xc0] sm:$0xff] 0.0
        %316 = vst [vmem:[#allocation2 + $0xc8] sm:$0xff] 0.0
        %317 = vst [vmem:[#allocation2 + $0xd0] sm:$0xff] 0.0
        %318 = vst [vmem:[#allocation2 + $0xd8] sm:$0xff] 0.0
        %319 = vst [vmem:[#allocation2 + $0xe0] sm:$0xff] 0.0
        %320 = vst [vmem:[#allocation2 + $0xe8] sm:$0xff] 0.0
        %321 = vst [vmem:[#allocation2 + $0xf0] sm:$0xff] 0.0
        %322 = vst [vmem:[#allocation2 + $0xf8] sm:$0xff] 0.0
      $region36: #{self_attention_spa.6} parent=31 // pred_fallthru
        _
      %v323 = vld [vmem:[%s255] sm:$0xf]
      %v324 = vld [vmem:[%s255 + $0x4] sm:$0xf]
      %v325 = vld [vmem:[%s255 + $0x8] sm:$0xf]
      %v326 = vld [vmem:[%s255 + $0xc] sm:$0xf]
      %v327 = vld [vmem:[%s255 + $0x10] sm:$0xf]
      %v328 = vld [vmem:[%s255 + $0x14] sm:$0xf]
      %v329 = vld [vmem:[%s255 + $0x18] sm:$0xf]
      %v330 = vld [vmem:[%s255 + $0x1c] sm:$0xf]
      %v331 = vld [vmem:[%s255 + $0x20] sm:$0xf]
      %v332 = vld [vmem:[%s255 + $0x24] sm:$0xf]
      %v333 = vld [vmem:[%s255 + $0x28] sm:$0xf]
      %v334 = vld [vmem:[%s255 + $0x2c] sm:$0xf]
      %v335 = vld [vmem:[%s255 + $0x30] sm:$0xf]
      %v336 = vld [vmem:[%s255 + $0x34] sm:$0xf]
      %v337 = vld [vmem:[%s255 + $0x38] sm:$0xf]
      %v338 = vld [vmem:[%s255 + $0x3c] sm:$0xf]
      %v339 = vld [vmem:[%s255 + $0x40] sm:$0xf]
      %v340 = vld [vmem:[%s255 + $0x44] sm:$0xf]
      %v341 = vld [vmem:[%s255 + $0x48] sm:$0xf]
      %v342 = vld [vmem:[%s255 + $0x4c] sm:$0xf]
      %v343 = vld [vmem:[%s255 + $0x50] sm:$0xf]
      %v344 = vld [vmem:[%s255 + $0x54] sm:$0xf]
      %v345 = vld [vmem:[%s255 + $0x58] sm:$0xf]
      %v346 = vld [vmem:[%s255 + $0x5c] sm:$0xf]
      %v347 = vld [vmem:[%s255 + $0x60] sm:$0xf]
      %v348 = vld [vmem:[%s255 + $0x64] sm:$0xf]
      %v349 = vld [vmem:[%s255 + $0x68] sm:$0xf]
      %v350 = vld [vmem:[%s255 + $0x6c] sm:$0xf]
      %v351 = vld [vmem:[%s255 + $0x70] sm:$0xf]
      %v352 = vld [vmem:[%s255 + $0x74] sm:$0xf]
      %v353 = vld [vmem:[%s255 + $0x78] sm:$0xf]
      %v354 = vld [vmem:[%s255 + $0x7c] sm:$0xf]
      %v355 = vld [vmem:[%s265] sm:$0xf]
      %v356 = vld [vmem:[%s265 + $0x4] sm:$0xf]
      %v357 = vld [vmem:[%s265 + $0x8] sm:$0xf]
      %v358 = vld [vmem:[%s265 + $0xc] sm:$0xf]
      %v359 = vld [vmem:[%s265 + $0x10] sm:$0xf]
      %v360 = vld [vmem:[%s265 + $0x14] sm:$0xf]
      %v361 = vld [vmem:[%s265 + $0x18] sm:$0xf]
      %v362 = vld [vmem:[%s265 + $0x1c] sm:$0xf]
      %v363 = vld [vmem:[%s265 + $0x20] sm:$0xf]
      %v364 = vld [vmem:[%s265 + $0x24] sm:$0xf]
      %v365 = vld [vmem:[%s265 + $0x28] sm:$0xf]
      %v366 = vld [vmem:[%s265 + $0x2c] sm:$0xf]
      %v367 = vld [vmem:[%s265 + $0x30] sm:$0xf]
      %v368 = vld [vmem:[%s265 + $0x34] sm:$0xf]
      %v369 = vld [vmem:[%s265 + $0x38] sm:$0xf]
      %v370 = vld [vmem:[%s265 + $0x3c] sm:$0xf]
      %v371 = vld [vmem:[%s265 + $0x40] sm:$0xf]
      %v372 = vld [vmem:[%s265 + $0x44] sm:$0xf]
      %v373 = vld [vmem:[%s265 + $0x48] sm:$0xf]
      %v374 = vld [vmem:[%s265 + $0x4c] sm:$0xf]
      %v375 = vld [vmem:[%s265 + $0x50] sm:$0xf]
      %v376 = vld [vmem:[%s265 + $0x54] sm:$0xf]
      %v377 = vld [vmem:[%s265 + $0x58] sm:$0xf]
      %v378 = vld [vmem:[%s265 + $0x5c] sm:$0xf]
      %v379 = vld [vmem:[%s265 + $0x60] sm:$0xf]
      %v380 = vld [vmem:[%s265 + $0x64] sm:$0xf]
      %v381 = vld [vmem:[%s265 + $0x68] sm:$0xf]
      %v382 = vld [vmem:[%s265 + $0x6c] sm:$0xf]
      %v383 = vld [vmem:[%s265 + $0x70] sm:$0xf]
      %v384 = vld [vmem:[%s265 + $0x74] sm:$0xf]
      %v385 = vld [vmem:[%s265 + $0x78] sm:$0xf]
      %v386 = vld [vmem:[%s265 + $0x7c] sm:$0xf]
      %v419 = vunpack.c.l.b16 %v323
      %v420 = vunpack.c.l.b16 %v324
      %v421 = vunpack.c.l.b16 %v325
      %v422 = vunpack.c.l.b16 %v326
      %v423 = vunpack.c.l.b16 %v327
      %v424 = vunpack.c.l.b16 %v328
      %v425 = vunpack.c.l.b16 %v329
      %v426 = vunpack.c.l.b16 %v330
      %v427 = vunpack.c.l.b16 %v331
      %v428 = vunpack.c.l.b16 %v332
      %v429 = vunpack.c.l.b16 %v333
      %v430 = vunpack.c.l.b16 %v334
      %v431 = vunpack.c.l.b16 %v335
      %v432 = vunpack.c.l.b16 %v336
      %v433 = vunpack.c.l.b16 %v337
      %v434 = vunpack.c.l.b16 %v338
      %v435 = vunpack.c.l.b16 %v339
      %v436 = vunpack.c.l.b16 %v340
      %v437 = vunpack.c.l.b16 %v341
      %v438 = vunpack.c.l.b16 %v342
      %v439 = vunpack.c.l.b16 %v343
      %v440 = vunpack.c.l.b16 %v344
      %v441 = vunpack.c.l.b16 %v345
      %v442 = vunpack.c.l.b16 %v346
      %v443 = vunpack.c.l.b16 %v347
      %v444 = vunpack.c.l.b16 %v348
      %v445 = vunpack.c.l.b16 %v349
      %v446 = vunpack.c.l.b16 %v350
      %v447 = vunpack.c.l.b16 %v351
      %v448 = vunpack.c.l.b16 %v352
      %v449 = vunpack.c.l.b16 %v353
      %v450 = vunpack.c.l.b16 %v354
      %v451 = vpack.c.b16 %v420, %v419
      %v452 = vpack.c.b16 %v422, %v421
      %v453 = vpack.c.b16 %v424, %v423
      %v454 = vpack.c.b16 %v426, %v425
      %v455 = vpack.c.b16 %v428, %v427
      %v456 = vpack.c.b16 %v430, %v429
      %v457 = vpack.c.b16 %v432, %v431
      %v458 = vpack.c.b16 %v434, %v433
      %v459 = vpack.c.b16 %v436, %v435
      %v460 = vpack.c.b16 %v438, %v437
      %v461 = vpack.c.b16 %v440, %v439
      %v462 = vpack.c.b16 %v442, %v441
      %v463 = vpack.c.b16 %v444, %v443
      %v464 = vpack.c.b16 %v446, %v445
      %v465 = vpack.c.b16 %v448, %v447
      %v466 = vpack.c.b16 %v450, %v449
      %v515 = vunpack.c.l.b16 %v355
      %v516 = vunpack.c.l.b16 %v356
      %v517 = vunpack.c.l.b16 %v357
      %v518 = vunpack.c.l.b16 %v358
      %v519 = vunpack.c.l.b16 %v359
      %v520 = vunpack.c.l.b16 %v360
      %v521 = vunpack.c.l.b16 %v361
      %v522 = vunpack.c.l.b16 %v362
      %v523 = vunpack.c.l.b16 %v363
      %v524 = vunpack.c.l.b16 %v364
      %v525 = vunpack.c.l.b16 %v365
      %v526 = vunpack.c.l.b16 %v366
      %v527 = vunpack.c.l.b16 %v367
      %v528 = vunpack.c.l.b16 %v368
      %v529 = vunpack.c.l.b16 %v369
      %v530 = vunpack.c.l.b16 %v370
      %v531 = vunpack.c.l.b16 %v371
      %v532 = vunpack.c.l.b16 %v372
      %v533 = vunpack.c.l.b16 %v373
      %v534 = vunpack.c.l.b16 %v374
      %v535 = vunpack.c.l.b16 %v375
      %v536 = vunpack.c.l.b16 %v376
      %v537 = vunpack.c.l.b16 %v377
      %v538 = vunpack.c.l.b16 %v378
      %v539 = vunpack.c.l.b16 %v379
      %v540 = vunpack.c.l.b16 %v380
      %v541 = vunpack.c.l.b16 %v381
      %v542 = vunpack.c.l.b16 %v382
      %v543 = vunpack.c.l.b16 %v383
      %v544 = vunpack.c.l.b16 %v384
      %v545 = vunpack.c.l.b16 %v385
      %v546 = vunpack.c.l.b16 %v386
      %v547 = vpack.c.b16 %v516, %v515
      %v548 = vpack.c.b16 %v518, %v517
      %v549 = vpack.c.b16 %v520, %v519
      %v550 = vpack.c.b16 %v522, %v521
      %v551 = vpack.c.b16 %v524, %v523
      %v552 = vpack.c.b16 %v526, %v525
      %v553 = vpack.c.b16 %v528, %v527
      %v554 = vpack.c.b16 %v530, %v529
      %v555 = vpack.c.b16 %v532, %v531
      %v556 = vpack.c.b16 %v534, %v533
      %v557 = vpack.c.b16 %v536, %v535
      %v558 = vpack.c.b16 %v538, %v537
      %v559 = vpack.c.b16 %v540, %v539
      %v560 = vpack.c.b16 %v542, %v541
      %v561 = vpack.c.b16 %v544, %v543
      %v562 = vpack.c.b16 %v546, %v545
      %579 = vmatprep.subr.bf16.mxu0 0
      %580 = vmatpush1.bf16.xpose.msra.mxu0 %v547
      %581 = vmatprep.subr.bf16.mxu0 0
      %582 = vmatpush1.bf16.xpose.msra.mxu0 %v548
      %583 = vmatprep.subr.bf16.mxu0 0
      %584 = vmatpush1.bf16.xpose.msra.mxu0 %v549
      %585 = vmatprep.subr.bf16.mxu0 0
      %586 = vmatpush1.bf16.xpose.msra.mxu0 %v550
      %587 = vmatprep.subr.bf16.mxu0 0
      %588 = vmatpush1.bf16.xpose.msra.mxu0 %v551
      %589 = vmatprep.subr.bf16.mxu0 0
      %590 = vmatpush1.bf16.xpose.msra.mxu0 %v552
      %591 = vmatprep.subr.bf16.mxu0 0
      %592 = vmatpush1.bf16.xpose.msra.mxu0 %v553
      %593 = vmatprep.subr.bf16.mxu0 0
      %594 = vmatpush1.bf16.xpose.msra.mxu0 %v554
      %595 = vmatprep.subr.bf16.mxu0 0
      %596 = vmatpush1.bf16.xpose.msra.mxu0 %v555
      %597 = vmatprep.subr.bf16.mxu0 0
      %598 = vmatpush1.bf16.xpose.msra.mxu0 %v556
      %599 = vmatprep.subr.bf16.mxu0 0
      %600 = vmatpush1.bf16.xpose.msra.mxu0 %v557
      %601 = vmatprep.subr.bf16.mxu0 0
      %602 = vmatpush1.bf16.xpose.msra.mxu0 %v558
      %603 = vmatprep.subr.bf16.mxu0 0
      %604 = vmatpush1.bf16.xpose.msra.mxu0 %v559
      %605 = vmatprep.subr.bf16.mxu0 0
      %606 = vmatpush1.bf16.xpose.msra.mxu0 %v560
      %607 = vmatprep.subr.bf16.mxu0 0
      %608 = vmatpush1.bf16.xpose.msra.mxu0 %v561
      %609 = vmatprep.subr.bf16.mxu0 0
      %610 = vmatpush1.bf16.xpose.msra.mxu0 %v562
      %611 = vmatprep.mubr.bf16.mxu0 0
      %612 = vmatmul.mubr.bf16.gmra.mrb[0].mxu0 %v451
      %v613 = vpop.f32.mrb[0].mxu0
      %v614 = vadd.f32 0.0, %v613
      %v615 = vpop.f32.mrb[0].mxu0
      %v616 = vadd.f32 0.0, %v615
      %v617 = vpop.f32.mrb[0].mxu0
      %v618 = vadd.f32 0.0, %v617
      %v619 = vpop.f32.mrb[0].mxu0
      %v620 = vadd.f32 0.0, %v619
      %621 = vmatprep.mubr.bf16.mxu0 0
      %622 = vmatmul.mubr.bf16.gmra.mrb[0].mxu0 %v452
      %v623 = vpop.f32.mrb[0].mxu0
      %v624 = vadd.f32 0.0, %v623
      %v625 = vpop.f32.mrb[0].mxu0
      %v626 = vadd.f32 0.0, %v625
      %v627 = vpop.f32.mrb[0].mxu0
      %v628 = vadd.f32 0.0, %v627
      %v629 = vpop.f32.mrb[0].mxu0
      %v630 = vadd.f32 0.0, %v629
      %631 = vmatprep.mubr.bf16.mxu0 0
      %632 = vmatmul.mubr.bf16.gmra.mrb[0].mxu0 %v453
      %v633 = vpop.f32.mrb[0].mxu0
      %v634 = vadd.f32 0.0, %v633
      %v635 = vpop.f32.mrb[0].mxu0
      %v636 = vadd.f32 0.0, %v635
      %v637 = vpop.f32.mrb[0].mxu0
      %v638 = vadd.f32 0.0, %v637
      %v639 = vpop.f32.mrb[0].mxu0
      %v640 = vadd.f32 0.0, %v639
      %641 = vmatprep.mubr.bf16.mxu0 0
      %642 = vmatmul.mubr.bf16.gmra.mrb[0].mxu0 %v454
      %v643 = vpop.f32.mrb[0].mxu0
      %v644 = vadd.f32 0.0, %v643
      %v645 = vpop.f32.mrb[0].mxu0
      %v646 = vadd.f32 0.0, %v645
      %v647 = vpop.f32.mrb[0].mxu0
      %v648 = vadd.f32 0.0, %v647
      %v649 = vpop.f32.mrb[0].mxu0
      %v650 = vadd.f32 0.0, %v649
      %651 = vmatprep.mubr.bf16.mxu0 0
      %652 = vmatmul.mubr.bf16.gmra.mrb[0].mxu0 %v455
      %v653 = vpop.f32.mrb[0].mxu0
      %v654 = vadd.f32 0.0, %v653
      %v655 = vpop.f32.mrb[0].mxu0
      %v656 = vadd.f32 0.0, %v655
      %v657 = vpop.f32.mrb[0].mxu0
      %v658 = vadd.f32 0.0, %v657
      %v659 = vpop.f32.mrb[0].mxu0
      %v660 = vadd.f32 0.0, %v659
      %661 = vmatprep.mubr.bf16.mxu0 0
      %662 = vmatmul.mubr.bf16.gmra.mrb[0].mxu0 %v456
      %v663 = vpop.f32.mrb[0].mxu0
      %v664 = vadd.f32 0.0, %v663
      %v665 = vpop.f32.mrb[0].mxu0
      %v666 = vadd.f32 0.0, %v665
      %v667 = vpop.f32.mrb[0].mxu0
      %v668 = vadd.f32 0.0, %v667
      %v669 = vpop.f32.mrb[0].mxu0
      %v670 = vadd.f32 0.0, %v669
      %671 = vmatprep.mubr.bf16.mxu0 0
      %672 = vmatmul.mubr.bf16.gmra.mrb[0].mxu0 %v457
      %v673 = vpop.f32.mrb[0].mxu0
      %v674 = vadd.f32 0.0, %v673
      %v675 = vpop.f32.mrb[0].mxu0
      %v676 = vadd.f32 0.0, %v675
      %v677 = vpop.f32.mrb[0].mxu0
      %v678 = vadd.f32 0.0, %v677
      %v679 = vpop.f32.mrb[0].mxu0
      %v680 = vadd.f32 0.0, %v679
      %681 = vmatprep.mubr.bf16.mxu0 0
      %682 = vmatmul.mubr.bf16.gmra.mrb[0].mxu0 %v458
      %v683 = vpop.f32.mrb[0].mxu0
      %v684 = vadd.f32 0.0, %v683
      %v685 = vpop.f32.mrb[0].mxu0
      %v686 = vadd.f32 0.0, %v685
      %v687 = vpop.f32.mrb[0].mxu0
      %v688 = vadd.f32 0.0, %v687
      %v689 = vpop.f32.mrb[0].mxu0
      %v690 = vadd.f32 0.0, %v689
      %691 = vmatprep.mubr.bf16.mxu0 0
      %692 = vmatmul.mubr.bf16.gmra.mrb[0].mxu0 %v459
      %v693 = vpop.f32.mrb[0].mxu0
      %v694 = vadd.f32 0.0, %v693
      %v695 = vpop.f32.mrb[0].mxu0
      %v696 = vadd.f32 0.0, %v695
      %v697 = vpop.f32.mrb[0].mxu0
      %v698 = vadd.f32 0.0, %v697
      %v699 = vpop.f32.mrb[0].mxu0
      %v700 = vadd.f32 0.0, %v699
      %701 = vmatprep.mubr.bf16.mxu0 0
      %702 = vmatmul.mubr.bf16.gmra.mrb[0].mxu0 %v460
      %v703 = vpop.f32.mrb[0].mxu0
      %v704 = vadd.f32 0.0, %v703
      %v705 = vpop.f32.mrb[0].mxu0
      %v706 = vadd.f32 0.0, %v705
      %v707 = vpop.f32.mrb[0].mxu0
      %v708 = vadd.f32 0.0, %v707
      %v709 = vpop.f32.mrb[0].mxu0
      %v710 = vadd.f32 0.0, %v709
      %711 = vmatprep.mubr.bf16.mxu0 0
      %712 = vmatmul.mubr.bf16.gmra.mrb[0].mxu0 %v461
      %v713 = vpop.f32.mrb[0].mxu0
      %v714 = vadd.f32 0.0, %v713
      %v715 = vpop.f32.mrb[0].mxu0
      %v716 = vadd.f32 0.0, %v715
      %v717 = vpop.f32.mrb[0].mxu0
      %v718 = vadd.f32 0.0, %v717
      %v719 = vpop.f32.mrb[0].mxu0
      %v720 = vadd.f32 0.0, %v719
      %721 = vmatprep.mubr.bf16.mxu0 0
      %722 = vmatmul.mubr.bf16.gmra.mrb[0].mxu0 %v462
      %v723 = vpop.f32.mrb[0].mxu0
      %v724 = vadd.f32 0.0, %v723
      %v725 = vpop.f32.mrb[0].mxu0
      %v726 = vadd.f32 0.0, %v725
      %v727 = vpop.f32.mrb[0].mxu0
      %v728 = vadd.f32 0.0, %v727
      %v729 = vpop.f32.mrb[0].mxu0
      %v730 = vadd.f32 0.0, %v729
      %731 = vmatprep.mubr.bf16.mxu0 0
      %732 = vmatmul.mubr.bf16.gmra.mrb[0].mxu0 %v463
      %v733 = vpop.f32.mrb[0].mxu0
      %v734 = vadd.f32 0.0, %v733
      %v735 = vpop.f32.mrb[0].mxu0
      %v736 = vadd.f32 0.0, %v735
      %v737 = vpop.f32.mrb[0].mxu0
      %v738 = vadd.f32 0.0, %v737
      %v739 = vpop.f32.mrb[0].mxu0
      %v740 = vadd.f32 0.0, %v739
      %741 = vmatprep.mubr.bf16.mxu0 0
      %742 = vmatmul.mubr.bf16.gmra.mrb[0].mxu0 %v464
      %v743 = vpop.f32.mrb[0].mxu0
      %v744 = vadd.f32 0.0, %v743
      %v745 = vpop.f32.mrb[0].mxu0
      %v746 = vadd.f32 0.0, %v745
      %v747 = vpop.f32.mrb[0].mxu0
      %v748 = vadd.f32 0.0, %v747
      %v749 = vpop.f32.mrb[0].mxu0
      %v750 = vadd.f32 0.0, %v749
      %751 = vmatprep.mubr.bf16.mxu0 0
      %752 = vmatmul.mubr.bf16.gmra.mrb[0].mxu0 %v465
      %v753 = vpop.f32.mrb[0].mxu0
      %v754 = vadd.f32 0.0, %v753
      %v755 = vpop.f32.mrb[0].mxu0
      %v756 = vadd.f32 0.0, %v755
      %v757 = vpop.f32.mrb[0].mxu0
      %v758 = vadd.f32 0.0, %v757
      %v759 = vpop.f32.mrb[0].mxu0
      %v760 = vadd.f32 0.0, %v759
      %761 = vmatprep.mubr.bf16.mxu0 0
      %762 = vmatmul.mubr.bf16.gmra.mrb[0].mxu0 %v466
      %v763 = vpop.f32.mrb[0].mxu0
      %v764 = vadd.f32 0.0, %v763
      %v765 = vpop.f32.mrb[0].mxu0
      %v766 = vadd.f32 0.0, %v765
      %v767 = vpop.f32.mrb[0].mxu0
      %v768 = vadd.f32 0.0, %v767
      %v769 = vpop.f32.mrb[0].mxu0
      %v770 = vadd.f32 0.0, %v769
      %771 = vdwg.mxu0
      %v772 = vld [vmem:[%s274] sm:$0x3]
      %v774 = vlaneseq
      %v775 = vshrl.u32 %v774, 7
      %v776 = vsub.s32 0, %v775
      %v777 = vrot.slane %v772, %v776
      %v778 = vlaneseq
      %v779 = vshrl.u32 %v778, 7
      %v780 = vsub.s32 1, %v779
      %v781 = vrot.slane %v772, %v780
      %v784 = vsub.f32 %v614, %v777
      %v785 = vsub.f32 %v616, %v781
      %v786 = vsub.f32 %v618, %v777
      %v787 = vsub.f32 %v620, %v781
      %v788 = vsub.f32 %v624, %v777
      %v789 = vsub.f32 %v626, %v781
      %v790 = vsub.f32 %v628, %v777
      %v791 = vsub.f32 %v630, %v781
      %v792 = vsub.f32 %v634, %v777
      %v793 = vsub.f32 %v636, %v781
      %v794 = vsub.f32 %v638, %v777
      %v795 = vsub.f32 %v640, %v781
      %v796 = vsub.f32 %v644, %v777
      %v797 = vsub.f32 %v646, %v781
      %v798 = vsub.f32 %v648, %v777
      %v799 = vsub.f32 %v650, %v781
      %v800 = vsub.f32 %v654, %v777
      %v801 = vsub.f32 %v656, %v781
      %v802 = vsub.f32 %v658, %v777
      %v803 = vsub.f32 %v660, %v781
      %v804 = vsub.f32 %v664, %v777
      %v805 = vsub.f32 %v666, %v781
      %v806 = vsub.f32 %v668, %v777
      %v807 = vsub.f32 %v670, %v781
      %v808 = vsub.f32 %v674, %v777
      %v809 = vsub.f32 %v676, %v781
      %v810 = vsub.f32 %v678, %v777
      %v811 = vsub.f32 %v680, %v781
      %v812 = vsub.f32 %v684, %v777
      %v813 = vsub.f32 %v686, %v781
      %v814 = vsub.f32 %v688, %v777
      %v815 = vsub.f32 %v690, %v781
      %v816 = vsub.f32 %v694, %v777
      %v817 = vsub.f32 %v696, %v781
      %v818 = vsub.f32 %v698, %v777
      %v819 = vsub.f32 %v700, %v781
      %v820 = vsub.f32 %v704, %v777
      %v821 = vsub.f32 %v706, %v781
      %v822 = vsub.f32 %v708, %v777
      %v823 = vsub.f32 %v710, %v781
      %v824 = vsub.f32 %v714, %v777
      %v825 = vsub.f32 %v716, %v781
      %v826 = vsub.f32 %v718, %v777
      %v827 = vsub.f32 %v720, %v781
      %v828 = vsub.f32 %v724, %v777
      %v829 = vsub.f32 %v726, %v781
      %v830 = vsub.f32 %v728, %v777
      %v831 = vsub.f32 %v730, %v781
      %v832 = vsub.f32 %v734, %v777
      %v833 = vsub.f32 %v736, %v781
      %v834 = vsub.f32 %v738, %v777
      %v835 = vsub.f32 %v740, %v781
      %v836 = vsub.f32 %v744, %v777
      %v837 = vsub.f32 %v746, %v781
      %v838 = vsub.f32 %v748, %v777
      %v839 = vsub.f32 %v750, %v781
      %v840 = vsub.f32 %v754, %v777
      %v841 = vsub.f32 %v756, %v781
      %v842 = vsub.f32 %v758, %v777
      %v843 = vsub.f32 %v760, %v781
      %v844 = vsub.f32 %v764, %v777
      %v845 = vsub.f32 %v766, %v781
      %v846 = vsub.f32 %v768, %v777
      %v847 = vsub.f32 %v770, %v781
      %v848 = vmul.f32 %v784, 1.442695
      %v849 = vpow.pop %v848
      %v850 = vmul.f32 %v785, 1.442695
      %v851 = vpow.pop %v850
      %v852 = vmul.f32 %v786, 1.442695
      %v853 = vpow.pop %v852
      %v854 = vmul.f32 %v787, 1.442695
      %v855 = vpow.pop %v854
      %v856 = vmul.f32 %v788, 1.442695
      %v857 = vpow.pop %v856
      %v858 = vmul.f32 %v789, 1.442695
      %v859 = vpow.pop %v858
      %v860 = vmul.f32 %v790, 1.442695
      %v861 = vpow.pop %v860
      %v862 = vmul.f32 %v791, 1.442695
      %v863 = vpow.pop %v862
      %v864 = vmul.f32 %v792, 1.442695
      %v865 = vpow.pop %v864
      %v866 = vmul.f32 %v793, 1.442695
      %v867 = vpow.pop %v866
      %v868 = vmul.f32 %v794, 1.442695
      %v869 = vpow.pop %v868
      %v870 = vmul.f32 %v795, 1.442695
      %v871 = vpow.pop %v870
      %v872 = vmul.f32 %v796, 1.442695
      %v873 = vpow.pop %v872
      %v874 = vmul.f32 %v797, 1.442695
      %v875 = vpow.pop %v874
      %v876 = vmul.f32 %v798, 1.442695
      %v877 = vpow.pop %v876
      %v878 = vmul.f32 %v799, 1.442695
      %v879 = vpow.pop %v878
      %v880 = vmul.f32 %v800, 1.442695
      %v881 = vpow.pop %v880
      %v882 = vmul.f32 %v801, 1.442695
      %v883 = vpow.pop %v882
      %v884 = vmul.f32 %v802, 1.442695
      %v885 = vpow.pop %v884
      %v886 = vmul.f32 %v803, 1.442695
      %v887 = vpow.pop %v886
      %v888 = vmul.f32 %v804, 1.442695
      %v889 = vpow.pop %v888
      %v890 = vmul.f32 %v805, 1.442695
      %v891 = vpow.pop %v890
      %v892 = vmul.f32 %v806, 1.442695
      %v893 = vpow.pop %v892
      %v894 = vmul.f32 %v807, 1.442695
      %v895 = vpow.pop %v894
      %v896 = vmul.f32 %v808, 1.442695
      %v897 = vpow.pop %v896
      %v898 = vmul.f32 %v809, 1.442695
      %v899 = vpow.pop %v898
      %v900 = vmul.f32 %v810, 1.442695
      %v901 = vpow.pop %v900
      %v902 = vmul.f32 %v811, 1.442695
      %v903 = vpow.pop %v902
      %v904 = vmul.f32 %v812, 1.442695
      %v905 = vpow.pop %v904
      %v906 = vmul.f32 %v813, 1.442695
      %v907 = vpow.pop %v906
      %v908 = vmul.f32 %v814, 1.442695
      %v909 = vpow.pop %v908
      %v910 = vmul.f32 %v815, 1.442695
      %v911 = vpow.pop %v910
      %v912 = vmul.f32 %v816, 1.442695
      %v913 = vpow.pop %v912
      %v914 = vmul.f32 %v817, 1.442695
      %v915 = vpow.pop %v914
      %v916 = vmul.f32 %v818, 1.442695
      %v917 = vpow.pop %v916
      %v918 = vmul.f32 %v819, 1.442695
      %v919 = vpow.pop %v918
      %v920 = vmul.f32 %v820, 1.442695
      %v921 = vpow.pop %v920
      %v922 = vmul.f32 %v821, 1.442695
      %v923 = vpow.pop %v922
      %v924 = vmul.f32 %v822, 1.442695
      %v925 = vpow.pop %v924
      %v926 = vmul.f32 %v823, 1.442695
      %v927 = vpow.pop %v926
      %v928 = vmul.f32 %v824, 1.442695
      %v929 = vpow.pop %v928
      %v930 = vmul.f32 %v825, 1.442695
      %v931 = vpow.pop %v930
      %v932 = vmul.f32 %v826, 1.442695
      %v933 = vpow.pop %v932
      %v934 = vmul.f32 %v827, 1.442695
      %v935 = vpow.pop %v934
      %v936 = vmul.f32 %v828, 1.442695
      %v937 = vpow.pop %v936
      %v938 = vmul.f32 %v829, 1.442695
      %v939 = vpow.pop %v938
      %v940 = vmul.f32 %v830, 1.442695
      %v941 = vpow.pop %v940
      %v942 = vmul.f32 %v831, 1.442695
      %v943 = vpow.pop %v942
      %v944 = vmul.f32 %v832, 1.442695
      %v945 = vpow.pop %v944
      %v946 = vmul.f32 %v833, 1.442695
      %v947 = vpow.pop %v946
      %v948 = vmul.f32 %v834, 1.442695
      %v949 = vpow.pop %v948
      %v950 = vmul.f32 %v835, 1.442695
      %v951 = vpow.pop %v950
      %v952 = vmul.f32 %v836, 1.442695
      %v953 = vpow.pop %v952
      %v954 = vmul.f32 %v837, 1.442695
      %v955 = vpow.pop %v954
      %v956 = vmul.f32 %v838, 1.442695
      %v957 = vpow.pop %v956
      %v958 = vmul.f32 %v839, 1.442695
      %v959 = vpow.pop %v958
      %v960 = vmul.f32 %v840, 1.442695
      %v961 = vpow.pop %v960
      %v962 = vmul.f32 %v841, 1.442695
      %v963 = vpow.pop %v962
      %v964 = vmul.f32 %v842, 1.442695
      %v965 = vpow.pop %v964
      %v966 = vmul.f32 %v843, 1.442695
      %v967 = vpow.pop %v966
      %v968 = vmul.f32 %v844, 1.442695
      %v969 = vpow.pop %v968
      %v970 = vmul.f32 %v845, 1.442695
      %v971 = vpow.pop %v970
      %v972 = vmul.f32 %v846, 1.442695
      %v973 = vpow.pop %v972
      %v974 = vmul.f32 %v847, 1.442695
      %v975 = vpow.pop %v974
      %v976 = vld [vmem:[#allocation2] sm:$0xff]
      %v977 = vld [vmem:[#allocation2 + $0x8] sm:$0xff]
      %v978 = vld [vmem:[#allocation2 + $0x10] sm:$0xff]
      %v979 = vld [vmem:[#allocation2 + $0x18] sm:$0xff]
      %v980 = vld [vmem:[#allocation2 + $0x20] sm:$0xff]
      %v981 = vld [vmem:[#allocation2 + $0x28] sm:$0xff]
      %v982 = vld [vmem:[#allocation2 + $0x30] sm:$0xff]
      %v983 = vld [vmem:[#allocation2 + $0x38] sm:$0xff]
      %v984 = vld [vmem:[#allocation2 + $0x40] sm:$0xff]
      %v985 = vld [vmem:[#allocation2 + $0x48] sm:$0xff]
      %v986 = vld [vmem:[#allocation2 + $0x50] sm:$0xff]
      %v987 = vld [vmem:[#allocation2 + $0x58] sm:$0xff]
      %v988 = vld [vmem:[#allocation2 + $0x60] sm:$0xff]
      %v989 = vld [vmem:[#allocation2 + $0x68] sm:$0xff]
      %v990 = vld [vmem:[#allocation2 + $0x70] sm:$0xff]
      %v991 = vld [vmem:[#allocation2 + $0x78] sm:$0xff]
      %v992 = vld [vmem:[#allocation2 + $0x80] sm:$0xff]
      %v993 = vld [vmem:[#allocation2 + $0x88] sm:$0xff]
      %v994 = vld [vmem:[#allocation2 + $0x90] sm:$0xff]
      %v995 = vld [vmem:[#allocation2 + $0x98] sm:$0xff]
      %v996 = vld [vmem:[#allocation2 + $0xa0] sm:$0xff]
      %v997 = vld [vmem:[#allocation2 + $0xa8] sm:$0xff]
      %v998 = vld [vmem:[#allocation2 + $0xb0] sm:$0xff]
      %v999 = vld [vmem:[#allocation2 + $0xb8] sm:$0xff]
      %v1000 = vld [vmem:[#allocation2 + $0xc0] sm:$0xff]
      %v1001 = vld [vmem:[#allocation2 + $0xc8] sm:$0xff]
      %v1002 = vld [vmem:[#allocation2 + $0xd0] sm:$0xff]
      %v1003 = vld [vmem:[#allocation2 + $0xd8] sm:$0xff]
      %v1004 = vld [vmem:[#allocation2 + $0xe0] sm:$0xff]
      %v1005 = vld [vmem:[#allocation2 + $0xe8] sm:$0xff]
      %v1006 = vld [vmem:[#allocation2 + $0xf0] sm:$0xff]
      %v1007 = vld [vmem:[#allocation2 + $0xf8] sm:$0xff]
      %v1008 = vpack.c.bf16 %v853, %v849
      %v1009 = vpack.c.bf16 %v855, %v851
      %v1010 = vpack.c.bf16 %v861, %v857
      %v1011 = vpack.c.bf16 %v863, %v859
      %v1012 = vpack.c.bf16 %v869, %v865
      %v1013 = vpack.c.bf16 %v871, %v867
      %v1014 = vpack.c.bf16 %v877, %v873
      %v1015 = vpack.c.bf16 %v879, %v875
      %v1016 = vpack.c.bf16 %v885, %v881
      %v1017 = vpack.c.bf16 %v887, %v883
      %v1018 = vpack.c.bf16 %v893, %v889
      %v1019 = vpack.c.bf16 %v895, %v891
      %v1020 = vpack.c.bf16 %v901, %v897
      %v1021 = vpack.c.bf16 %v903, %v899
      %v1022 = vpack.c.bf16 %v909, %v905
      %v1023 = vpack.c.bf16 %v911, %v907
      %v1024 = vpack.c.bf16 %v917, %v913
      %v1025 = vpack.c.bf16 %v919, %v915
      %v1026 = vpack.c.bf16 %v925, %v921
      %v1027 = vpack.c.bf16 %v927, %v923
      %v1028 = vpack.c.bf16 %v933, %v929
      %v1029 = vpack.c.bf16 %v935, %v931
      %v1030 = vpack.c.bf16 %v941, %v937
      %v1031 = vpack.c.bf16 %v943, %v939
      %v1032 = vpack.c.bf16 %v949, %v945
      %v1033 = vpack.c.bf16 %v951, %v947
      %v1034 = vpack.c.bf16 %v957, %v953
      %v1035 = vpack.c.bf16 %v959, %v955
      %v1036 = vpack.c.bf16 %v965, %v961
      %v1037 = vpack.c.bf16 %v967, %v963
      %v1038 = vpack.c.bf16 %v973, %v969
      %v1039 = vpack.c.bf16 %v975, %v971
      %1040 = vmatprep.subr.bf16.mxu0 0
      %1041 = vmatpush1.bf16.msra.mxu0 %v547
      %1042 = vmatprep.subr.bf16.mxu0 0
      %1043 = vmatpush1.bf16.msra.mxu0 %v548
      %1044 = vmatprep.subr.bf16.mxu0 0
      %1045 = vmatpush1.bf16.msra.mxu0 %v549
      %1046 = vmatprep.subr.bf16.mxu0 0
      %1047 = vmatpush1.bf16.msra.mxu0 %v550
      %1048 = vmatprep.subr.bf16.mxu0 0
      %1049 = vmatpush1.bf16.msra.mxu0 %v551
      %1050 = vmatprep.subr.bf16.mxu0 0
      %1051 = vmatpush1.bf16.msra.mxu0 %v552
      %1052 = vmatprep.subr.bf16.mxu0 0
      %1053 = vmatpush1.bf16.msra.mxu0 %v553
      %1054 = vmatprep.subr.bf16.mxu0 0
      %1055 = vmatpush1.bf16.msra.mxu0 %v554
      %1056 = vmatprep.subr.bf16.mxu0 0
      %1057 = vmatpush1.bf16.msra.mxu0 %v555
      %1058 = vmatprep.subr.bf16.mxu0 0
      %1059 = vmatpush1.bf16.msra.mxu0 %v556
      %1060 = vmatprep.subr.bf16.mxu0 0
      %1061 = vmatpush1.bf16.msra.mxu0 %v557
      %1062 = vmatprep.subr.bf16.mxu0 0
      %1063 = vmatpush1.bf16.msra.mxu0 %v558
      %1064 = vmatprep.subr.bf16.mxu0 0
      %1065 = vmatpush1.bf16.msra.mxu0 %v559
      %1066 = vmatprep.subr.bf16.mxu0 0
      %1067 = vmatpush1.bf16.msra.mxu0 %v560
      %1068 = vmatprep.subr.bf16.mxu0 0
      %1069 = vmatpush1.bf16.msra.mxu0 %v561
      %1070 = vmatprep.subr.bf16.mxu0 0
      %1071 = vmatpush1.bf16.msra.mxu0 %v562
      %1072 = vmatprep.mubr.bf16.mxu0 %v1009
      %1073 = vmatmul.mubr.bf16.gmra.mrb[0].mxu0 %v1008
      %v1074 = vpop.f32.mrb[0].mxu0
      %v1075 = vadd.f32 0.0, %v1074
      %v1076 = vpop.f32.mrb[0].mxu0
      %v1077 = vpop.f32.mrb[0].mxu0
      %v1078 = vadd.f32 0.0, %v1077
      %v1079 = vpop.f32.mrb[0].mxu0
      %1080 = vmatprep.mubr.bf16.mxu0 %v1011
      %1081 = vmatmul.mubr.bf16.gmra.mrb[0].mxu0 %v1010
      %v1082 = vpop.f32.mrb[0].mxu0
      %v1083 = vadd.f32 0.0, %v1082
      %v1084 = vpop.f32.mrb[0].mxu0
      %v1085 = vpop.f32.mrb[0].mxu0
      %v1086 = vadd.f32 0.0, %v1085
      %v1087 = vpop.f32.mrb[0].mxu0
      %1088 = vmatprep.mubr.bf16.mxu0 %v1013
      %1089 = vmatmul.mubr.bf16.gmra.mrb[0].mxu0 %v1012
      %v1090 = vpop.f32.mrb[0].mxu0
      %v1091 = vadd.f32 0.0, %v1090
      %v1092 = vpop.f32.mrb[0].mxu0
      %v1093 = vpop.f32.mrb[0].mxu0
      %v1094 = vadd.f32 0.0, %v1093
      %v1095 = vpop.f32.mrb[0].mxu0
      %1096 = vmatprep.mubr.bf16.mxu0 %v1015
      %1097 = vmatmul.mubr.bf16.gmra.mrb[0].mxu0 %v1014
      %v1098 = vpop.f32.mrb[0].mxu0
      %v1099 = vadd.f32 0.0, %v1098
      %v1100 = vpop.f32.mrb[0].mxu0
      %v1101 = vpop.f32.mrb[0].mxu0
      %v1102 = vadd.f32 0.0, %v1101
      %v1103 = vpop.f32.mrb[0].mxu0
      %1104 = vmatprep.mubr.bf16.mxu0 %v1017
      %1105 = vmatmul.mubr.bf16.gmra.mrb[0].mxu0 %v1016
      %v1106 = vpop.f32.mrb[0].mxu0
      %v1107 = vadd.f32 0.0, %v1106
      %v1108 = vpop.f32.mrb[0].mxu0
      %v1109 = vpop.f32.mrb[0].mxu0
      %v1110 = vadd.f32 0.0, %v1109
      %v1111 = vpop.f32.mrb[0].mxu0
      %1112 = vmatprep.mubr.bf16.mxu0 %v1019
      %1113 = vmatmul.mubr.bf16.gmra.mrb[0].mxu0 %v1018
      %v1114 = vpop.f32.mrb[0].mxu0
      %v1115 = vadd.f32 0.0, %v1114
      %v1116 = vpop.f32.mrb[0].mxu0
      %v1117 = vpop.f32.mrb[0].mxu0
      %v1118 = vadd.f32 0.0, %v1117
      %v1119 = vpop.f32.mrb[0].mxu0
      %1120 = vmatprep.mubr.bf16.mxu0 %v1021
      %1121 = vmatmul.mubr.bf16.gmra.mrb[0].mxu0 %v1020
      %v1122 = vpop.f32.mrb[0].mxu0
      %v1123 = vadd.f32 0.0, %v1122
      %v1124 = vpop.f32.mrb[0].mxu0
      %v1125 = vpop.f32.mrb[0].mxu0
      %v1126 = vadd.f32 0.0, %v1125
      %v1127 = vpop.f32.mrb[0].mxu0
      %1128 = vmatprep.mubr.bf16.mxu0 %v1023
      %1129 = vmatmul.mubr.bf16.gmra.mrb[0].mxu0 %v1022
      %v1130 = vpop.f32.mrb[0].mxu0
      %v1131 = vadd.f32 0.0, %v1130
      %v1132 = vpop.f32.mrb[0].mxu0
      %v1133 = vpop.f32.mrb[0].mxu0
      %v1134 = vadd.f32 0.0, %v1133
      %v1135 = vpop.f32.mrb[0].mxu0
      %1136 = vmatprep.mubr.bf16.mxu0 %v1025
      %1137 = vmatmul.mubr.bf16.gmra.mrb[0].mxu0 %v1024
      %v1138 = vpop.f32.mrb[0].mxu0
      %v1139 = vadd.f32 0.0, %v1138
      %v1140 = vpop.f32.mrb[0].mxu0
      %v1141 = vpop.f32.mrb[0].mxu0
      %v1142 = vadd.f32 0.0, %v1141
      %v1143 = vpop.f32.mrb[0].mxu0
      %1144 = vmatprep.mubr.bf16.mxu0 %v1027
      %1145 = vmatmul.mubr.bf16.gmra.mrb[0].mxu0 %v1026
      %v1146 = vpop.f32.mrb[0].mxu0
      %v1147 = vadd.f32 0.0, %v1146
      %v1148 = vpop.f32.mrb[0].mxu0
      %v1149 = vpop.f32.mrb[0].mxu0
      %v1150 = vadd.f32 0.0, %v1149
      %v1151 = vpop.f32.mrb[0].mxu0
      %1152 = vmatprep.mubr.bf16.mxu0 %v1029
      %1153 = vmatmul.mubr.bf16.gmra.mrb[0].mxu0 %v1028
      %v1154 = vpop.f32.mrb[0].mxu0
      %v1155 = vadd.f32 0.0, %v1154
      %v1156 = vpop.f32.mrb[0].mxu0
      %v1157 = vpop.f32.mrb[0].mxu0
      %v1158 = vadd.f32 0.0, %v1157
      %v1159 = vpop.f32.mrb[0].mxu0
      %1160 = vmatprep.mubr.bf16.mxu0 %v1031
      %1161 = vmatmul.mubr.bf16.gmra.mrb[0].mxu0 %v1030
      %v1162 = vpop.f32.mrb[0].mxu0
      %v1163 = vadd.f32 0.0, %v1162
      %v1164 = vpop.f32.mrb[0].mxu0
      %v1165 = vpop.f32.mrb[0].mxu0
      %v1166 = vadd.f32 0.0, %v1165
      %v1167 = vpop.f32.mrb[0].mxu0
      %1168 = vmatprep.mubr.bf16.mxu0 %v1033
      %1169 = vmatmul.mubr.bf16.gmra.mrb[0].mxu0 %v1032
      %v1170 = vpop.f32.mrb[0].mxu0
      %v1171 = vadd.f32 0.0, %v1170
      %v1172 = vpop.f32.mrb[0].mxu0
      %v1173 = vpop.f32.mrb[0].mxu0
      %v1174 = vadd.f32 0.0, %v1173
      %v1175 = vpop.f32.mrb[0].mxu0
      %1176 = vmatprep.mubr.bf16.mxu0 %v1035
      %1177 = vmatmul.mubr.bf16.gmra.mrb[0].mxu0 %v1034
      %v1178 = vpop.f32.mrb[0].mxu0
      %v1179 = vadd.f32 0.0, %v1178
      %v1180 = vpop.f32.mrb[0].mxu0
      %v1181 = vpop.f32.mrb[0].mxu0
      %v1182 = vadd.f32 0.0, %v1181
      %v1183 = vpop.f32.mrb[0].mxu0
      %1184 = vmatprep.mubr.bf16.mxu0 %v1037
      %1185 = vmatmul.mubr.bf16.gmra.mrb[0].mxu0 %v1036
      %v1186 = vpop.f32.mrb[0].mxu0
      %v1187 = vadd.f32 0.0, %v1186
      %v1188 = vpop.f32.mrb[0].mxu0
      %v1189 = vpop.f32.mrb[0].mxu0
      %v1190 = vadd.f32 0.0, %v1189
      %v1191 = vpop.f32.mrb[0].mxu0
      %1192 = vmatprep.mubr.bf16.mxu0 %v1039
      %1193 = vmatmul.mubr.bf16.gmra.mrb[0].mxu0 %v1038
      %v1194 = vpop.f32.mrb[0].mxu0
      %v1195 = vadd.f32 0.0, %v1194
      %v1196 = vpop.f32.mrb[0].mxu0
      %v1197 = vpop.f32.mrb[0].mxu0
      %v1198 = vadd.f32 0.0, %v1197
      %v1199 = vpop.f32.mrb[0].mxu0
      %1200 = vdwg.mxu0
      %v1201 = vadd.f32 %v976, %v1075
      %v1202 = vadd.f32 %v977, %v1078
      %v1203 = vadd.f32 %v978, %v1083
      %v1204 = vadd.f32 %v979, %v1086
      %v1205 = vadd.f32 %v980, %v1091
      %v1206 = vadd.f32 %v981, %v1094
      %v1207 = vadd.f32 %v982, %v1099
      %v1208 = vadd.f32 %v983, %v1102
      %v1209 = vadd.f32 %v984, %v1107
      %v1210 = vadd.f32 %v985, %v1110
      %v1211 = vadd.f32 %v986, %v1115
      %v1212 = vadd.f32 %v987, %v1118
      %v1213 = vadd.f32 %v988, %v1123
      %v1214 = vadd.f32 %v989, %v1126
      %v1215 = vadd.f32 %v990, %v1131
      %v1216 = vadd.f32 %v991, %v1134
      %v1217 = vadd.f32 %v992, %v1139
      %v1218 = vadd.f32 %v993, %v1142
      %v1219 = vadd.f32 %v994, %v1147
      %v1220 = vadd.f32 %v995, %v1150
      %v1221 = vadd.f32 %v996, %v1155
      %v1222 = vadd.f32 %v997, %v1158
      %v1223 = vadd.f32 %v998, %v1163
      %v1224 = vadd.f32 %v999, %v1166
      %v1225 = vadd.f32 %v1000, %v1171
      %v1226 = vadd.f32 %v1001, %v1174
      %v1227 = vadd.f32 %v1002, %v1179
      %v1228 = vadd.f32 %v1003, %v1182
      %v1229 = vadd.f32 %v1004, %v1187
      %v1230 = vadd.f32 %v1005, %v1190
      %v1231 = vadd.f32 %v1006, %v1195
      %v1232 = vadd.f32 %v1007, %v1198
      %1233 = vst [vmem:[#allocation2] sm:$0xff] %v1201
      %1234 = vst [vmem:[#allocation2 + $0x8] sm:$0xff] %v1202
      %1235 = vst [vmem:[#allocation2 + $0x10] sm:$0xff] %v1203
      %1236 = vst [vmem:[#allocation2 + $0x18] sm:$0xff] %v1204
      %1237 = vst [vmem:[#allocation2 + $0x20] sm:$0xff] %v1205
      %1238 = vst [vmem:[#allocation2 + $0x28] sm:$0xff] %v1206
      %1239 = vst [vmem:[#allocation2 + $0x30] sm:$0xff] %v1207
      %1240 = vst [vmem:[#allocation2 + $0x38] sm:$0xff] %v1208
      %1241 = vst [vmem:[#allocation2 + $0x40] sm:$0xff] %v1209
      %1242 = vst [vmem:[#allocation2 + $0x48] sm:$0xff] %v1210
      %1243 = vst [vmem:[#allocation2 + $0x50] sm:$0xff] %v1211
      %1244 = vst [vmem:[#allocation2 + $0x58] sm:$0xff] %v1212
      %1245 = vst [vmem:[#allocation2 + $0x60] sm:$0xff] %v1213
      %1246 = vst [vmem:[#allocation2 + $0x68] sm:$0xff] %v1214
      %1247 = vst [vmem:[#allocation2 + $0x70] sm:$0xff] %v1215
      %1248 = vst [vmem:[#allocation2 + $0x78] sm:$0xff] %v1216
      %1249 = vst [vmem:[#allocation2 + $0x80] sm:$0xff] %v1217
      %1250 = vst [vmem:[#allocation2 + $0x88] sm:$0xff] %v1218
      %1251 = vst [vmem:[#allocation2 + $0x90] sm:$0xff] %v1219
      %1252 = vst [vmem:[#allocation2 + $0x98] sm:$0xff] %v1220
      %1253 = vst [vmem:[#allocation2 + $0xa0] sm:$0xff] %v1221
      %1254 = vst [vmem:[#allocation2 + $0xa8] sm:$0xff] %v1222
      %1255 = vst [vmem:[#allocation2 + $0xb0] sm:$0xff] %v1223
      %1256 = vst [vmem:[#allocation2 + $0xb8] sm:$0xff] %v1224
      %1257 = vst [vmem:[#allocation2 + $0xc0] sm:$0xff] %v1225
      %1258 = vst [vmem:[#allocation2 + $0xc8] sm:$0xff] %v1226
      %1259 = vst [vmem:[#allocation2 + $0xd0] sm:$0xff] %v1227
      %1260 = vst [vmem:[#allocation2 + $0xd8] sm:$0xff] %v1228
      %1261 = vst [vmem:[#allocation2 + $0xe0] sm:$0xff] %v1229
      %1262 = vst [vmem:[#allocation2 + $0xe8] sm:$0xff] %v1230
      %1263 = vst [vmem:[#allocation2 + $0xf0] sm:$0xff] %v1231
      %1264 = vst [vmem:[#allocation2 + $0xf8] sm:$0xff] %v1232
      // Predicated region
      $region37: #{self_attention_spa.6} parent=31 // pred_check
        %p1265 = pneg %p287
      $region38: #{self_attention_spa.6} parent=31 // pred_check_branch
        %1267 = sbr.rel (%p1265) target = $region40
      $region39: #{self_attention_spa.6} parent=31 // pred_region
        %v1268 = vld [vmem:[#allocation2] sm:$0xff]
        %v1269 = vld [vmem:[#allocation2 + $0x8] sm:$0xff]
        %v1270 = vld [vmem:[#allocation2 + $0x10] sm:$0xff]
        %v1271 = vld [vmem:[#allocation2 + $0x18] sm:$0xff]
        %v1272 = vld [vmem:[#allocation2 + $0x20] sm:$0xff]
        %v1273 = vld [vmem:[#allocation2 + $0x28] sm:$0xff]
        %v1274 = vld [vmem:[#allocation2 + $0x30] sm:$0xff]
        %v1275 = vld [vmem:[#allocation2 + $0x38] sm:$0xff]
        %v1276 = vld [vmem:[#allocation2 + $0x40] sm:$0xff]
        %v1277 = vld [vmem:[#allocation2 + $0x48] sm:$0xff]
        %v1278 = vld [vmem:[#allocation2 + $0x50] sm:$0xff]
        %v1279 = vld [vmem:[#allocation2 + $0x58] sm:$0xff]
        %v1280 = vld [vmem:[#allocation2 + $0x60] sm:$0xff]
        %v1281 = vld [vmem:[#allocation2 + $0x68] sm:$0xff]
        %v1282 = vld [vmem:[#allocation2 + $0x70] sm:$0xff]
        %v1283 = vld [vmem:[#allocation2 + $0x78] sm:$0xff]
        %v1284 = vld [vmem:[#allocation2 + $0x80] sm:$0xff]
        %v1285 = vld [vmem:[#allocation2 + $0x88] sm:$0xff]
        %v1286 = vld [vmem:[#allocation2 + $0x90] sm:$0xff]
        %v1287 = vld [vmem:[#allocation2 + $0x98] sm:$0xff]
        %v1288 = vld [vmem:[#allocation2 + $0xa0] sm:$0xff]
        %v1289 = vld [vmem:[#allocation2 + $0xa8] sm:$0xff]
        %v1290 = vld [vmem:[#allocation2 + $0xb0] sm:$0xff]
        %v1291 = vld [vmem:[#allocation2 + $0xb8] sm:$0xff]
        %v1292 = vld [vmem:[#allocation2 + $0xc0] sm:$0xff]
        %v1293 = vld [vmem:[#allocation2 + $0xc8] sm:$0xff]
        %v1294 = vld [vmem:[#allocation2 + $0xd0] sm:$0xff]
        %v1295 = vld [vmem:[#allocation2 + $0xd8] sm:$0xff]
        %v1296 = vld [vmem:[#allocation2 + $0xe0] sm:$0xff]
        %v1297 = vld [vmem:[#allocation2 + $0xe8] sm:$0xff]
        %v1298 = vld [vmem:[#allocation2 + $0xf0] sm:$0xff]
        %v1299 = vld [vmem:[#allocation2 + $0xf8] sm:$0xff]
        %1300 = vst [vmem:[%s284] sm:$0xff] %v1268
        %1301 = vst [vmem:[%s284 + $0x8] sm:$0xff] %v1269
        %1302 = vst [vmem:[%s284 + $0x10] sm:$0xff] %v1270
        %1303 = vst [vmem:[%s284 + $0x18] sm:$0xff] %v1271
        %1304 = vst [vmem:[%s284 + $0x20] sm:$0xff] %v1272
        %1305 = vst [vmem:[%s284 + $0x28] sm:$0xff] %v1273
        %1306 = vst [vmem:[%s284 + $0x30] sm:$0xff] %v1274
        %1307 = vst [vmem:[%s284 + $0x38] sm:$0xff] %v1275
        %1308 = vst [vmem:[%s284 + $0x40] sm:$0xff] %v1276
        %1309 = vst [vmem:[%s284 + $0x48] sm:$0xff] %v1277
        %1310 = vst [vmem:[%s284 + $0x50] sm:$0xff] %v1278
        %1311 = vst [vmem:[%s284 + $0x58] sm:$0xff] %v1279
        %1312 = vst [vmem:[%s284 + $0x60] sm:$0xff] %v1280
        %1313 = vst [vmem:[%s284 + $0x68] sm:$0xff] %v1281
        %1314 = vst [vmem:[%s284 + $0x70] sm:$0xff] %v1282
        %1315 = vst [vmem:[%s284 + $0x78] sm:$0xff] %v1283
        %1316 = vst [vmem:[%s284 + $0x80] sm:$0xff] %v1284
        %1317 = vst [vmem:[%s284 + $0x88] sm:$0xff] %v1285
        %1318 = vst [vmem:[%s284 + $0x90] sm:$0xff] %v1286
        %1319 = vst [vmem:[%s284 + $0x98] sm:$0xff] %v1287
        %1320 = vst [vmem:[%s284 + $0xa0] sm:$0xff] %v1288
        %1321 = vst [vmem:[%s284 + $0xa8] sm:$0xff] %v1289
        %1322 = vst [vmem:[%s284 + $0xb0] sm:$0xff] %v1290
        %1323 = vst [vmem:[%s284 + $0xb8] sm:$0xff] %v1291
        %1324 = vst [vmem:[%s284 + $0xc0] sm:$0xff] %v1292
        %1325 = vst [vmem:[%s284 + $0xc8] sm:$0xff] %v1293
        %1326 = vst [vmem:[%s284 + $0xd0] sm:$0xff] %v1294
        %1327 = vst [vmem:[%s284 + $0xd8] sm:$0xff] %v1295
        %1328 = vst [vmem:[%s284 + $0xe0] sm:$0xff] %v1296
        %1329 = vst [vmem:[%s284 + $0xe8] sm:$0xff] %v1297
        %1330 = vst [vmem:[%s284 + $0xf0] sm:$0xff] %v1298
        %1331 = vst [vmem:[%s284 + $0xf8] sm:$0xff] %v1299
      $region40: #{self_attention_spa.6} parent=31 // pred_fallthru
        _
      %s1332 = smul.u32 32, %s20
      %p1333 = scmp.lt.s32.totalorder %s19, 1
      %s1334 = scalar_select %p1333, %s19, 1
      %p1335 = scmp.lt.s32.totalorder %s1332, 31
      %s1336 = scalar_select %p1335, %s1332, 31
      %s1337 = smul.addr %s1334, 32
      %s1338 = sadd.s32 %s1336, %s1337
      %s1339 = smul.addr %s1338, 8
      %s1340 = scalar_lea.vmem %s3, %s1339
      // Predicated region
      $region41: #{self_attention_spa.6} parent=31 // pred_check
        %p1341 = pneg %p137
      $region42: #{self_attention_spa.6} parent=31 // pred_check_branch
        %1343 = sbr.rel (%p1341) target = $region44
      $region43: #{self_attention_spa.6} parent=31 // pred_region
        %s1344 = smul.u32 32, %s20
      $region44: #{self_attention_spa.6} parent=31 // pred_fallthru
        _
    $region32: #{self_attention_spa.6} parent=5 // pred_fallthru
      _
    %p1345 = scmp.le.s32.totalorder 2, %s9
    // Predicated region
    $region45: #{self_attention_spa.6} parent=5 // pred_check
      %p1346 = pneg %p1345
    $region46: #{self_attention_spa.6} parent=5 // pred_check_branch
      %1348 = sbr.rel (%p1346) target = $region48
    $region47: #{self_attention_spa.6} parent=5 // pred_region
      %s1349 = ssub.s32 %s9, 2
      // Predicated region
      $region49: #{self_attention_spa.6} parent=47 // pred_check
        %p1350 = pneg %p143
      $region50: #{self_attention_spa.6} parent=47 // pred_check_branch
        %1352 = sbr.rel (%p1350) target = $region52
      $region51: #{self_attention_spa.6} parent=47 // pred_region
        %s1353 = smul.u32 32, %s23
        %p1354 = scmp.lt.s32.totalorder %s22, 1
        %s1355 = scalar_select %p1354, %s22, 1
        %p1356 = scmp.lt.s32.totalorder %s1353, 31
        %s1357 = scalar_select %p1356, %s1353, 31
        %s1358 = smul.addr %s1355, 32
        %s1359 = sadd.s32 %s1357, %s1358
        %s1360 = smul.addr %s1359, 8
        %s1361 = scalar_lea.vmem %s3, %s1360
      $region52: #{self_attention_spa.6} parent=47 // pred_fallthru
        _
    $region48: #{self_attention_spa.6} parent=5 // pred_fallthru
      _
  $region6: #{self_attention_spa.6} parent=0 // loop_footer
    %s13 = sadd.s32 1, %s9
  $region7: #{self_attention_spa.6} parent=0 // loop_footer_branch
    %8 = sbr.rel target = $region3
  $region8: #{self_attention_spa.6} parent=0 // loop_exit
    _

// kernel: self_attention_spa.7
$region0: #{self_attention_spa.7}
  #allocation0 [shape = 'u32[]', space=smem, size = 0x4, offset = 0x4, fixed_abs, tag = 'smem constant byte address 0x4 - core index']
  #allocation1 [shape = 'u32[144,128]{1,0:T(1,128)}', space=vmem, size = 0x12000, scoped, tag = 'internal scratch']
  %s0 = inlined_call_operand.vmem [shape: f32[2,4,256], index: 0, kind: input, shape index: {}]
  %s1 = inlined_call_operand.vmem [shape: f32[2,4,256], index: 1, kind: input, shape index: {}]
  %s2 = inlined_call_operand.vmem [shape: bf16[4,4], index: 2, kind: input, shape index: {}]
  %s3 = inlined_call_operand.vmem [shape: f32[4,1], index: 3, kind: input, shape index: {}]
  %s4 = inlined_call_operand.vmem [shape: f32[2,4,256], index: 4, kind: output, shape index: {}]
  %s5 = sld [smem:[#allocation0]]
  $region49: #{self_attention_spa.7} parent=0
    _
  %s7 = ssub.s32 1, %s5
  %s8 = scalar_select 0, %s7, %s5
  loop: start=0, step=1, limit=4
  $region2: #{self_attention_spa.7} parent=0 // loop_pre_header
    _
  $region3: #{self_attention_spa.7} parent=0 // loop_header
    %s10 = sphi 0, %s14
    %p11 = scmp.ge.s32.totalorder %s10, 4
    %s17 = sphi 0, %s29
    %s18 = sphi 0, %s25
    %s19 = sphi 0, %s17
    %s20 = sphi 0, %s18
    %s21 = sphi 0, %s19
    %s22 = sphi 0, %s20
    %s34 = sphi 0, %s36
    %s37 = sphi 0, %s34
    %s38 = sphi 0, %s37
    %s54 = sphi 0, %s38
    %s62 = sphi 0, %s64
    %s65 = sphi 0, %s62
    %s66 = sphi 0, %s65
    %s82 = sphi 0, %s66
    %s86 = sphi 0, %s86
    %s88 = sphi 0, %s86
    %s89 = sphi 0, %s88
    %s103 = sphi 0, %s89
    %s107 = sphi 0, %s107
    %s109 = sphi 0, %s107
    %s110 = sphi 0, %s109
    %s124 = sphi 0, %s110
    %s132 = sphi 0, %s134
    %s135 = sphi 0, %s132
    %s136 = sphi 0, %s135
    %s152 = sphi 0, %s136
  $region4: #{self_attention_spa.7} parent=0 // loop_header_branch
    %13 = sbr.rel (%p11) target = $region8
  $region5: #{self_attention_spa.7} parent=0 // loop_body
    %s15 = ssub.s32 %s10, 1
    %s16 = ssub.s32 %s10, 2
    %s23 = sadd.s32 1, %s18
    %p24 = scmp.ge.s32.totalorder %s23, 1
    %s25 = scalar_select %p24, 0, %s23
    %s26 = sadd.s32 1, %s17
    %s27 = scalar_select %p24, %s26, %s17
    %p28 = scmp.ge.s32.totalorder %s27, 2
    %s29 = scalar_select %p28, 0, %s27
    %s30 = ssub.s32 %s17, %s29
    %s31 = ssub.s32 %s18, %s25
    %s32 = sor.u32 %s30, %s31
    %p33 = scmp.eq.s32.totalorder %s32, 0
    %s35 = sadd.s32 %s34, 1
    %s36 = scalar_select %p33, %s34, %s35
    %p39 = pneg %p33
    %p40 = scmp.eq.s32.totalorder %s10, 1
    %p41 = por %p39, %p40
    %p42 = scmp.ne.s32.totalorder %s34, %s37
    %p43 = scmp.eq.s32.totalorder %s10, 0
    %p44 = por %p42, %p43
    %p45 = scmp.ne.s32.totalorder %s34, %s37
    %p46 = scmp.eq.s32.totalorder %s15, 1
    %p47 = por %p45, %p46
    %p48 = scmp.ne.s32.totalorder %s37, %s38
    %p49 = scmp.eq.s32.totalorder %s15, 0
    %p50 = por %p48, %p49
    %p51 = scmp.ne.s32.totalorder %s37, %s38
    %p52 = scmp.eq.s32.totalorder %s16, 1
    %p53 = por %p51, %p52
    %p55 = scmp.ne.s32.totalorder %s38, %s54
    %p56 = scmp.eq.s32.totalorder %s16, 0
    %p57 = por %p55, %p56
    %s58 = ssub.s32 %s17, %s29
    %s59 = ssub.s32 %s18, %s25
    %s60 = sor.u32 %s58, %s59
    %p61 = scmp.eq.s32.totalorder %s60, 0
    %s63 = sadd.s32 %s62, 1
    %s64 = scalar_select %p61, %s62, %s63
    %p67 = pneg %p61
    %p68 = scmp.eq.s32.totalorder %s10, 1
    %p69 = por %p67, %p68
    %p70 = scmp.ne.s32.totalorder %s62, %s65
    %p71 = scmp.eq.s32.totalorder %s10, 0
    %p72 = por %p70, %p71
    %p73 = scmp.ne.s32.totalorder %s62, %s65
    %p74 = scmp.eq.s32.totalorder %s15, 1
    %p75 = por %p73, %p74
    %p76 = scmp.ne.s32.totalorder %s65, %s66
    %p77 = scmp.eq.s32.totalorder %s15, 0
    %p78 = por %p76, %p77
    %p79 = scmp.ne.s32.totalorder %s65, %s66
    %p80 = scmp.eq.s32.totalorder %s16, 1
    %p81 = por %p79, %p80
    %p83 = scmp.ne.s32.totalorder %s66, %s82
    %p84 = scmp.eq.s32.totalorder %s16, 0
    %p85 = por %p83, %p84
    %s87 = sadd.s32 %s86, 1
    %p90 = scmp.eq.s32.totalorder %s10, 1
    %p91 = scmp.ne.s32.totalorder %s86, %s88
    %p92 = scmp.eq.s32.totalorder %s10, 0
    %p93 = por %p91, %p92
    %p94 = scmp.ne.s32.totalorder %s86, %s88
    %p95 = scmp.eq.s32.totalorder %s15, 1
    %p96 = por %p94, %p95
    %p97 = scmp.ne.s32.totalorder %s88, %s89
    %p98 = scmp.eq.s32.totalorder %s15, 0
    %p99 = por %p97, %p98
    %p100 = scmp.ne.s32.totalorder %s88, %s89
    %p101 = scmp.eq.s32.totalorder %s16, 1
    %p102 = por %p100, %p101
    %p104 = scmp.ne.s32.totalorder %s89, %s103
    %p105 = scmp.eq.s32.totalorder %s16, 0
    %p106 = por %p104, %p105
    %s108 = sadd.s32 %s107, 1
    %p111 = scmp.eq.s32.totalorder %s10, 1
    %p112 = scmp.ne.s32.totalorder %s107, %s109
    %p113 = scmp.eq.s32.totalorder %s10, 0
    %p114 = por %p112, %p113
    %p115 = scmp.ne.s32.totalorder %s107, %s109
    %p116 = scmp.eq.s32.totalorder %s15, 1
    %p117 = por %p115, %p116
    %p118 = scmp.ne.s32.totalorder %s109, %s110
    %p119 = scmp.eq.s32.totalorder %s15, 0
    %p120 = por %p118, %p119
    %p121 = scmp.ne.s32.totalorder %s109, %s110
    %p122 = scmp.eq.s32.totalorder %s16, 1
    %p123 = por %p121, %p122
    %p125 = scmp.ne.s32.totalorder %s110, %s124
    %p126 = scmp.eq.s32.totalorder %s16, 0
    %p127 = por %p125, %p126
    %s128 = ssub.s32 %s17, %s29
    %s129 = ssub.s32 %s18, %s25
    %s130 = sor.u32 %s128, %s129
    %p131 = scmp.eq.s32.totalorder %s130, 0
    %s133 = sadd.s32 %s132, 1
    %s134 = scalar_select %p131, %s132, %s133
    %p137 = pneg %p131
    %p138 = scmp.eq.s32.totalorder %s10, 1
    %p139 = por %p137, %p138
    %p140 = scmp.ne.s32.totalorder %s132, %s135
    %p141 = scmp.eq.s32.totalorder %s10, 0
    %p142 = por %p140, %p141
    %p143 = scmp.ne.s32.totalorder %s132, %s135
    %p144 = scmp.eq.s32.totalorder %s15, 1
    %p145 = por %p143, %p144
    %p146 = scmp.ne.s32.totalorder %s135, %s136
    %p147 = scmp.eq.s32.totalorder %s15, 0
    %p148 = por %p146, %p147
    %p149 = scmp.ne.s32.totalorder %s135, %s136
    %p150 = scmp.eq.s32.totalorder %s16, 1
    %p151 = por %p149, %p150
    %p153 = scmp.ne.s32.totalorder %s136, %s152
    %p154 = scmp.eq.s32.totalorder %s16, 0
    %p155 = por %p153, %p154
    %p156 = scmp.le.s32.totalorder 1, %s10
    %p157 = scmp.lt.s32.totalorder %s10, 3
    %p158 = pnand %p156, %p157
    %p159 = pneg %p158
    // Predicated region
    $region9: #{self_attention_spa.7} parent=5 // pred_check
      _
    $region10: #{self_attention_spa.7} parent=5 // pred_check_branch
      %161 = sbr.rel (%p158) target = $region12
    $region11: #{self_attention_spa.7} parent=5 // pred_region
      %s162 = ssub.s32 %s10, 1
      // Predicated region
      $region13: #{self_attention_spa.7} parent=11 // pred_check
        %p163 = pneg %p99
      $region14: #{self_attention_spa.7} parent=11 // pred_check_branch
        %165 = sbr.rel (%p163) target = $region16
      $region15: #{self_attention_spa.7} parent=11 // pred_region
        _
      $region16: #{self_attention_spa.7} parent=11 // pred_fallthru
        _
      // Predicated region
      $region17: #{self_attention_spa.7} parent=11 // pred_check
        %p166 = pneg %p120
      $region18: #{self_attention_spa.7} parent=11 // pred_check_branch
        %168 = sbr.rel (%p166) target = $region20
      $region19: #{self_attention_spa.7} parent=11 // pred_region
        _
      $region20: #{self_attention_spa.7} parent=11 // pred_fallthru
        _
    $region12: #{self_attention_spa.7} parent=5 // pred_fallthru
      _
    %p169 = scmp.lt.s32.totalorder %s10, 2
    // Predicated region
    $region21: #{self_attention_spa.7} parent=5 // pred_check
      %p170 = pneg %p169
    $region22: #{self_attention_spa.7} parent=5 // pred_check_branch
      %172 = sbr.rel (%p170) target = $region24
    $region23: #{self_attention_spa.7} parent=5 // pred_region
      // Predicated region
      $region25: #{self_attention_spa.7} parent=23 // pred_check
        %p173 = pneg %p44
      $region26: #{self_attention_spa.7} parent=23 // pred_check_branch
        %175 = sbr.rel (%p173) target = $region28
      $region27: #{self_attention_spa.7} parent=23 // pred_region
        %s176 = smul.u32 2, %s18
        %p177 = scmp.lt.s32.totalorder %s17, 1
        %s178 = scalar_select %p177, %s17, 1
        %p179 = scmp.lt.s32.totalorder %s176, 1
        %s180 = scalar_select %p179, %s176, 1
        %s181 = smul.addr %s178, 2
        %s182 = sadd.s32 %s180, %s181
        %s183 = smul.addr %s182, 4
        %s184 = scalar_lea.vmem %s0, %s183
        %s185 = smul.u32 2, %s18
      $region28: #{self_attention_spa.7} parent=23 // pred_fallthru
        _
      // Predicated region
      $region29: #{self_attention_spa.7} parent=23 // pred_check
        %p186 = pneg %p72
      $region30: #{self_attention_spa.7} parent=23 // pred_check_branch
        %188 = sbr.rel (%p186) target = $region32
      $region31: #{self_attention_spa.7} parent=23 // pred_region
        %s189 = smul.u32 2, %s18
        %p190 = scmp.lt.s32.totalorder %s17, 1
        %s191 = scalar_select %p190, %s17, 1
        %p192 = scmp.lt.s32.totalorder %s189, 1
        %s193 = scalar_select %p192, %s189, 1
        %s194 = smul.addr %s191, 2
        %s195 = sadd.s32 %s193, %s194
        %s196 = smul.addr %s195, 4
        %s197 = scalar_lea.vmem %s1, %s196
        %s198 = smul.u32 2, %s18
      $region32: #{self_attention_spa.7} parent=23 // pred_fallthru
        _
    $region24: #{self_attention_spa.7} parent=5 // pred_fallthru
      _
    %p199 = scmp.le.s32.totalorder 1, %s10
    %p200 = scmp.lt.s32.totalorder %s10, 3
    %p201 = pnand %p199, %p200
    %p202 = pneg %p201
    // Predicated region
    $region33: #{self_attention_spa.7} parent=5 // pred_check
      _
    $region34: #{self_attention_spa.7} parent=5 // pred_check_branch
      %204 = sbr.rel (%p201) target = $region36
    $region35: #{self_attention_spa.7} parent=5 // pred_region
      %s205 = ssub.s32 %s10, 1
      %s206 = smul.u32 2, %s20
      %p207 = scmp.lt.s32.totalorder %s19, 1
      %s208 = scalar_select %p207, %s19, 1
      %p209 = scmp.lt.s32.totalorder %s206, 1
      %s210 = scalar_select %p209, %s206, 1
      %s211 = smul.addr %s208, 2
      %s212 = sadd.s32 %s210, %s211
      %s213 = smul.addr %s212, 4
      %s214 = scalar_lea.vmem %s0, %s213
      %p215 = pneg %p50
      %p216 = pneg %p47
      %s217 = smul.u32 2, %s20
      %p218 = scmp.lt.s32.totalorder %s19, 1
      %s219 = scalar_select %p218, %s19, 1
      %p220 = scmp.lt.s32.totalorder %s217, 1
      %s221 = scalar_select %p220, %s217, 1
      %s222 = smul.addr %s219, 2
      %s223 = sadd.s32 %s221, %s222
      %s224 = smul.addr %s223, 4
      %s225 = scalar_lea.vmem %s1, %s224
      %p226 = pneg %p78
      %p227 = pneg %p75
      %p228 = pneg %p99
      %p229 = pneg %p96
      %p230 = pneg %p120
      %p231 = pneg %p117
      %p232 = pneg %p148
      %p233 = pneg %p145
      %s234 = smul.u32 2, %s20
      %p235 = scmp.lt.s32.totalorder %s19, 1
      %s236 = scalar_select %p235, %s19, 1
      %p237 = scmp.lt.s32.totalorder %s234, 1
      %s238 = scalar_select %p237, %s234, 1
      %s239 = smul.addr %s236, 2
      %s240 = sadd.s32 %s238, %s239
      %s241 = smul.addr %s240, 4
      %s242 = scalar_lea.vmem %s4, %s241
      %s243 = smul.u32 2, %s20
      %p244 = scmp.lt.s32.totalorder %s19, 1
      %s245 = scalar_select %p244, %s19, 1
      %p246 = scmp.lt.s32.totalorder %s243, 1
      %s247 = scalar_select %p246, %s243, 1
      %s248 = smul.addr %s245, 2
      %s249 = sadd.s32 %s247, %s248
      %s250 = smul.addr %s249, 4
      %s251 = scalar_lea.vmem %s0, %s250
      %s252 = smul.u32 2, %s20
      %s253 = smul.u32 2, %s20
      %p254 = scmp.lt.s32.totalorder %s19, 1
      %s255 = scalar_select %p254, %s19, 1
      %p256 = scmp.lt.s32.totalorder %s253, 1
      %s257 = scalar_select %p256, %s253, 1
      %s258 = smul.addr %s255, 2
      %s259 = sadd.s32 %s257, %s258
      %s260 = smul.addr %s259, 4
      %s261 = scalar_lea.vmem %s1, %s260
      %s262 = smul.u32 2, %s20
      %s263 = smul.u32 2, %s20
      %p264 = scmp.lt.s32.totalorder %s19, 1
      %s265 = scalar_select %p264, %s19, 1
      %p266 = scmp.lt.s32.totalorder %s263, 1
      %s267 = scalar_select %p266, %s263, 1
      %s268 = smul.addr %s265, 2
      %s269 = sadd.s32 %s267, %s268
      %s270 = smul.addr %s269, 4
      %s271 = scalar_lea.vmem %s4, %s270
      %s272 = smul.u32 2, %s20
      %v274 = vld [vmem:[%s251] sm:$0xff]
      %v275 = vld [vmem:[%s261] sm:$0xff]
      %v276 = vadd.f32 %v274, %v275
      %v277 = vld [vmem:[%s2] sm:$0x3]
      %v279 = vcombine.high %v276, %v276
      %v281 = vpack.c.bf16 %v276, %v276
      %v282 = vpack.c.bf16 %v279, %v279
      %v283 = vld [vmem:[%s3] sm:$0xf]
      %285 = vset.pattern.permute.xlu0 0
      %286 = vperm.xlu0 %285, %v283
      %v287 = vpop.permute.xlu0 %286
      %vm289 = vcmask 31744
      %v291 = vsel %vm289, %v277, 0
      %vm293 = vcmask 1041408
      %v295 = vsel %vm293, %v281, 0
      %v298 = vsel %vm293, %v282, 0
      %300 = vmatprep.subr.bf16.mxu0 %v298
      %301 = vmatpush1.bf16.msra.mxu0 %v295
      %302 = vmatprep.subr.bf16.mxu0 0
      %303 = vmatpush1.bf16.msra.mxu0 0
      %304 = vmatprep.subr.bf16.mxu0 0
      %305 = vmatpush1.bf16.msra.mxu0 0
      %306 = vmatprep.subr.bf16.mxu0 0
      %307 = vmatpush1.bf16.msra.mxu0 0
      %308 = vmatprep.subr.bf16.mxu0 0
      %309 = vmatpush1.bf16.msra.mxu0 0
      %310 = vmatprep.subr.bf16.mxu0 0
      %311 = vmatpush1.bf16.msra.mxu0 0
      %312 = vmatprep.subr.bf16.mxu0 0
      %313 = vmatpush1.bf16.msra.mxu0 0
      %314 = vmatprep.subr.bf16.mxu0 0
      %315 = vmatpush1.bf16.msra.mxu0 0
      %316 = vmatprep.subr.bf16.mxu0 0
      %317 = vmatpush1.bf16.msra.mxu0 0
      %318 = vmatprep.subr.bf16.mxu0 0
      %319 = vmatpush1.bf16.msra.mxu0 0
      %320 = vmatprep.subr.bf16.mxu0 0
      %321 = vmatpush1.bf16.msra.mxu0 0
      %322 = vmatprep.subr.bf16.mxu0 0
      %323 = vmatpush1.bf16.msra.mxu0 0
      %324 = vmatprep.subr.bf16.mxu0 0
      %325 = vmatpush1.bf16.msra.mxu0 0
      %326 = vmatprep.subr.bf16.mxu0 0
      %327 = vmatpush1.bf16.msra.mxu0 0
      %328 = vmatprep.subr.bf16.mxu0 0
      %329 = vmatpush1.bf16.msra.mxu0 0
      %330 = vmatprep.subr.bf16.mxu0 0
      %331 = vmatpush1.bf16.msra.mxu0 0
      %332 = vmatprep.mubr.bf16.mxu0 0
      %333 = vmatmul.mubr.bf16.gmra.mrb[0].mxu0 %v291
      %v334 = vpop.f32.mrb[0].mxu0
      %v335 = vadd.f32 %v287, %v334
      %v336 = vpop.f32.mrb[0].mxu0
      %v337 = vadd.f32 %v287, %v336
      %v338 = vpop.f32.mrb[0].mxu0
      %v339 = vpop.f32.mrb[0].mxu0
      %340 = vdwg.mxu0
      %vm341 = vcmp.ge.f32.partialorder %v335, 0.0
      %vm342 = vcmp.ge.f32.partialorder %v337, 0.0
      %v343 = vmul.f32 %v335, 0.01
      %v344 = vmul.f32 %v337, 0.01
      %v345 = vsel %vm341, %v335, %v343
      %v346 = vsel %vm342, %v337, %v344
      %v349 = vcombine.low %v345, %v346
      %351 = vst [vmem:[%s271] sm:$0xff] %v349
      %s352 = smul.u32 2, %s20
      %p353 = scmp.lt.s32.totalorder %s19, 1
      %s354 = scalar_select %p353, %s19, 1
      %p355 = scmp.lt.s32.totalorder %s352, 1
      %s356 = scalar_select %p355, %s352, 1
      %s357 = smul.addr %s354, 2
      %s358 = sadd.s32 %s356, %s357
      %s359 = smul.addr %s358, 4
      %s360 = scalar_lea.vmem %s4, %s359
      // Predicated region
      $region37: #{self_attention_spa.7} parent=35 // pred_check
        %p361 = pneg %p145
      $region38: #{self_attention_spa.7} parent=35 // pred_check_branch
        %363 = sbr.rel (%p361) target = $region40
      $region39: #{self_attention_spa.7} parent=35 // pred_region
        %s364 = smul.u32 2, %s20
      $region40: #{self_attention_spa.7} parent=35 // pred_fallthru
        _
    $region36: #{self_attention_spa.7} parent=5 // pred_fallthru
      _
    %p365 = scmp.le.s32.totalorder 2, %s10
    // Predicated region
    $region41: #{self_attention_spa.7} parent=5 // pred_check
      %p366 = pneg %p365
    $region42: #{self_attention_spa.7} parent=5 // pred_check_branch
      %368 = sbr.rel (%p366) target = $region44
    $region43: #{self_attention_spa.7} parent=5 // pred_region
      %s369 = ssub.s32 %s10, 2
      // Predicated region
      $region45: #{self_attention_spa.7} parent=43 // pred_check
        %p370 = pneg %p151
      $region46: #{self_attention_spa.7} parent=43 // pred_check_branch
        %372 = sbr.rel (%p370) target = $region48
      $region47: #{self_attention_spa.7} parent=43 // pred_region
        %s373 = smul.u32 2, %s22
        %p374 = scmp.lt.s32.totalorder %s21, 1
        %s375 = scalar_select %p374, %s21, 1
        %p376 = scmp.lt.s32.totalorder %s373, 1
        %s377 = scalar_select %p376, %s373, 1
        %s378 = smul.addr %s375, 2
        %s379 = sadd.s32 %s377, %s378
        %s380 = smul.addr %s379, 4
        %s381 = scalar_lea.vmem %s4, %s380
      $region48: #{self_attention_spa.7} parent=43 // pred_fallthru
        _
    $region44: #{self_attention_spa.7} parent=5 // pred_fallthru
      _
  $region6: #{self_attention_spa.7} parent=0 // loop_footer
    %s14 = sadd.s32 1, %s10
  $region7: #{self_attention_spa.7} parent=0 // loop_footer_branch
    %9 = sbr.rel target = $region3
  $region8: #{self_attention_spa.7} parent=0 // loop_exit
    _

</llo_original>
